<compile_context>
chip_gen: v7x
topology: tpu7x:2x2x1
jax: 0.10.0
libtpu: 0.0.40
codegen_flags: <defaults>
</compile_context>

<pallas_src>
import math
import functools

import jax
import jax.numpy as jnp
from jax import lax
from jax.experimental import pallas as pl
from jax.experimental.pallas import tpu as pltpu

NEG_INF = -1e9             # additive-mask value (stand-in for PyTorch's -inf)
MXU_DTYPE = jnp.bfloat16   # MXU operand dtype (f32 accumulation everywhere)


def _round_up(x, m):
    return (x + m - 1) // m * m


@functools.lru_cache(maxsize=None)
def _vmem_cap():
    """Physical VMEM capacity in bytes (64 MiB fallback, v7x-safe)."""
    try:
        return int(pltpu.get_tpu_info().vmem_capacity_bytes)
    except Exception:
        return 64 << 20


def _compiler_params(dims):
    cap = _vmem_cap()
    # ~7/8 of physical VMEM, capped at 112 MiB (128 MiB on v5e/v6e, 64 on v7x).
    return pltpu.CompilerParams(
        dimension_semantics=dims,
        vmem_limit_bytes=min(cap - cap // 8, 112 << 20))


def _row_tile(M):
    """Row tile for the row-parallel kernels (FFN / linear / LayerNorm)."""
    tile = 512 if _vmem_cap() > (64 << 20) else 256   # v5e/v6e vs. v7x
    if M <= 8 or M % 8 != 0:
        return M
    if M <= tile:
        half = M // 2
        if M >= 256 and half % 8 == 0:
            return half      # >= 2 grid steps -> pipelining + both TensorCores
        return M
    return tile


def _q_tile(Sq):
    """Query-row tile for the fused attention kernel."""
    if Sq <= 256 or Sq % 8 != 0:
        return Sq
    return 256


# ----------------------------------------------------------------------------
# Pallas kernels
# ----------------------------------------------------------------------------
def _make_mha_ln_kernel(H, dh, has_mask):
    """Fused MHA + residual + LayerNorm for one (batch, query-tile) block."""
    D = H * dh

    def kernel(*refs):
        if has_mask:
            (x_ref, kv_ref, mask_ref, pad_ref, wq_ref, bq_ref, wkv_ref,
             bkv_ref, wo_ref, bo_ref, g_ref, beta_ref, o_ref, attn_ref) = refs
        else:
            (x_ref, kv_ref, pad_ref, wq_ref, bq_ref, wkv_ref,
             bkv_ref, wo_ref, bo_ref, g_ref, beta_ref, o_ref, attn_ref) = refs
            mask_ref = None

        x = x_ref[0]          # (TQ, D) f32 — query rows (and residual)
        src = kv_ref[0]       # (Sk, D) f32 — key/value source

        # Projections (MXU in bf16, f32 accumulation, bias add in f32).
        # 1/sqrt(dh) is folded into w_q / b_q at init.
        q = jnp.dot(x.astype(MXU_DTYPE), wq_ref[...],
                    preferred_element_type=jnp.float32) + bq_ref[...]
        kv = jnp.dot(src.astype(MXU_DTYPE), wkv_ref[...],
                     preferred_element_type=jnp.float32) + bkv_ref[...]
        k = kv[:, :D]
        v = kv[:, D:]

        bias = pad_ref[0]                       # (1, Sk)
        if mask_ref is not None:
            bias = mask_ref[...] + bias         # (TQ, Sk)

        for h in range(H):                      # H is small & static -> unrolled
            sl = slice(h * dh, (h + 1) * dh)
            q_h = q[:, sl].astype(MXU_DTYPE)
            k_h = k[:, sl].astype(MXU_DTYPE)
            v_h = v[:, sl].astype(MXU_DTYPE)
            # q_h (TQ, dh) · k_h (Sk, dh): contract on dh — no kᵀ relayout.
            s = lax.dot_general(q_h, k_h, (((1,), (1,)), ((), ())),
                                preferred_element_type=jnp.float32)
            s = s + bias
            s = s - jnp.max(s, axis=-1, keepdims=True)
            p = jnp.exp(s)
            p = p * pl.reciprocal(jnp.sum(p, axis=-1, keepdims=True),
                                  approx=True)
            # Write this head's output directly into the VMEM scratch slab.
            attn_ref[:, sl] = jnp.dot(p.astype(MXU_DTYPE), v_h,
                                      preferred_element_type=jnp.float32)

        out = jnp.dot(attn_ref[...].astype(MXU_DTYPE), wo_ref[...],
                      preferred_element_type=jnp.float32) + bo_ref[...]

        # residual + LayerNorm (f32 statistics)
        y = x + out
        mu = jnp.mean(y, axis=-1, keepdims=True)
        var = jnp.mean((y - mu) ** 2, axis=-1, keepdims=True)
        o_ref[0] = (y - mu) * lax.rsqrt(var + 1e-5) * g_ref[...] + beta_ref[...]

    return kernel


def _ffn_ln_kernel(x_ref, w1_ref, b1_ref, w2_ref, b2_ref, g_ref, beta_ref,
                   o_ref):
    """Fused linear1 -> ReLU -> linear2 -> residual -> LayerNorm."""
    x = x_ref[...]
    h = jnp.dot(x.astype(MXU_DTYPE), w1_ref[...],
                preferred_element_type=jnp.float32) + b1_ref[...]
    h = jnp.maximum(h, 0.0)               # ReLU (nn.Transformer default)
    f = jnp.dot(h.astype(MXU_DTYPE), w2_ref[...],
                preferred_element_type=jnp.float32) + b2_ref[...]
    y = x + f
    mu = jnp.mean(y, axis=-1, keepdims=True)
    var = jnp.mean((y - mu) ** 2, axis=-1, keepdims=True)
    o_ref[...] = (y - mu) * lax.rsqrt(var + 1e-5) * g_ref[...] + beta_ref[...]


def _linear_kernel(x_ref, w_ref, b_ref, o_ref):
    o_ref[...] = jnp.dot(x_ref[...].astype(MXU_DTYPE), w_ref[...],
                         preferred_element_type=jnp.float32) + b_ref[...]


def _ln_kernel(x_ref, g_ref, b_ref, o_ref):
    x = x_ref[...]
    mu = jnp.mean(x, axis=-1, keepdims=True)
    var = jnp.mean((x - mu) ** 2, axis=-1, keepdims=True)
    o_ref[...] = (x - mu) * lax.rsqrt(var + 1e-5) * g_ref[...] + b_ref[...]


# ----------------------------------------------------------------------------
# Kernel wrappers
# ----------------------------------------------------------------------------
def mha_ln(x, kv, attn_mask, pad_bias, mp, gamma, beta, H):
    """LayerNorm(x + MHA(x, kv, kv)); x:(B,Sq,D), kv:(B,Sk,D), mask optional."""
    B, Sq, D = x.shape
    Sk = kv.shape[1]
    dh = D // H
    TQ = _q_tile(Sq)
    has_mask = attn_mask is not None
    kernel = _make_mha_ln_kernel(H=H, dh=dh, has_mask=has_mask)

    in_specs = [
        pl.BlockSpec((1, TQ, D), lambda b, qi: (b, qi, 0)),      # x (query tile)
        pl.BlockSpec((1, Sk, D), lambda b, qi: (b, 0, 0)),       # kv (constant over qi)
    ]
    args = [x, kv]
    if has_mask:
        in_specs.append(pl.BlockSpec((TQ, Sk), lambda b, qi: (qi, 0)))
        args.append(attn_mask)
    in_specs += [
        pl.BlockSpec((1, 1, Sk), lambda b, qi: (b, 0, 0)),       # pad bias
        pl.BlockSpec((D, D), lambda b, qi: (0, 0)),              # w_q
        pl.BlockSpec((1, D), lambda b, qi: (0, 0)),              # b_q
        pl.BlockSpec((D, 2 * D), lambda b, qi: (0, 0)),          # w_kv
        pl.BlockSpec((1, 2 * D), lambda b, qi: (0, 0)),          # b_kv
        pl.BlockSpec((D, D), lambda b, qi: (0, 0)),              # w_o
        pl.BlockSpec((1, D), lambda b, qi: (0, 0)),              # b_o
        pl.BlockSpec((1, D), lambda b, qi: (0, 0)),              # ln gamma
        pl.BlockSpec((1, D), lambda b, qi: (0, 0)),              # ln beta
    ]
    args += [pad_bias, mp["w_q"], mp["b_q"], mp["w_kv"], mp["b_kv"],
             mp["w_o"], mp["b_o"], gamma, beta]

    return pl.pallas_call(
        kernel,
        out_shape=jax.ShapeDtypeStruct((B, Sq, D), jnp.float32),
        grid=(B, pl.cdiv(Sq, TQ)),
        in_specs=in_specs,
        out_specs=pl.BlockSpec((1, TQ, D), lambda b, qi: (b, qi, 0)),
        scratch_shapes=[pltpu.VMEM((TQ, D), jnp.float32)],       # per-tile attn slab
        compiler_params=_compiler_params(("parallel", "parallel")),
    )(*args)


def ffn_ln(x, w1, b1, w2, b2, gamma, beta):
    """LayerNorm(x + Linear2(ReLU(Linear1(x)))); x:(B,S,D)."""
    B, S, D = x.shape
    F = w1.shape[1]
    M = B * S
    x2d = x.reshape(M, D)
    TM = _row_tile(M)
    out = pl.pallas_call(
        _ffn_ln_kernel,
        out_shape=jax.ShapeDtypeStruct((M, D), jnp.float32),
        grid=(pl.cdiv(M, TM),),
        in_specs=[
            pl.BlockSpec((TM, D), lambda i: (i, 0)),
            pl.BlockSpec((D, F), lambda i: (0, 0)),
            pl.BlockSpec((1, F), lambda i: (0, 0)),
            pl.BlockSpec((F, D), lambda i: (0, 0)),
            pl.BlockSpec((1, D), lambda i: (0, 0)),
            pl.BlockSpec((1, D), lambda i: (0, 0)),
            pl.BlockSpec((1, D), lambda i: (0, 0)),
        ],
        out_specs=pl.BlockSpec((TM, D), lambda i: (i, 0)),
        compiler_params=_compiler_params(("parallel",)),
    )(x2d, w1, b1, w2, b2, gamma, beta)
    return out.reshape(B, S, D)


def linear(x2d, w, b, col_tile=2048):
    """y = x2d @ w + b; x2d:(M,K), w:(K,N) pre-transposed, b:(1,N).

    Tiled over rows and output columns (lane-dense stores, weight-column DMAs
    pipelined) so realistic vocab sizes fit VMEM on every generation."""
    M, K = x2d.shape
    N = w.shape[1]
    TM = _row_tile(M)
    TN = N if (N <= col_tile or N % 128 != 0) else col_tile
    return pl.pallas_call(
        _linear_kernel,
        out_shape=jax.ShapeDtypeStruct((M, N), jnp.float32),
        grid=(pl.cdiv(M, TM), pl.cdiv(N, TN)),
        in_specs=[
            pl.BlockSpec((TM, K), lambda i, j: (i, 0)),
            pl.BlockSpec((K, TN), lambda i, j: (0, j)),
            pl.BlockSpec((1, TN), lambda i, j: (0, j)),
        ],
        out_specs=pl.BlockSpec((TM, TN), lambda i, j: (i, j)),
        compiler_params=_compiler_params(("parallel", "parallel")),
    )(x2d, w, b)


def layer_norm(x, gamma, beta):
    """LayerNorm over the last axis; x:(B,S,D)."""
    B, S, D = x.shape
    M = B * S
    TM = _row_tile(M)
    out = pl.pallas_call(
        _ln_kernel,
        out_shape=jax.ShapeDtypeStruct((M, D), jnp.float32),
        grid=(pl.cdiv(M, TM),),
        in_specs=[
            pl.BlockSpec((TM, D), lambda i: (i, 0)),
            pl.BlockSpec((1, D), lambda i: (0, 0)),
            pl.BlockSpec((1, D), lambda i: (0, 0)),
        ],
        out_specs=pl.BlockSpec((TM, D), lambda i: (i, 0)),
        compiler_params=_compiler_params(("parallel",)),
    )(x.reshape(M, D), gamma, beta)
    return out.reshape(B, S, D)


# ----------------------------------------------------------------------------
# Model glue (plain JAX)
# ----------------------------------------------------------------------------
def encoder_layer(x, attn_mask, pad_bias, p, H):
    x = mha_ln(x, x, attn_mask, pad_bias, p["self_attn"],
               p["ln1_g"], p["ln1_b"], H)
    x = ffn_ln(x, p["w1"], p["b1"], p["w2"], p["b2"], p["ln2_g"], p["ln2_b"])
    return x


def decoder_layer(x, memory, self_mask, self_pad_bias, cross_pad_bias, p, H):
    x = mha_ln(x, x, self_mask, self_pad_bias, p["self_attn"],
               p["ln1_g"], p["ln1_b"], H)
    # memory_mask is None in the reference forward -> no (S_tgt,S_src) mask op.
    x = mha_ln(x, memory, None, cross_pad_bias, p["cross_attn"],
               p["ln2_g"], p["ln2_b"], H)
    x = ffn_ln(x, p["w1"], p["b1"], p["w2"], p["b2"], p["ln3_g"], p["ln3_b"])
    return x


def positional_encoding_table(L, D):
    den = jnp.exp(-jnp.arange(0, D, 2, dtype=jnp.float32) * math.log(10000.0) / D)
    pos = jnp.arange(0, L, dtype=jnp.float32).reshape(L, 1)
    pe = jnp.zeros((L, D), jnp.float32)
    pe = pe.at[:, 0::2].set(jnp.sin(pos * den))
    pe = pe.at[:, 1::2].set(jnp.cos(pos * den))
    return pe


def add_positional_encoding(emb, pe):
    # Faithful to reference: index by emb.size(0) (== batch with batch_first),
    # broadcast across the sequence axis.
    B = emb.shape[0]
    return emb + pe[:B][:, None, :]
    # TODO(synk): dropout after positional encoding omitted (inference mode).


def transformer_forward(params, src, tgt, src_mask, tgt_mask,
                        src_padding_mask, tgt_padding_mask, cfg):
    D, H, N = cfg["D"], cfg["H"], cfg["N"]
    B, S_src = src.shape
    _, S_tgt = tgt.shape
    V = cfg["tgt_vocab"]

    src_emb = jnp.take(params["src_embed"], src, axis=0) * math.sqrt(D)
    tgt_emb = jnp.take(params["tgt_embed"], tgt, axis=0) * math.sqrt(D)
    src_emb = add_positional_encoding(src_emb, params["pe"])
    tgt_emb = add_positional_encoding(tgt_emb, params["pe"])

    # Tiny additive padding biases (B,1,Sk) — added inside the attention
    # kernel instead of materializing a (B,H,Sq,Sk) tensor.
    src_pad_bias = jnp.where(src_padding_mask, NEG_INF, 0.0)[:, None, :]
    tgt_pad_bias = jnp.where(tgt_padding_mask, NEG_INF, 0.0)[:, None, :]

    mem = src_emb
    for l in range(N):
        mem = encoder_layer(mem, src_mask, src_pad_bias,
                            params["enc_layers"][l], H)
    mem = layer_norm(mem, params["enc_norm_g"], params["enc_norm_b"])

    out = tgt_emb
    for l in range(N):
        out = decoder_layer(out, mem, tgt_mask, tgt_pad_bias,
                            src_pad_bias, params["dec_layers"][l], H)
    out = layer_norm(out, params["dec_norm_g"], params["dec_norm_b"])

    # Generator; weight pre-transposed and lane-padded at init, slice back.
    logits = linear(out.reshape(B * S_tgt, D),
                    params["gen_w"], params["gen_b"])[:, :V]
    return logits.reshape(B, S_tgt, V)


# ----------------------------------------------------------------------------
# Deterministic parameter init (xavier_uniform for dim>1, zeros/ones otherwise).
# Weights are pre-transposed to (K, N), pre-split (w_q / w_kv), and cast to
# bf16 for the MXU; biases / LN params / embeddings stay f32.  The attention
# scale 1/sqrt(dh) is folded into w_q / b_q.
# ----------------------------------------------------------------------------
def xavier(key, shape):
    fan_out, fan_in = shape[0], shape[1]
    limit = math.sqrt(6.0 / (fan_in + fan_out))
    return jax.random.uniform(key, shape, jnp.float32, -limit, limit)


def _w(x):  # MXU weight storage
    return x.astype(MXU_DTYPE)


def init_mha(key, D, H):
    k1, k2 = jax.random.split(key)
    scale = 1.0 / math.sqrt(D // H)
    w_in = xavier(k1, (3 * D, D))          # PyTorch layout (3D, D)
    w_out = xavier(k2, (D, D))
    return dict(
        w_q=_w(w_in[:D].T * scale),         # (D, D), scale folded in
        w_kv=_w(w_in[D:].T),                # (D, 2D)
        b_q=jnp.zeros((1, D), jnp.float32) * scale,
        b_kv=jnp.zeros((1, 2 * D), jnp.float32),
        w_o=_w(w_out.T),                    # (D, D)
        b_o=jnp.zeros((1, D), jnp.float32),
    )


def init_enc_layer(key, D, H, d_ff):
    ks = jax.random.split(key, 3)
    return dict(
        self_attn=init_mha(ks[0], D, H),
        w1=_w(xavier(ks[1], (d_ff, D)).T), b1=jnp.zeros((1, d_ff), jnp.float32),
        w2=_w(xavier(ks[2], (D, d_ff)).T), b2=jnp.zeros((1, D), jnp.float32),
        ln1_g=jnp.ones((1, D), jnp.float32), ln1_b=jnp.zeros((1, D), jnp.float32),
        ln2_g=jnp.ones((1, D), jnp.float32), ln2_b=jnp.zeros((1, D), jnp.float32),
    )


def init_dec_layer(key, D, H, d_ff):
    ks = jax.random.split(key, 4)
    return dict(
        self_attn=init_mha(ks[0], D, H),
        cross_attn=init_mha(ks[1], D, H),
        w1=_w(xavier(ks[2], (d_ff, D)).T), b1=jnp.zeros((1, d_ff), jnp.float32),
        w2=_w(xavier(ks[3], (D, d_ff)).T), b2=jnp.zeros((1, D), jnp.float32),
        ln1_g=jnp.ones((1, D), jnp.float32), ln1_b=jnp.zeros((1, D), jnp.float32),
        ln2_g=jnp.ones((1, D), jnp.float32), ln2_b=jnp.zeros((1, D), jnp.float32),
        ln3_g=jnp.ones((1, D), jnp.float32), ln3_b=jnp.zeros((1, D), jnp.float32),
    )


def init_params(key, cfg):
    D, H, d_ff, N = cfg["D"], cfg["H"], cfg["d_ff"], cfg["N"]
    src_vocab, tgt_vocab = cfg["src_vocab"], cfg["tgt_vocab"]
    keys = jax.random.split(key, 4 + 2 * N)

    # Generator weight: xavier on PyTorch shape, transposed and lane-padded
    # to a multiple of 128 for lane-dense stores.
    V_pad = _round_up(tgt_vocab, 128)
    gen_w = xavier(keys[2], (tgt_vocab, D)).T                  # (D, V)
    gen_w = jnp.pad(gen_w, ((0, 0), (0, V_pad - tgt_vocab)))   # (D, V_pad)

    params = dict(
        src_embed=xavier(keys[0], (src_vocab, D)),
        tgt_embed=xavier(keys[1], (tgt_vocab, D)),
        pe=positional_encoding_table(5000, D),
        enc_layers=[init_enc_layer(keys[4 + i], D, H, d_ff) for i in range(N)],
        dec_layers=[init_dec_layer(keys[4 + N + i], D, H, d_ff) for i in range(N)],
        enc_norm_g=jnp.ones((1, D), jnp.float32),
        enc_norm_b=jnp.zeros((1, D), jnp.float32),
        dec_norm_g=jnp.ones((1, D), jnp.float32),
        dec_norm_b=jnp.zeros((1, D), jnp.float32),
        gen_w=_w(gen_w),
        gen_b=jnp.zeros((1, V_pad), jnp.float32),
    )
    return params


# ----------------------------------------------------------------------------
if __name__ == "__main__":
    # Functional-test shapes only (far below the (8,128) vreg tile); benchmark
    # at D>=128 and S a multiple of 8 to see the fusion/tiling benefits.
    cfg = dict(D=32, H=4, N=2, d_ff=64, src_vocab=37, tgt_vocab=41)
    B, S_SRC, S_TGT = 2, 8, 8

    root = jax.random.PRNGKey(0)
    k_params, k_src, k_tgt = jax.random.split(root, 3)
    params = init_params(k_params, cfg)

    src = jax.random.randint(k_src, (B, S_SRC), 0, cfg["src_vocab"], jnp.int32)
    tgt = jax.random.randint(k_tgt, (B, S_TGT), 0, cfg["tgt_vocab"], jnp.int32)

    # attention masks: src_mask is all-zero, tgt_mask is causal (additive)
    src_mask = jnp.zeros((S_SRC, S_SRC), jnp.float32)
    causal = jnp.triu(jnp.ones((S_TGT, S_TGT), jnp.bool_), k=1)
    tgt_mask = jnp.where(causal, NEG_INF, 0.0).astype(jnp.float32)

    # key-padding masks: True = ignore that position
    src_padding_mask = jnp.array(
        [[False] * 6 + [True] * 2, [False] * 8], jnp.bool_)
    tgt_padding_mask = jnp.array(
        [[False] * 7 + [True] * 1, [False] * 8], jnp.bool_)

    fwd = jax.jit(functools.partial(transformer_forward, cfg=cfg))
    logits = fwd(params, src, tgt, src_mask, tgt_mask,
                 src_padding_mask, tgt_padding_mask)
    logits = jax.block_until_ready(logits)

    assert logits.shape == (B, S_TGT, cfg["tgt_vocab"]), logits.shape
    assert bool(jnp.all(jnp.isfinite(logits)))
    print("KERNEL_OK")
</pallas_src>

<mosaic_0001>
module attributes {stable_mosaic.version = 11 : i64} {
  func.func @_ln_kernel(%arg0: i32, %arg1: memref<16x32xf32, #tpu.memory_space<vmem>>, %arg2: memref<1x32xf32, #tpu.memory_space<vmem>>, %arg3: memref<1x32xf32, #tpu.memory_space<vmem>>, %arg4: memref<16x32xf32, #tpu.memory_space<vmem>>) attributes {dimension_semantics = [#tpu.dimension_semantics<parallel>], iteration_bounds = array<i64: 1>, scalar_prefetch = 0 : i64, scratch_operands = 0 : i64, tpu.core_type = #tpu.core_type<tc>, window_params = [{transform_indices = @transform_0, window_bounds = array<i64: 16, 32>}, {pipeline_mode = #tpu.pipeline_mode<synchronous>, transform_indices = @transform_1, window_bounds = array<i64: 1, 32>}, {pipeline_mode = #tpu.pipeline_mode<synchronous>, transform_indices = @transform_2, window_bounds = array<i64: 1, 32>}, {transform_indices = @transform_3, window_bounds = array<i64: 16, 32>}]} {
    %c0 = arith.constant 0 : index
    %c0_0 = arith.constant 0 : index
    %0 = vector.load %arg1[%c0, %c0_0] : memref<16x32xf32, #tpu.memory_space<vmem>>, vector<16x32xf32>
    %cst = arith.constant dense<0.000000e+00> : vector<16xf32>
    %1 = vector.multi_reduction <add>, %0, %cst [1] : vector<16x32xf32> to vector<16xf32>
    %2 = vector.shape_cast %1 : vector<16xf32> to vector<16x1xf32>
    %cst_1 = arith.constant 3.200000e+01 : f32
    %3 = vector.broadcast %cst_1 : f32 to vector<16x1xf32>
    %4 = arith.divf %2, %3 : vector<16x1xf32>
    %5 = vector.broadcast %4 : vector<16x1xf32> to vector<16x32xf32>
    %6 = arith.subf %0, %5 : vector<16x32xf32>
    %7 = arith.mulf %6, %6 : vector<16x32xf32>
    %cst_2 = arith.constant dense<0.000000e+00> : vector<16xf32>
    %8 = vector.multi_reduction <add>, %7, %cst_2 [1] : vector<16x32xf32> to vector<16xf32>
    %9 = vector.shape_cast %8 : vector<16xf32> to vector<16x1xf32>
    %cst_3 = arith.constant 3.200000e+01 : f32
    %10 = vector.broadcast %cst_3 : f32 to vector<16x1xf32>
    %11 = arith.divf %9, %10 : vector<16x1xf32>
    %12 = vector.broadcast %4 : vector<16x1xf32> to vector<16x32xf32>
    %13 = arith.subf %0, %12 : vector<16x32xf32>
    %cst_4 = arith.constant 9.99999974E-6 : f32
    %14 = vector.broadcast %cst_4 : f32 to vector<16x1xf32>
    %15 = arith.addf %11, %14 : vector<16x1xf32>
    %16 = math.rsqrt %15 : vector<16x1xf32>
    %17 = vector.broadcast %16 : vector<16x1xf32> to vector<16x32xf32>
    %18 = arith.mulf %13, %17 : vector<16x32xf32>
    %c0_5 = arith.constant 0 : index
    %c0_6 = arith.constant 0 : index
    %19 = vector.load %arg2[%c0_5, %c0_6] : memref<1x32xf32, #tpu.memory_space<vmem>>, vector<1x32xf32>
    %20 = vector.broadcast %19 : vector<1x32xf32> to vector<16x32xf32>
    %21 = arith.mulf %18, %20 : vector<16x32xf32>
    %c0_7 = arith.constant 0 : index
    %c0_8 = arith.constant 0 : index
    %22 = vector.load %arg3[%c0_7, %c0_8] : memref<1x32xf32, #tpu.memory_space<vmem>>, vector<1x32xf32>
    %23 = vector.broadcast %22 : vector<1x32xf32> to vector<16x32xf32>
    %24 = arith.addf %21, %23 : vector<16x32xf32>
    %c0_9 = arith.constant 0 : index
    %c0_10 = arith.constant 0 : index
    %25 = vector.load %arg4[%c0_9, %c0_10] : memref<16x32xf32, #tpu.memory_space<vmem>>, vector<16x32xf32>
    tpu.vector_store %arg4[%c0_9, %c0_10], %24 {strides = array<i32>} : memref<16x32xf32, #tpu.memory_space<vmem>>, vector<16x32xf32>,
    return
  }
  func.func @transform_0(%arg0: i32) -> (i32, i32) {
    %c0_i32 = arith.constant 0 : i32
    %c0_i32_0 = arith.constant 0 : i32
    return %arg0, %c0_i32 : i32, i32
  }
  func.func @transform_1(%arg0: i32) -> (i32, i32) {
    %c0_i32 = arith.constant 0 : i32
    %c0_i32_0 = arith.constant 0 : i32
    %c0_i32_1 = arith.constant 0 : i32
    return %c0_i32, %c0_i32_0 : i32, i32
  }
  func.func @transform_2(%arg0: i32) -> (i32, i32) {
    %c0_i32 = arith.constant 0 : i32
    %c0_i32_0 = arith.constant 0 : i32
    %c0_i32_1 = arith.constant 0 : i32
    return %c0_i32, %c0_i32_0 : i32, i32
  }
  func.func @transform_3(%arg0: i32) -> (i32, i32) {
    %c0_i32 = arith.constant 0 : i32
    %c0_i32_0 = arith.constant 0 : i32
    return %arg0, %c0_i32 : i32, i32
  }
}

module attributes {stable_mosaic.version = 11 : i64} {
  func.func @_ffn_ln_kernel(%arg0: i32, %arg1: memref<16x32xf32, #tpu.memory_space<vmem>>, %arg2: memref<32x64xbf16, #tpu.memory_space<vmem>>, %arg3: memref<1x64xf32, #tpu.memory_space<vmem>>, %arg4: memref<64x32xbf16, #tpu.memory_space<vmem>>, %arg5: memref<1x32xf32, #tpu.memory_space<vmem>>, %arg6: memref<1x32xf32, #tpu.memory_space<vmem>>, %arg7: memref<1x32xf32, #tpu.memory_space<vmem>>, %arg8: memref<16x32xf32, #tpu.memory_space<vmem>>) attributes {dimension_semantics = [#tpu.dimension_semantics<parallel>], iteration_bounds = array<i64: 1>, scalar_prefetch = 0 : i64, scratch_operands = 0 : i64, tpu.core_type = #tpu.core_type<tc>, window_params = [{transform_indices = @transform_0, window_bounds = array<i64: 16, 32>}, {pipeline_mode = #tpu.pipeline_mode<synchronous>, transform_indices = @transform_1, window_bounds = array<i64: 32, 64>}, {pipeline_mode = #tpu.pipeline_mode<synchronous>, transform_indices = @transform_2, window_bounds = array<i64: 1, 64>}, {pipeline_mode = #tpu.pipeline_mode<synchronous>, transform_indices = @transform_3, window_bounds = array<i64: 64, 32>}, {pipeline_mode = #tpu.pipeline_mode<synchronous>, transform_indices = @transform_4, window_bounds = array<i64: 1, 32>}, {pipeline_mode = #tpu.pipeline_mode<synchronous>, transform_indices = @transform_5, window_bounds = array<i64: 1, 32>}, {pipeline_mode = #tpu.pipeline_mode<synchronous>, transform_indices = @transform_6, window_bounds = array<i64: 1, 32>}, {transform_indices = @transform_7, window_bounds = array<i64: 16, 32>}]} {
    %c0 = arith.constant 0 : index
    %c0_0 = arith.constant 0 : index
    %0 = vector.load %arg1[%c0, %c0_0] : memref<16x32xf32, #tpu.memory_space<vmem>>, vector<16x32xf32>
    %1 = arith.truncf %0 : vector<16x32xf32> to vector<16x32xbf16>
    %c0_1 = arith.constant 0 : index
    %c0_2 = arith.constant 0 : index
    %2 = vector.load %arg2[%c0_1, %c0_2] : memref<32x64xbf16, #tpu.memory_space<vmem>>, vector<32x64xbf16>
    %cst = arith.constant dense<0.000000e+00> : vector<16x64xf32>
    %3 = tpu.matmul %1, %2, %cst {dimension_numbers = #tpu.dot_dimension_numbers<[1], [0], [0], [1], [0, 0, 1, 1], [], []>} : vector<16x32xbf16>, vector<32x64xbf16>, vector<16x64xf32> -> vector<16x64xf32>
    %c0_3 = arith.constant 0 : index
    %c0_4 = arith.constant 0 : index
    %4 = vector.load %arg3[%c0_3, %c0_4] : memref<1x64xf32, #tpu.memory_space<vmem>>, vector<1x64xf32>
    %5 = vector.broadcast %4 : vector<1x64xf32> to vector<16x64xf32>
    %6 = arith.addf %3, %5 : vector<16x64xf32>
    %cst_5 = arith.constant 0.000000e+00 : f32
    %7 = vector.broadcast %cst_5 : f32 to vector<16x64xf32>
    %8 = arith.maximumf %6, %7 : vector<16x64xf32>
    %9 = arith.truncf %8 : vector<16x64xf32> to vector<16x64xbf16>
    %c0_6 = arith.constant 0 : index
    %c0_7 = arith.constant 0 : index
    %10 = vector.load %arg4[%c0_6, %c0_7] : memref<64x32xbf16, #tpu.memory_space<vmem>>, vector<64x32xbf16>
    %cst_8 = arith.constant dense<0.000000e+00> : vector<16x32xf32>
    %11 = tpu.matmul %9, %10, %cst_8 {dimension_numbers = #tpu.dot_dimension_numbers<[1], [0], [0], [1], [0, 0, 1, 1], [], []>} : vector<16x64xbf16>, vector<64x32xbf16>, vector<16x32xf32> -> vector<16x32xf32>
    %c0_9 = arith.constant 0 : index
    %c0_10 = arith.constant 0 : index
    %12 = vector.load %arg5[%c0_9, %c0_10] : memref<1x32xf32, #tpu.memory_space<vmem>>, vector<1x32xf32>
    %13 = vector.broadcast %12 : vector<1x32xf32> to vector<16x32xf32>
    %14 = arith.addf %11, %13 : vector<16x32xf32>
    %15 = arith.addf %0, %14 : vector<16x32xf32>
    %cst_11 = arith.constant dense<0.000000e+00> : vector<16xf32>
    %16 = vector.multi_reduction <add>, %15, %cst_11 [1] : vector<16x32xf32> to vector<16xf32>
    %17 = vector.shape_cast %16 : vector<16xf32> to vector<16x1xf32>
    %cst_12 = arith.constant 3.200000e+01 : f32
    %18 = vector.broadcast %cst_12 : f32 to vector<16x1xf32>
    %19 = arith.divf %17, %18 : vector<16x1xf32>
    %20 = vector.broadcast %19 : vector<16x1xf32> to vector<16x32xf32>
    %21 = arith.subf %15, %20 : vector<16x32xf32>
    %22 = arith.mulf %21, %21 : vector<16x32xf32>
    %cst_13 = arith.constant dense<0.000000e+00> : vector<16xf32>
    %23 = vector.multi_reduction <add>, %22, %cst_13 [1] : vector<16x32xf32> to vector<16xf32>
    %24 = vector.shape_cast %23 : vector<16xf32> to vector<16x1xf32>
    %cst_14 = arith.constant 3.200000e+01 : f32
    %25 = vector.broadcast %cst_14 : f32 to vector<16x1xf32>
    %26 = arith.divf %24, %25 : vector<16x1xf32>
    %27 = vector.broadcast %19 : vector<16x1xf32> to vector<16x32xf32>
    %28 = arith.subf %15, %27 : vector<16x32xf32>
    %cst_15 = arith.constant 9.99999974E-6 : f32
    %29 = vector.broadcast %cst_15 : f32 to vector<16x1xf32>
    %30 = arith.addf %26, %29 : vector<16x1xf32>
    %31 = math.rsqrt %30 : vector<16x1xf32>
    %32 = vector.broadcast %31 : vector<16x1xf32> to vector<16x32xf32>
    %33 = arith.mulf %28, %32 : vector<16x32xf32>
    %c0_16 = arith.constant 0 : index
    %c0_17 = arith.constant 0 : index
    %34 = vector.load %arg6[%c0_16, %c0_17] : memref<1x32xf32, #tpu.memory_space<vmem>>, vector<1x32xf32>
    %35 = vector.broadcast %34 : vector<1x32xf32> to vector<16x32xf32>
    %36 = arith.mulf %33, %35 : vector<16x32xf32>
    %c0_18 = arith.constant 0 : index
    %c0_19 = arith.constant 0 : index
    %37 = vector.load %arg7[%c0_18, %c0_19] : memref<1x32xf32, #tpu.memory_space<vmem>>, vector<1x32xf32>
    %38 = vector.broadcast %37 : vector<1x32xf32> to vector<16x32xf32>
    %39 = arith.addf %36, %38 : vector<16x32xf32>
    %c0_20 = arith.constant 0 : index
    %c0_21 = arith.constant 0 : index
    %40 = vector.load %arg8[%c0_20, %c0_21] : memref<16x32xf32, #tpu.memory_space<vmem>>, vector<16x32xf32>
    tpu.vector_store %arg8[%c0_20, %c0_21], %39 {strides = array<i32>} : memref<16x32xf32, #tpu.memory_space<vmem>>, vector<16x32xf32>,
    return
  }
  func.func @transform_0(%arg0: i32) -> (i32, i32) {
    %c0_i32 = arith.constant 0 : i32
    %c0_i32_0 = arith.constant 0 : i32
    return %arg0, %c0_i32 : i32, i32
  }
  func.func @transform_1(%arg0: i32) -> (i32, i32) {
    %c0_i32 = arith.constant 0 : i32
    %c0_i32_0 = arith.constant 0 : i32
    %c0_i32_1 = arith.constant 0 : i32
    return %c0_i32, %c0_i32_0 : i32, i32
  }
  func.func @transform_2(%arg0: i32) -> (i32, i32) {
    %c0_i32 = arith.constant 0 : i32
    %c0_i32_0 = arith.constant 0 : i32
    %c0_i32_1 = arith.constant 0 : i32
    return %c0_i32, %c0_i32_0 : i32, i32
  }
  func.func @transform_3(%arg0: i32) -> (i32, i32) {
    %c0_i32 = arith.constant 0 : i32
    %c0_i32_0 = arith.constant 0 : i32
    %c0_i32_1 = arith.constant 0 : i32
    return %c0_i32, %c0_i32_0 : i32, i32
  }
  func.func @transform_4(%arg0: i32) -> (i32, i32) {
    %c0_i32 = arith.constant 0 : i32
    %c0_i32_0 = arith.constant 0 : i32
    %c0_i32_1 = arith.constant 0 : i32
    return %c0_i32, %c0_i32_0 : i32, i32
  }
  func.func @transform_5(%arg0: i32) -> (i32, i32) {
    %c0_i32 = arith.constant 0 : i32
    %c0_i32_0 = arith.constant 0 : i32
    %c0_i32_1 = arith.constant 0 : i32
    return %c0_i32, %c0_i32_0 : i32, i32
  }
  func.func @transform_6(%arg0: i32) -> (i32, i32) {
    %c0_i32 = arith.constant 0 : i32
    %c0_i32_0 = arith.constant 0 : i32
    %c0_i32_1 = arith.constant 0 : i32
    return %c0_i32, %c0_i32_0 : i32, i32
  }
  func.func @transform_7(%arg0: i32) -> (i32, i32) {
    %c0_i32 = arith.constant 0 : i32
    %c0_i32_0 = arith.constant 0 : i32
    return %arg0, %c0_i32 : i32, i32
  }
}

module attributes {stable_mosaic.version = 11 : i64} {
  func.func @kernel(%arg0: i32, %arg1: i32, %arg2: memref<1x8x32xf32, #tpu.memory_space<vmem>>, %arg3: memref<1x8x32xf32, #tpu.memory_space<vmem>>, %arg4: memref<8x8xf32, #tpu.memory_space<vmem>>, %arg5: memref<1x1x8xf32, #tpu.memory_space<vmem>>, %arg6: memref<32x32xbf16, #tpu.memory_space<vmem>>, %arg7: memref<1x32xf32, #tpu.memory_space<vmem>>, %arg8: memref<32x64xbf16, #tpu.memory_space<vmem>>, %arg9: memref<1x64xf32, #tpu.memory_space<vmem>>, %arg10: memref<32x32xbf16, #tpu.memory_space<vmem>>, %arg11: memref<1x32xf32, #tpu.memory_space<vmem>>, %arg12: memref<1x32xf32, #tpu.memory_space<vmem>>, %arg13: memref<1x32xf32, #tpu.memory_space<vmem>>, %arg14: memref<1x8x32xf32, #tpu.memory_space<vmem>>, %arg15: memref<8x32xf32, #tpu.memory_space<vmem>>) attributes {dimension_semantics = [#tpu.dimension_semantics<parallel>, #tpu.dimension_semantics<parallel>], iteration_bounds = array<i64: 2, 1>, scalar_prefetch = 0 : i64, scratch_operands = 1 : i64, tpu.core_type = #tpu.core_type<tc>, window_params = [{transform_indices = @transform_0, window_bounds = array<i64: 1, 8, 32>}, {transform_indices = @transform_1, window_bounds = array<i64: 1, 8, 32>}, {transform_indices = @transform_2, window_bounds = array<i64: 8, 8>}, {transform_indices = @transform_3, window_bounds = array<i64: 1, 1, 8>}, {pipeline_mode = #tpu.pipeline_mode<synchronous>, transform_indices = @transform_4, window_bounds = array<i64: 32, 32>}, {pipeline_mode = #tpu.pipeline_mode<synchronous>, transform_indices = @transform_5, window_bounds = array<i64: 1, 32>}, {pipeline_mode = #tpu.pipeline_mode<synchronous>, transform_indices = @transform_6, window_bounds = array<i64: 32, 64>}, {pipeline_mode = #tpu.pipeline_mode<synchronous>, transform_indices = @transform_7, window_bounds = array<i64: 1, 64>}, {pipeline_mode = #tpu.pipeline_mode<synchronous>, transform_indices = @transform_8, window_bounds = array<i64: 32, 32>}, {pipeline_mode = #tpu.pipeline_mode<synchronous>, transform_indices = @transform_9, window_bounds = array<i64: 1, 32>}, {pipeline_mode = #tpu.pipeline_mode<synchronous>, transform_indices = @transform_10, window_bounds = array<i64: 1, 32>}, {pipeline_mode = #tpu.pipeline_mode<synchronous>, transform_indices = @transform_11, window_bounds = array<i64: 1, 32>}, {transform_indices = @transform_12, window_bounds = array<i64: 1, 8, 32>}]} {
    %c0 = arith.constant 0 : index
    %c0_0 = arith.constant 0 : index
    %c0_1 = arith.constant 0 : index
    %0 = vector.load %arg2[%c0, %c0_0, %c0_1] : memref<1x8x32xf32, #tpu.memory_space<vmem>>, vector<1x8x32xf32>
    %1 = vector.shape_cast %0 : vector<1x8x32xf32> to vector<8x32xf32>
    %c0_2 = arith.constant 0 : index
    %c0_3 = arith.constant 0 : index
    %c0_4 = arith.constant 0 : index
    %2 = vector.load %arg3[%c0_2, %c0_3, %c0_4] : memref<1x8x32xf32, #tpu.memory_space<vmem>>, vector<1x8x32xf32>
    %3 = vector.shape_cast %2 : vector<1x8x32xf32> to vector<8x32xf32>
    %4 = arith.truncf %1 : vector<8x32xf32> to vector<8x32xbf16>
    %c0_5 = arith.constant 0 : index
    %c0_6 = arith.constant 0 : index
    %5 = vector.load %arg6[%c0_5, %c0_6] : memref<32x32xbf16, #tpu.memory_space<vmem>>, vector<32x32xbf16>
    %cst = arith.constant dense<0.000000e+00> : vector<8x32xf32>
    %6 = tpu.matmul %4, %5, %cst {dimension_numbers = #tpu.dot_dimension_numbers<[1], [0], [0], [1], [0, 0, 1, 1], [], []>} : vector<8x32xbf16>, vector<32x32xbf16>, vector<8x32xf32> -> vector<8x32xf32>
    %c0_7 = arith.constant 0 : index
    %c0_8 = arith.constant 0 : index
    %7 = vector.load %arg7[%c0_7, %c0_8] : memref<1x32xf32, #tpu.memory_space<vmem>>, vector<1x32xf32>
    %8 = vector.broadcast %7 : vector<1x32xf32> to vector<8x32xf32>
    %9 = arith.addf %6, %8 : vector<8x32xf32>
    %10 = arith.truncf %3 : vector<8x32xf32> to vector<8x32xbf16>
    %c0_9 = arith.constant 0 : index
    %c0_10 = arith.constant 0 : index
    %11 = vector.load %arg8[%c0_9, %c0_10] : memref<32x64xbf16, #tpu.memory_space<vmem>>, vector<32x64xbf16>
    %cst_11 = arith.constant dense<0.000000e+00> : vector<8x64xf32>
    %12 = tpu.matmul %10, %11, %cst_11 {dimension_numbers = #tpu.dot_dimension_numbers<[1], [0], [0], [1], [0, 0, 1, 1], [], []>} : vector<8x32xbf16>, vector<32x64xbf16>, vector<8x64xf32> -> vector<8x64xf32>
    %c0_12 = arith.constant 0 : index
    %c0_13 = arith.constant 0 : index
    %13 = vector.load %arg9[%c0_12, %c0_13] : memref<1x64xf32, #tpu.memory_space<vmem>>, vector<1x64xf32>
    %14 = vector.broadcast %13 : vector<1x64xf32> to vector<8x64xf32>
    %15 = arith.addf %12, %14 : vector<8x64xf32>
    %16 = vector.extract_strided_slice %15 {offsets = [0, 0], sizes = [8, 32], strides = [1, 1]} : vector<8x64xf32> to vector<8x32xf32>
    %17 = vector.extract_strided_slice %15 {offsets = [0, 32], sizes = [8, 32], strides = [1, 1]} : vector<8x64xf32> to vector<8x32xf32>
    %c0_14 = arith.constant 0 : index
    %c0_15 = arith.constant 0 : index
    %c0_16 = arith.constant 0 : index
    %18 = vector.load %arg5[%c0_14, %c0_15, %c0_16] : memref<1x1x8xf32, #tpu.memory_space<vmem>>, vector<1x1x8xf32>
    %19 = vector.shape_cast %18 : vector<1x1x8xf32> to vector<1x8xf32>
    %c0_17 = arith.constant 0 : index
    %c0_18 = arith.constant 0 : index
    %20 = vector.load %arg4[%c0_17, %c0_18] : memref<8x8xf32, #tpu.memory_space<vmem>>, vector<8x8xf32>
    %21 = vector.broadcast %19 : vector<1x8xf32> to vector<8x8xf32>
    %22 = arith.addf %20, %21 : vector<8x8xf32>
    %23 = vector.extract_strided_slice %9 {offsets = [0, 0], sizes = [8, 8], strides = [1, 1]} : vector<8x32xf32> to vector<8x8xf32>
    %24 = arith.truncf %23 : vector<8x8xf32> to vector<8x8xbf16>
    %25 = vector.extract_strided_slice %16 {offsets = [0, 0], sizes = [8, 8], strides = [1, 1]} : vector<8x32xf32> to vector<8x8xf32>
    %26 = arith.truncf %25 : vector<8x8xf32> to vector<8x8xbf16>
    %27 = vector.extract_strided_slice %17 {offsets = [0, 0], sizes = [8, 8], strides = [1, 1]} : vector<8x32xf32> to vector<8x8xf32>
    %28 = arith.truncf %27 : vector<8x8xf32> to vector<8x8xbf16>
    %cst_19 = arith.constant dense<0.000000e+00> : vector<8x8xf32>
    %29 = tpu.matmul %24, %26, %cst_19 {dimension_numbers = #tpu.dot_dimension_numbers<[1], [1], [0], [0], [0, 0, 1, 0], [], []>} : vector<8x8xbf16>, vector<8x8xbf16>, vector<8x8xf32> -> vector<8x8xf32>
    %30 = arith.addf %29, %22 : vector<8x8xf32>
    %cst_20 = arith.constant dense<0xFF800000> : vector<8xf32>
    %31 = vector.multi_reduction <maximumf>, %30, %cst_20 [1] : vector<8x8xf32> to vector<8xf32>
    %32 = vector.shape_cast %31 : vector<8xf32> to vector<8x1xf32>
    %33 = vector.broadcast %32 : vector<8x1xf32> to vector<8x8xf32>
    %34 = arith.subf %30, %33 : vector<8x8xf32>
    %35 = math.exp %34 : vector<8x8xf32>
    %cst_21 = arith.constant dense<0.000000e+00> : vector<8xf32>
    %36 = vector.multi_reduction <add>, %35, %cst_21 [1] : vector<8x8xf32> to vector<8xf32>
    %37 = vector.shape_cast %36 : vector<8xf32> to vector<8x1xf32>
    %38 = tpu.reciprocal %37 {approx = true} : vector<8x1xf32> -> vector<8x1xf32>
    %39 = vector.broadcast %38 : vector<8x1xf32> to vector<8x8xf32>
    %40 = arith.mulf %35, %39 : vector<8x8xf32>
    %41 = arith.truncf %40 : vector<8x8xf32> to vector<8x8xbf16>
    %cst_22 = arith.constant dense<0.000000e+00> : vector<8x8xf32>
    %42 = tpu.matmul %41, %28, %cst_22 {dimension_numbers = #tpu.dot_dimension_numbers<[1], [0], [0], [1], [0, 0, 1, 1], [], []>} : vector<8x8xbf16>, vector<8x8xbf16>, vector<8x8xf32> -> vector<8x8xf32>
    %c0_23 = arith.constant 0 : index
    %c0_24 = arith.constant 0 : index
    %43 = vector.load %arg15[%c0_23, %c0_24] : memref<8x32xf32, #tpu.memory_space<vmem>>, vector<8x8xf32>
    tpu.vector_store %arg15[%c0_23, %c0_24], %42 {strides = array<i32>} : memref<8x32xf32, #tpu.memory_space<vmem>>, vector<8x8xf32>,
    %44 = vector.extract_strided_slice %9 {offsets = [0, 8], sizes = [8, 8], strides = [1, 1]} : vector<8x32xf32> to vector<8x8xf32>
    %45 = arith.truncf %44 : vector<8x8xf32> to vector<8x8xbf16>
    %46 = vector.extract_strided_slice %16 {offsets = [0, 8], sizes = [8, 8], strides = [1, 1]} : vector<8x32xf32> to vector<8x8xf32>
    %47 = arith.truncf %46 : vector<8x8xf32> to vector<8x8xbf16>
    %48 = vector.extract_strided_slice %17 {offsets = [0, 8], sizes = [8, 8], strides = [1, 1]} : vector<8x32xf32> to vector<8x8xf32>
    %49 = arith.truncf %48 : vector<8x8xf32> to vector<8x8xbf16>
    %cst_25 = arith.constant dense<0.000000e+00> : vector<8x8xf32>
    %50 = tpu.matmul %45, %47, %cst_25 {dimension_numbers = #tpu.dot_dimension_numbers<[1], [1], [0], [0], [0, 0, 1, 0], [], []>} : vector<8x8xbf16>, vector<8x8xbf16>, vector<8x8xf32> -> vector<8x8xf32>
    %51 = arith.addf %50, %22 : vector<8x8xf32>
    %cst_26 = arith.constant dense<0xFF800000> : vector<8xf32>
    %52 = vector.multi_reduction <maximumf>, %51, %cst_26 [1] : vector<8x8xf32> to vector<8xf32>
    %53 = vector.shape_cast %52 : vector<8xf32> to vector<8x1xf32>
    %54 = vector.broadcast %53 : vector<8x1xf32> to vector<8x8xf32>
    %55 = arith.subf %51, %54 : vector<8x8xf32>
    %56 = math.exp %55 : vector<8x8xf32>
    %cst_27 = arith.constant dense<0.000000e+00> : vector<8xf32>
    %57 = vector.multi_reduction <add>, %56, %cst_27 [1] : vector<8x8xf32> to vector<8xf32>
    %58 = vector.shape_cast %57 : vector<8xf32> to vector<8x1xf32>
    %59 = tpu.reciprocal %58 {approx = true} : vector<8x1xf32> -> vector<8x1xf32>
    %60 = vector.broadcast %59 : vector<8x1xf32> to vector<8x8xf32>
    %61 = arith.mulf %56, %60 : vector<8x8xf32>
    %62 = arith.truncf %61 : vector<8x8xf32> to vector<8x8xbf16>
    %cst_28 = arith.constant dense<0.000000e+00> : vector<8x8xf32>
    %63 = tpu.matmul %62, %49, %cst_28 {dimension_numbers = #tpu.dot_dimension_numbers<[1], [0], [0], [1], [0, 0, 1, 1], [], []>} : vector<8x8xbf16>, vector<8x8xbf16>, vector<8x8xf32> -> vector<8x8xf32>
    %c0_29 = arith.constant 0 : index
    %c8 = arith.constant 8 : index
    %64 = vector.load %arg15[%c0_29, %c8] : memref<8x32xf32, #tpu.memory_space<vmem>>, vector<8x8xf32>
    tpu.vector_store %arg15[%c0_29, %c8], %63 {strides = array<i32>} : memref<8x32xf32, #tpu.memory_space<vmem>>, vector<8x8xf32>,
    %65 = vector.extract_strided_slice %9 {offsets = [0, 16], sizes = [8, 8], strides = [1, 1]} : vector<8x32xf32> to vector<8x8xf32>
    %66 = arith.truncf %65 : vector<8x8xf32> to vector<8x8xbf16>
    %67 = vector.extract_strided_slice %16 {offsets = [0, 16], sizes = [8, 8], strides = [1, 1]} : vector<8x32xf32> to vector<8x8xf32>
    %68 = arith.truncf %67 : vector<8x8xf32> to vector<8x8xbf16>
    %69 = vector.extract_strided_slice %17 {offsets = [0, 16], sizes = [8, 8], strides = [1, 1]} : vector<8x32xf32> to vector<8x8xf32>
    %70 = arith.truncf %69 : vector<8x8xf32> to vector<8x8xbf16>
    %cst_30 = arith.constant dense<0.000000e+00> : vector<8x8xf32>
    %71 = tpu.matmul %66, %68, %cst_30 {dimension_numbers = #tpu.dot_dimension_numbers<[1], [1], [0], [0], [0, 0, 1, 0], [], []>} : vector<8x8xbf16>, vector<8x8xbf16>, vector<8x8xf32> -> vector<8x8xf32>
    %72 = arith.addf %71, %22 : vector<8x8xf32>
    %cst_31 = arith.constant dense<0xFF800000> : vector<8xf32>
    %73 = vector.multi_reduction <maximumf>, %72, %cst_31 [1] : vector<8x8xf32> to vector<8xf32>
    %74 = vector.shape_cast %73 : vector<8xf32> to vector<8x1xf32>
    %75 = vector.broadcast %74 : vector<8x1xf32> to vector<8x8xf32>
    %76 = arith.subf %72, %75 : vector<8x8xf32>
    %77 = math.exp %76 : vector<8x8xf32>
    %cst_32 = arith.constant dense<0.000000e+00> : vector<8xf32>
    %78 = vector.multi_reduction <add>, %77, %cst_32 [1] : vector<8x8xf32> to vector<8xf32>
    %79 = vector.shape_cast %78 : vector<8xf32> to vector<8x1xf32>
    %80 = tpu.reciprocal %79 {approx = true} : vector<8x1xf32> -> vector<8x1xf32>
    %81 = vector.broadcast %80 : vector<8x1xf32> to vector<8x8xf32>
    %82 = arith.mulf %77, %81 : vector<8x8xf32>
    %83 = arith.truncf %82 : vector<8x8xf32> to vector<8x8xbf16>
    %cst_33 = arith.constant dense<0.000000e+00> : vector<8x8xf32>
    %84 = tpu.matmul %83, %70, %cst_33 {dimension_numbers = #tpu.dot_dimension_numbers<[1], [0], [0], [1], [0, 0, 1, 1], [], []>} : vector<8x8xbf16>, vector<8x8xbf16>, vector<8x8xf32> -> vector<8x8xf32>
    %c0_34 = arith.constant 0 : index
    %c16 = arith.constant 16 : index
    %85 = vector.load %arg15[%c0_34, %c16] : memref<8x32xf32, #tpu.memory_space<vmem>>, vector<8x8xf32>
    tpu.vector_store %arg15[%c0_34, %c16], %84 {strides = array<i32>} : memref<8x32xf32, #tpu.memory_space<vmem>>, vector<8x8xf32>,
    %86 = vector.extract_strided_slice %9 {offsets = [0, 24], sizes = [8, 8], strides = [1, 1]} : vector<8x32xf32> to vector<8x8xf32>
    %87 = arith.truncf %86 : vector<8x8xf32> to vector<8x8xbf16>
    %88 = vector.extract_strided_slice %16 {offsets = [0, 24], sizes = [8, 8], strides = [1, 1]} : vector<8x32xf32> to vector<8x8xf32>
    %89 = arith.truncf %88 : vector<8x8xf32> to vector<8x8xbf16>
    %90 = vector.extract_strided_slice %17 {offsets = [0, 24], sizes = [8, 8], strides = [1, 1]} : vector<8x32xf32> to vector<8x8xf32>
    %91 = arith.truncf %90 : vector<8x8xf32> to vector<8x8xbf16>
    %cst_35 = arith.constant dense<0.000000e+00> : vector<8x8xf32>
    %92 = tpu.matmul %87, %89, %cst_35 {dimension_numbers = #tpu.dot_dimension_numbers<[1], [1], [0], [0], [0, 0, 1, 0], [], []>} : vector<8x8xbf16>, vector<8x8xbf16>, vector<8x8xf32> -> vector<8x8xf32>
    %93 = arith.addf %92, %22 : vector<8x8xf32>
    %cst_36 = arith.constant dense<0xFF800000> : vector<8xf32>
    %94 = vector.multi_reduction <maximumf>, %93, %cst_36 [1] : vector<8x8xf32> to vector<8xf32>
    %95 = vector.shape_cast %94 : vector<8xf32> to vector<8x1xf32>
    %96 = vector.broadcast %95 : vector<8x1xf32> to vector<8x8xf32>
    %97 = arith.subf %93, %96 : vector<8x8xf32>
    %98 = math.exp %97 : vector<8x8xf32>
    %cst_37 = arith.constant dense<0.000000e+00> : vector<8xf32>
    %99 = vector.multi_reduction <add>, %98, %cst_37 [1] : vector<8x8xf32> to vector<8xf32>
    %100 = vector.shape_cast %99 : vector<8xf32> to vector<8x1xf32>
    %101 = tpu.reciprocal %100 {approx = true} : vector<8x1xf32> -> vector<8x1xf32>
    %102 = vector.broadcast %101 : vector<8x1xf32> to vector<8x8xf32>
    %103 = arith.mulf %98, %102 : vector<8x8xf32>
    %104 = arith.truncf %103 : vector<8x8xf32> to vector<8x8xbf16>
    %cst_38 = arith.constant dense<0.000000e+00> : vector<8x8xf32>
    %105 = tpu.matmul %104, %91, %cst_38 {dimension_numbers = #tpu.dot_dimension_numbers<[1], [0], [0], [1], [0, 0, 1, 1], [], []>} : vector<8x8xbf16>, vector<8x8xbf16>, vector<8x8xf32> -> vector<8x8xf32>
    %c0_39 = arith.constant 0 : index
    %c24 = arith.constant 24 : index
    %106 = vector.load %arg15[%c0_39, %c24] : memref<8x32xf32, #tpu.memory_space<vmem>>, vector<8x8xf32>
    tpu.vector_store %arg15[%c0_39, %c24], %105 {strides = array<i32>} : memref<8x32xf32, #tpu.memory_space<vmem>>, vector<8x8xf32>,
    %c0_40 = arith.constant 0 : index
    %c0_41 = arith.constant 0 : index
    %107 = vector.load %arg15[%c0_40, %c0_41] : memref<8x32xf32, #tpu.memory_space<vmem>>, vector<8x32xf32>
    %108 = arith.truncf %107 : vector<8x32xf32> to vector<8x32xbf16>
    %c0_42 = arith.constant 0 : index
    %c0_43 = arith.constant 0 : index
    %109 = vector.load %arg10[%c0_42, %c0_43] : memref<32x32xbf16, #tpu.memory_space<vmem>>, vector<32x32xbf16>
    %cst_44 = arith.constant dense<0.000000e+00> : vector<8x32xf32>
    %110 = tpu.matmul %108, %109, %cst_44 {dimension_numbers = #tpu.dot_dimension_numbers<[1], [0], [0], [1], [0, 0, 1, 1], [], []>} : vector<8x32xbf16>, vector<32x32xbf16>, vector<8x32xf32> -> vector<8x32xf32>
    %c0_45 = arith.constant 0 : index
    %c0_46 = arith.constant 0 : index
    %111 = vector.load %arg11[%c0_45, %c0_46] : memref<1x32xf32, #tpu.memory_space<vmem>>, vector<1x32xf32>
    %112 = vector.broadcast %111 : vector<1x32xf32> to vector<8x32xf32>
    %113 = arith.addf %110, %112 : vector<8x32xf32>
    %114 = arith.addf %1, %113 : vector<8x32xf32>
    %cst_47 = arith.constant dense<0.000000e+00> : vector<8xf32>
    %115 = vector.multi_reduction <add>, %114, %cst_47 [1] : vector<8x32xf32> to vector<8xf32>
    %116 = vector.shape_cast %115 : vector<8xf32> to vector<8x1xf32>
    %cst_48 = arith.constant 3.200000e+01 : f32
    %117 = vector.broadcast %cst_48 : f32 to vector<8x1xf32>
    %118 = arith.divf %116, %117 : vector<8x1xf32>
    %119 = vector.broadcast %118 : vector<8x1xf32> to vector<8x32xf32>
    %120 = arith.subf %114, %119 : vector<8x32xf32>
    %121 = arith.mulf %120, %120 : vector<8x32xf32>
    %cst_49 = arith.constant dense<0.000000e+00> : vector<8xf32>
    %122 = vector.multi_reduction <add>, %121, %cst_49 [1] : vector<8x32xf32> to vector<8xf32>
    %123 = vector.shape_cast %122 : vector<8xf32> to vector<8x1xf32>
    %cst_50 = arith.constant 3.200000e+01 : f32
    %124 = vector.broadcast %cst_50 : f32 to vector<8x1xf32>
    %125 = arith.divf %123, %124 : vector<8x1xf32>
    %126 = vector.broadcast %118 : vector<8x1xf32> to vector<8x32xf32>
    %127 = arith.subf %114, %126 : vector<8x32xf32>
    %cst_51 = arith.constant 9.99999974E-6 : f32
    %128 = vector.broadcast %cst_51 : f32 to vector<8x1xf32>
    %129 = arith.addf %125, %128 : vector<8x1xf32>
    %130 = math.rsqrt %129 : vector<8x1xf32>
    %131 = vector.broadcast %130 : vector<8x1xf32> to vector<8x32xf32>
    %132 = arith.mulf %127, %131 : vector<8x32xf32>
    %c0_52 = arith.constant 0 : index
    %c0_53 = arith.constant 0 : index
    %133 = vector.load %arg12[%c0_52, %c0_53] : memref<1x32xf32, #tpu.memory_space<vmem>>, vector<1x32xf32>
    %134 = vector.broadcast %133 : vector<1x32xf32> to vector<8x32xf32>
    %135 = arith.mulf %132, %134 : vector<8x32xf32>
    %c0_54 = arith.constant 0 : index
    %c0_55 = arith.constant 0 : index
    %136 = vector.load %arg13[%c0_54, %c0_55] : memref<1x32xf32, #tpu.memory_space<vmem>>, vector<1x32xf32>
    %137 = vector.broadcast %136 : vector<1x32xf32> to vector<8x32xf32>
    %138 = arith.addf %135, %137 : vector<8x32xf32>
    %c0_56 = arith.constant 0 : index
    %c0_57 = arith.constant 0 : index
    %c0_58 = arith.constant 0 : index
    %139 = vector.load %arg14[%c0_56, %c0_57, %c0_58] : memref<1x8x32xf32, #tpu.memory_space<vmem>>, vector<1x8x32xf32>
    %140 = vector.shape_cast %139 : vector<1x8x32xf32> to vector<8x32xf32>
    %141 = vector.shape_cast %138 : vector<8x32xf32> to vector<1x8x32xf32>
    tpu.vector_store %arg14[%c0_56, %c0_57, %c0_58], %141 {strides = array<i32>} : memref<1x8x32xf32, #tpu.memory_space<vmem>>, vector<1x8x32xf32>,
    return
  }
  func.func @transform_0(%arg0: i32, %arg1: i32) -> (i32, i32, i32) {
    %c0_i32 = arith.constant 0 : i32
    %c0_i32_0 = arith.constant 0 : i32
    return %arg0, %arg1, %c0_i32 : i32, i32, i32
  }
  func.func @transform_1(%arg0: i32, %arg1: i32) -> (i32, i32, i32) {
    %c0_i32 = arith.constant 0 : i32
    %c0_i32_0 = arith.constant 0 : i32
    %c0_i32_1 = arith.constant 0 : i32
    return %arg0, %c0_i32, %c0_i32_0 : i32, i32, i32
  }
  func.func @transform_2(%arg0: i32, %arg1: i32) -> (i32, i32) {
    %c0_i32 = arith.constant 0 : i32
    %c0_i32_0 = arith.constant 0 : i32
    return %arg1, %c0_i32 : i32, i32
  }
  func.func @transform_3(%arg0: i32, %arg1: i32) -> (i32, i32, i32) {
    %c0_i32 = arith.constant 0 : i32
    %c0_i32_0 = arith.constant 0 : i32
    %c0_i32_1 = arith.constant 0 : i32
    return %arg0, %c0_i32, %c0_i32_0 : i32, i32, i32
  }
  func.func @transform_4(%arg0: i32, %arg1: i32) -> (i32, i32) {
    %c0_i32 = arith.constant 0 : i32
    %c0_i32_0 = arith.constant 0 : i32
    %c0_i32_1 = arith.constant 0 : i32
    return %c0_i32, %c0_i32_0 : i32, i32
  }
  func.func @transform_5(%arg0: i32, %arg1: i32) -> (i32, i32) {
    %c0_i32 = arith.constant 0 : i32
    %c0_i32_0 = arith.constant 0 : i32
    %c0_i32_1 = arith.constant 0 : i32
    return %c0_i32, %c0_i32_0 : i32, i32
  }
  func.func @transform_6(%arg0: i32, %arg1: i32) -> (i32, i32) {
    %c0_i32 = arith.constant 0 : i32
    %c0_i32_0 = arith.constant 0 : i32
    %c0_i32_1 = arith.constant 0 : i32
    return %c0_i32, %c0_i32_0 : i32, i32
  }
  func.func @transform_7(%arg0: i32, %arg1: i32) -> (i32, i32) {
    %c0_i32 = arith.constant 0 : i32
    %c0_i32_0 = arith.constant 0 : i32
    %c0_i32_1 = arith.constant 0 : i32
    return %c0_i32, %c0_i32_0 : i32, i32
  }
  func.func @transform_8(%arg0: i32, %arg1: i32) -> (i32, i32) {
    %c0_i32 = arith.constant 0 : i32
    %c0_i32_0 = arith.constant 0 : i32
    %c0_i32_1 = arith.constant 0 : i32
    return %c0_i32, %c0_i32_0 : i32, i32
  }
  func.func @transform_9(%arg0: i32, %arg1: i32) -> (i32, i32) {
    %c0_i32 = arith.constant 0 : i32
    %c0_i32_0 = arith.constant 0 : i32
    %c0_i32_1 = arith.constant 0 : i32
    return %c0_i32, %c0_i32_0 : i32, i32
  }
  func.func @transform_10(%arg0: i32, %arg1: i32) -> (i32, i32) {
    %c0_i32 = arith.constant 0 : i32
    %c0_i32_0 = arith.constant 0 : i32
    %c0_i32_1 = arith.constant 0 : i32
    return %c0_i32, %c0_i32_0 : i32, i32
  }
  func.func @transform_11(%arg0: i32, %arg1: i32) -> (i32, i32) {
    %c0_i32 = arith.constant 0 : i32
    %c0_i32_0 = arith.constant 0 : i32
    %c0_i32_1 = arith.constant 0 : i32
    return %c0_i32, %c0_i32_0 : i32, i32
  }
  func.func @transform_12(%arg0: i32, %arg1: i32) -> (i32, i32, i32) {
    %c0_i32 = arith.constant 0 : i32
    %c0_i32_0 = arith.constant 0 : i32
    return %arg0, %arg1, %c0_i32 : i32, i32, i32
  }
}

module attributes {stable_mosaic.version = 11 : i64} {
  func.func @kernel(%arg0: i32, %arg1: i32, %arg2: memref<1x8x32xf32, #tpu.memory_space<vmem>>, %arg3: memref<1x8x32xf32, #tpu.memory_space<vmem>>, %arg4: memref<1x1x8xf32, #tpu.memory_space<vmem>>, %arg5: memref<32x32xbf16, #tpu.memory_space<vmem>>, %arg6: memref<1x32xf32, #tpu.memory_space<vmem>>, %arg7: memref<32x64xbf16, #tpu.memory_space<vmem>>, %arg8: memref<1x64xf32, #tpu.memory_space<vmem>>, %arg9: memref<32x32xbf16, #tpu.memory_space<vmem>>, %arg10: memref<1x32xf32, #tpu.memory_space<vmem>>, %arg11: memref<1x32xf32, #tpu.memory_space<vmem>>, %arg12: memref<1x32xf32, #tpu.memory_space<vmem>>, %arg13: memref<1x8x32xf32, #tpu.memory_space<vmem>>, %arg14: memref<8x32xf32, #tpu.memory_space<vmem>>) attributes {dimension_semantics = [#tpu.dimension_semantics<parallel>, #tpu.dimension_semantics<parallel>], iteration_bounds = array<i64: 2, 1>, scalar_prefetch = 0 : i64, scratch_operands = 1 : i64, tpu.core_type = #tpu.core_type<tc>, window_params = [{transform_indices = @transform_0, window_bounds = array<i64: 1, 8, 32>}, {transform_indices = @transform_1, window_bounds = array<i64: 1, 8, 32>}, {transform_indices = @transform_2, window_bounds = array<i64: 1, 1, 8>}, {pipeline_mode = #tpu.pipeline_mode<synchronous>, transform_indices = @transform_3, window_bounds = array<i64: 32, 32>}, {pipeline_mode = #tpu.pipeline_mode<synchronous>, transform_indices = @transform_4, window_bounds = array<i64: 1, 32>}, {pipeline_mode = #tpu.pipeline_mode<synchronous>, transform_indices = @transform_5, window_bounds = array<i64: 32, 64>}, {pipeline_mode = #tpu.pipeline_mode<synchronous>, transform_indices = @transform_6, window_bounds = array<i64: 1, 64>}, {pipeline_mode = #tpu.pipeline_mode<synchronous>, transform_indices = @transform_7, window_bounds = array<i64: 32, 32>}, {pipeline_mode = #tpu.pipeline_mode<synchronous>, transform_indices = @transform_8, window_bounds = array<i64: 1, 32>}, {pipeline_mode = #tpu.pipeline_mode<synchronous>, transform_indices = @transform_9, window_bounds = array<i64: 1, 32>}, {pipeline_mode = #tpu.pipeline_mode<synchronous>, transform_indices = @transform_10, window_bounds = array<i64: 1, 32>}, {transform_indices = @transform_11, window_bounds = array<i64: 1, 8, 32>}]} {
    %c0 = arith.constant 0 : index
    %c0_0 = arith.constant 0 : index
    %c0_1 = arith.constant 0 : index
    %0 = vector.load %arg2[%c0, %c0_0, %c0_1] : memref<1x8x32xf32, #tpu.memory_space<vmem>>, vector<1x8x32xf32>
    %1 = vector.shape_cast %0 : vector<1x8x32xf32> to vector<8x32xf32>
    %c0_2 = arith.constant 0 : index
    %c0_3 = arith.constant 0 : index
    %c0_4 = arith.constant 0 : index
    %2 = vector.load %arg3[%c0_2, %c0_3, %c0_4] : memref<1x8x32xf32, #tpu.memory_space<vmem>>, vector<1x8x32xf32>
    %3 = vector.shape_cast %2 : vector<1x8x32xf32> to vector<8x32xf32>
    %4 = arith.truncf %1 : vector<8x32xf32> to vector<8x32xbf16>
    %c0_5 = arith.constant 0 : index
    %c0_6 = arith.constant 0 : index
    %5 = vector.load %arg5[%c0_5, %c0_6] : memref<32x32xbf16, #tpu.memory_space<vmem>>, vector<32x32xbf16>
    %cst = arith.constant dense<0.000000e+00> : vector<8x32xf32>
    %6 = tpu.matmul %4, %5, %cst {dimension_numbers = #tpu.dot_dimension_numbers<[1], [0], [0], [1], [0, 0, 1, 1], [], []>} : vector<8x32xbf16>, vector<32x32xbf16>, vector<8x32xf32> -> vector<8x32xf32>
    %c0_7 = arith.constant 0 : index
    %c0_8 = arith.constant 0 : index
    %7 = vector.load %arg6[%c0_7, %c0_8] : memref<1x32xf32, #tpu.memory_space<vmem>>, vector<1x32xf32>
    %8 = vector.broadcast %7 : vector<1x32xf32> to vector<8x32xf32>
    %9 = arith.addf %6, %8 : vector<8x32xf32>
    %10 = arith.truncf %3 : vector<8x32xf32> to vector<8x32xbf16>
    %c0_9 = arith.constant 0 : index
    %c0_10 = arith.constant 0 : index
    %11 = vector.load %arg7[%c0_9, %c0_10] : memref<32x64xbf16, #tpu.memory_space<vmem>>, vector<32x64xbf16>
    %cst_11 = arith.constant dense<0.000000e+00> : vector<8x64xf32>
    %12 = tpu.matmul %10, %11, %cst_11 {dimension_numbers = #tpu.dot_dimension_numbers<[1], [0], [0], [1], [0, 0, 1, 1], [], []>} : vector<8x32xbf16>, vector<32x64xbf16>, vector<8x64xf32> -> vector<8x64xf32>
    %c0_12 = arith.constant 0 : index
    %c0_13 = arith.constant 0 : index
    %13 = vector.load %arg8[%c0_12, %c0_13] : memref<1x64xf32, #tpu.memory_space<vmem>>, vector<1x64xf32>
    %14 = vector.broadcast %13 : vector<1x64xf32> to vector<8x64xf32>
    %15 = arith.addf %12, %14 : vector<8x64xf32>
    %16 = vector.extract_strided_slice %15 {offsets = [0, 0], sizes = [8, 32], strides = [1, 1]} : vector<8x64xf32> to vector<8x32xf32>
    %17 = vector.extract_strided_slice %15 {offsets = [0, 32], sizes = [8, 32], strides = [1, 1]} : vector<8x64xf32> to vector<8x32xf32>
    %c0_14 = arith.constant 0 : index
    %c0_15 = arith.constant 0 : index
    %c0_16 = arith.constant 0 : index
    %18 = vector.load %arg4[%c0_14, %c0_15, %c0_16] : memref<1x1x8xf32, #tpu.memory_space<vmem>>, vector<1x1x8xf32>
    %19 = vector.shape_cast %18 : vector<1x1x8xf32> to vector<1x8xf32>
    %20 = vector.extract_strided_slice %9 {offsets = [0, 0], sizes = [8, 8], strides = [1, 1]} : vector<8x32xf32> to vector<8x8xf32>
    %21 = arith.truncf %20 : vector<8x8xf32> to vector<8x8xbf16>
    %22 = vector.extract_strided_slice %16 {offsets = [0, 0], sizes = [8, 8], strides = [1, 1]} : vector<8x32xf32> to vector<8x8xf32>
    %23 = arith.truncf %22 : vector<8x8xf32> to vector<8x8xbf16>
    %24 = vector.extract_strided_slice %17 {offsets = [0, 0], sizes = [8, 8], strides = [1, 1]} : vector<8x32xf32> to vector<8x8xf32>
    %25 = arith.truncf %24 : vector<8x8xf32> to vector<8x8xbf16>
    %cst_17 = arith.constant dense<0.000000e+00> : vector<8x8xf32>
    %26 = tpu.matmul %21, %23, %cst_17 {dimension_numbers = #tpu.dot_dimension_numbers<[1], [1], [0], [0], [0, 0, 1, 0], [], []>} : vector<8x8xbf16>, vector<8x8xbf16>, vector<8x8xf32> -> vector<8x8xf32>
    %27 = vector.broadcast %19 : vector<1x8xf32> to vector<8x8xf32>
    %28 = arith.addf %26, %27 : vector<8x8xf32>
    %cst_18 = arith.constant dense<0xFF800000> : vector<8xf32>
    %29 = vector.multi_reduction <maximumf>, %28, %cst_18 [1] : vector<8x8xf32> to vector<8xf32>
    %30 = vector.shape_cast %29 : vector<8xf32> to vector<8x1xf32>
    %31 = vector.broadcast %30 : vector<8x1xf32> to vector<8x8xf32>
    %32 = arith.subf %28, %31 : vector<8x8xf32>
    %33 = math.exp %32 : vector<8x8xf32>
    %cst_19 = arith.constant dense<0.000000e+00> : vector<8xf32>
    %34 = vector.multi_reduction <add>, %33, %cst_19 [1] : vector<8x8xf32> to vector<8xf32>
    %35 = vector.shape_cast %34 : vector<8xf32> to vector<8x1xf32>
    %36 = tpu.reciprocal %35 {approx = true} : vector<8x1xf32> -> vector<8x1xf32>
    %37 = vector.broadcast %36 : vector<8x1xf32> to vector<8x8xf32>
    %38 = arith.mulf %33, %37 : vector<8x8xf32>
    %39 = arith.truncf %38 : vector<8x8xf32> to vector<8x8xbf16>
    %cst_20 = arith.constant dense<0.000000e+00> : vector<8x8xf32>
    %40 = tpu.matmul %39, %25, %cst_20 {dimension_numbers = #tpu.dot_dimension_numbers<[1], [0], [0], [1], [0, 0, 1, 1], [], []>} : vector<8x8xbf16>, vector<8x8xbf16>, vector<8x8xf32> -> vector<8x8xf32>
    %c0_21 = arith.constant 0 : index
    %c0_22 = arith.constant 0 : index
    %41 = vector.load %arg14[%c0_21, %c0_22] : memref<8x32xf32, #tpu.memory_space<vmem>>, vector<8x8xf32>
    tpu.vector_store %arg14[%c0_21, %c0_22], %40 {strides = array<i32>} : memref<8x32xf32, #tpu.memory_space<vmem>>, vector<8x8xf32>,
    %42 = vector.extract_strided_slice %9 {offsets = [0, 8], sizes = [8, 8], strides = [1, 1]} : vector<8x32xf32> to vector<8x8xf32>
    %43 = arith.truncf %42 : vector<8x8xf32> to vector<8x8xbf16>
    %44 = vector.extract_strided_slice %16 {offsets = [0, 8], sizes = [8, 8], strides = [1, 1]} : vector<8x32xf32> to vector<8x8xf32>
    %45 = arith.truncf %44 : vector<8x8xf32> to vector<8x8xbf16>
    %46 = vector.extract_strided_slice %17 {offsets = [0, 8], sizes = [8, 8], strides = [1, 1]} : vector<8x32xf32> to vector<8x8xf32>
    %47 = arith.truncf %46 : vector<8x8xf32> to vector<8x8xbf16>
    %cst_23 = arith.constant dense<0.000000e+00> : vector<8x8xf32>
    %48 = tpu.matmul %43, %45, %cst_23 {dimension_numbers = #tpu.dot_dimension_numbers<[1], [1], [0], [0], [0, 0, 1, 0], [], []>} : vector<8x8xbf16>, vector<8x8xbf16>, vector<8x8xf32> -> vector<8x8xf32>
    %49 = vector.broadcast %19 : vector<1x8xf32> to vector<8x8xf32>
    %50 = arith.addf %48, %49 : vector<8x8xf32>
    %cst_24 = arith.constant dense<0xFF800000> : vector<8xf32>
    %51 = vector.multi_reduction <maximumf>, %50, %cst_24 [1] : vector<8x8xf32> to vector<8xf32>
    %52 = vector.shape_cast %51 : vector<8xf32> to vector<8x1xf32>
    %53 = vector.broadcast %52 : vector<8x1xf32> to vector<8x8xf32>
    %54 = arith.subf %50, %53 : vector<8x8xf32>
    %55 = math.exp %54 : vector<8x8xf32>
    %cst_25 = arith.constant dense<0.000000e+00> : vector<8xf32>
    %56 = vector.multi_reduction <add>, %55, %cst_25 [1] : vector<8x8xf32> to vector<8xf32>
    %57 = vector.shape_cast %56 : vector<8xf32> to vector<8x1xf32>
    %58 = tpu.reciprocal %57 {approx = true} : vector<8x1xf32> -> vector<8x1xf32>
    %59 = vector.broadcast %58 : vector<8x1xf32> to vector<8x8xf32>
    %60 = arith.mulf %55, %59 : vector<8x8xf32>
    %61 = arith.truncf %60 : vector<8x8xf32> to vector<8x8xbf16>
    %cst_26 = arith.constant dense<0.000000e+00> : vector<8x8xf32>
    %62 = tpu.matmul %61, %47, %cst_26 {dimension_numbers = #tpu.dot_dimension_numbers<[1], [0], [0], [1], [0, 0, 1, 1], [], []>} : vector<8x8xbf16>, vector<8x8xbf16>, vector<8x8xf32> -> vector<8x8xf32>
    %c0_27 = arith.constant 0 : index
    %c8 = arith.constant 8 : index
    %63 = vector.load %arg14[%c0_27, %c8] : memref<8x32xf32, #tpu.memory_space<vmem>>, vector<8x8xf32>
    tpu.vector_store %arg14[%c0_27, %c8], %62 {strides = array<i32>} : memref<8x32xf32, #tpu.memory_space<vmem>>, vector<8x8xf32>,
    %64 = vector.extract_strided_slice %9 {offsets = [0, 16], sizes = [8, 8], strides = [1, 1]} : vector<8x32xf32> to vector<8x8xf32>
    %65 = arith.truncf %64 : vector<8x8xf32> to vector<8x8xbf16>
    %66 = vector.extract_strided_slice %16 {offsets = [0, 16], sizes = [8, 8], strides = [1, 1]} : vector<8x32xf32> to vector<8x8xf32>
    %67 = arith.truncf %66 : vector<8x8xf32> to vector<8x8xbf16>
    %68 = vector.extract_strided_slice %17 {offsets = [0, 16], sizes = [8, 8], strides = [1, 1]} : vector<8x32xf32> to vector<8x8xf32>
    %69 = arith.truncf %68 : vector<8x8xf32> to vector<8x8xbf16>
    %cst_28 = arith.constant dense<0.000000e+00> : vector<8x8xf32>
    %70 = tpu.matmul %65, %67, %cst_28 {dimension_numbers = #tpu.dot_dimension_numbers<[1], [1], [0], [0], [0, 0, 1, 0], [], []>} : vector<8x8xbf16>, vector<8x8xbf16>, vector<8x8xf32> -> vector<8x8xf32>
    %71 = vector.broadcast %19 : vector<1x8xf32> to vector<8x8xf32>
    %72 = arith.addf %70, %71 : vector<8x8xf32>
    %cst_29 = arith.constant dense<0xFF800000> : vector<8xf32>
    %73 = vector.multi_reduction <maximumf>, %72, %cst_29 [1] : vector<8x8xf32> to vector<8xf32>
    %74 = vector.shape_cast %73 : vector<8xf32> to vector<8x1xf32>
    %75 = vector.broadcast %74 : vector<8x1xf32> to vector<8x8xf32>
    %76 = arith.subf %72, %75 : vector<8x8xf32>
    %77 = math.exp %76 : vector<8x8xf32>
    %cst_30 = arith.constant dense<0.000000e+00> : vector<8xf32>
    %78 = vector.multi_reduction <add>, %77, %cst_30 [1] : vector<8x8xf32> to vector<8xf32>
    %79 = vector.shape_cast %78 : vector<8xf32> to vector<8x1xf32>
    %80 = tpu.reciprocal %79 {approx = true} : vector<8x1xf32> -> vector<8x1xf32>
    %81 = vector.broadcast %80 : vector<8x1xf32> to vector<8x8xf32>
    %82 = arith.mulf %77, %81 : vector<8x8xf32>
    %83 = arith.truncf %82 : vector<8x8xf32> to vector<8x8xbf16>
    %cst_31 = arith.constant dense<0.000000e+00> : vector<8x8xf32>
    %84 = tpu.matmul %83, %69, %cst_31 {dimension_numbers = #tpu.dot_dimension_numbers<[1], [0], [0], [1], [0, 0, 1, 1], [], []>} : vector<8x8xbf16>, vector<8x8xbf16>, vector<8x8xf32> -> vector<8x8xf32>
    %c0_32 = arith.constant 0 : index
    %c16 = arith.constant 16 : index
    %85 = vector.load %arg14[%c0_32, %c16] : memref<8x32xf32, #tpu.memory_space<vmem>>, vector<8x8xf32>
    tpu.vector_store %arg14[%c0_32, %c16], %84 {strides = array<i32>} : memref<8x32xf32, #tpu.memory_space<vmem>>, vector<8x8xf32>,
    %86 = vector.extract_strided_slice %9 {offsets = [0, 24], sizes = [8, 8], strides = [1, 1]} : vector<8x32xf32> to vector<8x8xf32>
    %87 = arith.truncf %86 : vector<8x8xf32> to vector<8x8xbf16>
    %88 = vector.extract_strided_slice %16 {offsets = [0, 24], sizes = [8, 8], strides = [1, 1]} : vector<8x32xf32> to vector<8x8xf32>
    %89 = arith.truncf %88 : vector<8x8xf32> to vector<8x8xbf16>
    %90 = vector.extract_strided_slice %17 {offsets = [0, 24], sizes = [8, 8], strides = [1, 1]} : vector<8x32xf32> to vector<8x8xf32>
    %91 = arith.truncf %90 : vector<8x8xf32> to vector<8x8xbf16>
    %cst_33 = arith.constant dense<0.000000e+00> : vector<8x8xf32>
    %92 = tpu.matmul %87, %89, %cst_33 {dimension_numbers = #tpu.dot_dimension_numbers<[1], [1], [0], [0], [0, 0, 1, 0], [], []>} : vector<8x8xbf16>, vector<8x8xbf16>, vector<8x8xf32> -> vector<8x8xf32>
    %93 = vector.broadcast %19 : vector<1x8xf32> to vector<8x8xf32>
    %94 = arith.addf %92, %93 : vector<8x8xf32>
    %cst_34 = arith.constant dense<0xFF800000> : vector<8xf32>
    %95 = vector.multi_reduction <maximumf>, %94, %cst_34 [1] : vector<8x8xf32> to vector<8xf32>
    %96 = vector.shape_cast %95 : vector<8xf32> to vector<8x1xf32>
    %97 = vector.broadcast %96 : vector<8x1xf32> to vector<8x8xf32>
    %98 = arith.subf %94, %97 : vector<8x8xf32>
    %99 = math.exp %98 : vector<8x8xf32>
    %cst_35 = arith.constant dense<0.000000e+00> : vector<8xf32>
    %100 = vector.multi_reduction <add>, %99, %cst_35 [1] : vector<8x8xf32> to vector<8xf32>
    %101 = vector.shape_cast %100 : vector<8xf32> to vector<8x1xf32>
    %102 = tpu.reciprocal %101 {approx = true} : vector<8x1xf32> -> vector<8x1xf32>
    %103 = vector.broadcast %102 : vector<8x1xf32> to vector<8x8xf32>
    %104 = arith.mulf %99, %103 : vector<8x8xf32>
    %105 = arith.truncf %104 : vector<8x8xf32> to vector<8x8xbf16>
    %cst_36 = arith.constant dense<0.000000e+00> : vector<8x8xf32>
    %106 = tpu.matmul %105, %91, %cst_36 {dimension_numbers = #tpu.dot_dimension_numbers<[1], [0], [0], [1], [0, 0, 1, 1], [], []>} : vector<8x8xbf16>, vector<8x8xbf16>, vector<8x8xf32> -> vector<8x8xf32>
    %c0_37 = arith.constant 0 : index
    %c24 = arith.constant 24 : index
    %107 = vector.load %arg14[%c0_37, %c24] : memref<8x32xf32, #tpu.memory_space<vmem>>, vector<8x8xf32>
    tpu.vector_store %arg14[%c0_37, %c24], %106 {strides = array<i32>} : memref<8x32xf32, #tpu.memory_space<vmem>>, vector<8x8xf32>,
    %c0_38 = arith.constant 0 : index
    %c0_39 = arith.constant 0 : index
    %108 = vector.load %arg14[%c0_38, %c0_39] : memref<8x32xf32, #tpu.memory_space<vmem>>, vector<8x32xf32>
    %109 = arith.truncf %108 : vector<8x32xf32> to vector<8x32xbf16>
    %c0_40 = arith.constant 0 : index
    %c0_41 = arith.constant 0 : index
    %110 = vector.load %arg9[%c0_40, %c0_41] : memref<32x32xbf16, #tpu.memory_space<vmem>>, vector<32x32xbf16>
    %cst_42 = arith.constant dense<0.000000e+00> : vector<8x32xf32>
    %111 = tpu.matmul %109, %110, %cst_42 {dimension_numbers = #tpu.dot_dimension_numbers<[1], [0], [0], [1], [0, 0, 1, 1], [], []>} : vector<8x32xbf16>, vector<32x32xbf16>, vector<8x32xf32> -> vector<8x32xf32>
    %c0_43 = arith.constant 0 : index
    %c0_44 = arith.constant 0 : index
    %112 = vector.load %arg10[%c0_43, %c0_44] : memref<1x32xf32, #tpu.memory_space<vmem>>, vector<1x32xf32>
    %113 = vector.broadcast %112 : vector<1x32xf32> to vector<8x32xf32>
    %114 = arith.addf %111, %113 : vector<8x32xf32>
    %115 = arith.addf %1, %114 : vector<8x32xf32>
    %cst_45 = arith.constant dense<0.000000e+00> : vector<8xf32>
    %116 = vector.multi_reduction <add>, %115, %cst_45 [1] : vector<8x32xf32> to vector<8xf32>
    %117 = vector.shape_cast %116 : vector<8xf32> to vector<8x1xf32>
    %cst_46 = arith.constant 3.200000e+01 : f32
    %118 = vector.broadcast %cst_46 : f32 to vector<8x1xf32>
    %119 = arith.divf %117, %118 : vector<8x1xf32>
    %120 = vector.broadcast %119 : vector<8x1xf32> to vector<8x32xf32>
    %121 = arith.subf %115, %120 : vector<8x32xf32>
    %122 = arith.mulf %121, %121 : vector<8x32xf32>
    %cst_47 = arith.constant dense<0.000000e+00> : vector<8xf32>
    %123 = vector.multi_reduction <add>, %122, %cst_47 [1] : vector<8x32xf32> to vector<8xf32>
    %124 = vector.shape_cast %123 : vector<8xf32> to vector<8x1xf32>
    %cst_48 = arith.constant 3.200000e+01 : f32
    %125 = vector.broadcast %cst_48 : f32 to vector<8x1xf32>
    %126 = arith.divf %124, %125 : vector<8x1xf32>
    %127 = vector.broadcast %119 : vector<8x1xf32> to vector<8x32xf32>
    %128 = arith.subf %115, %127 : vector<8x32xf32>
    %cst_49 = arith.constant 9.99999974E-6 : f32
    %129 = vector.broadcast %cst_49 : f32 to vector<8x1xf32>
    %130 = arith.addf %126, %129 : vector<8x1xf32>
    %131 = math.rsqrt %130 : vector<8x1xf32>
    %132 = vector.broadcast %131 : vector<8x1xf32> to vector<8x32xf32>
    %133 = arith.mulf %128, %132 : vector<8x32xf32>
    %c0_50 = arith.constant 0 : index
    %c0_51 = arith.constant 0 : index
    %134 = vector.load %arg11[%c0_50, %c0_51] : memref<1x32xf32, #tpu.memory_space<vmem>>, vector<1x32xf32>
    %135 = vector.broadcast %134 : vector<1x32xf32> to vector<8x32xf32>
    %136 = arith.mulf %133, %135 : vector<8x32xf32>
    %c0_52 = arith.constant 0 : index
    %c0_53 = arith.constant 0 : index
    %137 = vector.load %arg12[%c0_52, %c0_53] : memref<1x32xf32, #tpu.memory_space<vmem>>, vector<1x32xf32>
    %138 = vector.broadcast %137 : vector<1x32xf32> to vector<8x32xf32>
    %139 = arith.addf %136, %138 : vector<8x32xf32>
    %c0_54 = arith.constant 0 : index
    %c0_55 = arith.constant 0 : index
    %c0_56 = arith.constant 0 : index
    %140 = vector.load %arg13[%c0_54, %c0_55, %c0_56] : memref<1x8x32xf32, #tpu.memory_space<vmem>>, vector<1x8x32xf32>
    %141 = vector.shape_cast %140 : vector<1x8x32xf32> to vector<8x32xf32>
    %142 = vector.shape_cast %139 : vector<8x32xf32> to vector<1x8x32xf32>
    tpu.vector_store %arg13[%c0_54, %c0_55, %c0_56], %142 {strides = array<i32>} : memref<1x8x32xf32, #tpu.memory_space<vmem>>, vector<1x8x32xf32>,
    return
  }
  func.func @transform_0(%arg0: i32, %arg1: i32) -> (i32, i32, i32) {
    %c0_i32 = arith.constant 0 : i32
    %c0_i32_0 = arith.constant 0 : i32
    return %arg0, %arg1, %c0_i32 : i32, i32, i32
  }
  func.func @transform_1(%arg0: i32, %arg1: i32) -> (i32, i32, i32) {
    %c0_i32 = arith.constant 0 : i32
    %c0_i32_0 = arith.constant 0 : i32
    %c0_i32_1 = arith.constant 0 : i32
    return %arg0, %c0_i32, %c0_i32_0 : i32, i32, i32
  }
  func.func @transform_2(%arg0: i32, %arg1: i32) -> (i32, i32, i32) {
    %c0_i32 = arith.constant 0 : i32
    %c0_i32_0 = arith.constant 0 : i32
    %c0_i32_1 = arith.constant 0 : i32
    return %arg0, %c0_i32, %c0_i32_0 : i32, i32, i32
  }
  func.func @transform_3(%arg0: i32, %arg1: i32) -> (i32, i32) {
    %c0_i32 = arith.constant 0 : i32
    %c0_i32_0 = arith.constant 0 : i32
    %c0_i32_1 = arith.constant 0 : i32
    return %c0_i32, %c0_i32_0 : i32, i32
  }
  func.func @transform_4(%arg0: i32, %arg1: i32) -> (i32, i32) {
    %c0_i32 = arith.constant 0 : i32
    %c0_i32_0 = arith.constant 0 : i32
    %c0_i32_1 = arith.constant 0 : i32
    return %c0_i32, %c0_i32_0 : i32, i32
  }
  func.func @transform_5(%arg0: i32, %arg1: i32) -> (i32, i32) {
    %c0_i32 = arith.constant 0 : i32
    %c0_i32_0 = arith.constant 0 : i32
    %c0_i32_1 = arith.constant 0 : i32
    return %c0_i32, %c0_i32_0 : i32, i32
  }
  func.func @transform_6(%arg0: i32, %arg1: i32) -> (i32, i32) {
    %c0_i32 = arith.constant 0 : i32
    %c0_i32_0 = arith.constant 0 : i32
    %c0_i32_1 = arith.constant 0 : i32
    return %c0_i32, %c0_i32_0 : i32, i32
  }
  func.func @transform_7(%arg0: i32, %arg1: i32) -> (i32, i32) {
    %c0_i32 = arith.constant 0 : i32
    %c0_i32_0 = arith.constant 0 : i32
    %c0_i32_1 = arith.constant 0 : i32
    return %c0_i32, %c0_i32_0 : i32, i32
  }
  func.func @transform_8(%arg0: i32, %arg1: i32) -> (i32, i32) {
    %c0_i32 = arith.constant 0 : i32
    %c0_i32_0 = arith.constant 0 : i32
    %c0_i32_1 = arith.constant 0 : i32
    return %c0_i32, %c0_i32_0 : i32, i32
  }
  func.func @transform_9(%arg0: i32, %arg1: i32) -> (i32, i32) {
    %c0_i32 = arith.constant 0 : i32
    %c0_i32_0 = arith.constant 0 : i32
    %c0_i32_1 = arith.constant 0 : i32
    return %c0_i32, %c0_i32_0 : i32, i32
  }
  func.func @transform_10(%arg0: i32, %arg1: i32) -> (i32, i32) {
    %c0_i32 = arith.constant 0 : i32
    %c0_i32_0 = arith.constant 0 : i32
    %c0_i32_1 = arith.constant 0 : i32
    return %c0_i32, %c0_i32_0 : i32, i32
  }
  func.func @transform_11(%arg0: i32, %arg1: i32) -> (i32, i32, i32) {
    %c0_i32 = arith.constant 0 : i32
    %c0_i32_0 = arith.constant 0 : i32
    return %arg0, %arg1, %c0_i32 : i32, i32, i32
  }
}

module attributes {stable_mosaic.version = 11 : i64} {
  func.func @_linear_kernel(%arg0: i32, %arg1: i32, %arg2: memref<16x32xf32, #tpu.memory_space<vmem>>, %arg3: memref<32x128xbf16, #tpu.memory_space<vmem>>, %arg4: memref<1x128xf32, #tpu.memory_space<vmem>>, %arg5: memref<16x128xf32, #tpu.memory_space<vmem>>) attributes {dimension_semantics = [#tpu.dimension_semantics<parallel>, #tpu.dimension_semantics<parallel>], iteration_bounds = array<i64: 1, 1>, scalar_prefetch = 0 : i64, scratch_operands = 0 : i64, tpu.core_type = #tpu.core_type<tc>, window_params = [{transform_indices = @transform_0, window_bounds = array<i64: 16, 32>}, {transform_indices = @transform_1, window_bounds = array<i64: 32, 128>}, {transform_indices = @transform_2, window_bounds = array<i64: 1, 128>}, {transform_indices = @transform_3, window_bounds = array<i64: 16, 128>}]} {
    %c0 = arith.constant 0 : index
    %c0_0 = arith.constant 0 : index
    %0 = vector.load %arg2[%c0, %c0_0] : memref<16x32xf32, #tpu.memory_space<vmem>>, vector<16x32xf32>
    %1 = arith.truncf %0 : vector<16x32xf32> to vector<16x32xbf16>
    %c0_1 = arith.constant 0 : index
    %c0_2 = arith.constant 0 : index
    %2 = vector.load %arg3[%c0_1, %c0_2] : memref<32x128xbf16, #tpu.memory_space<vmem>>, vector<32x128xbf16>
    %cst = arith.constant dense<0.000000e+00> : vector<16x128xf32>
    %3 = tpu.matmul %1, %2, %cst {dimension_numbers = #tpu.dot_dimension_numbers<[1], [0], [0], [1], [0, 0, 1, 1], [], []>} : vector<16x32xbf16>, vector<32x128xbf16>, vector<16x128xf32> -> vector<16x128xf32>
    %c0_3 = arith.constant 0 : index
    %c0_4 = arith.constant 0 : index
    %4 = vector.load %arg4[%c0_3, %c0_4] : memref<1x128xf32, #tpu.memory_space<vmem>>, vector<1x128xf32>
    %5 = vector.broadcast %4 : vector<1x128xf32> to vector<16x128xf32>
    %6 = arith.addf %3, %5 : vector<16x128xf32>
    %c0_5 = arith.constant 0 : index
    %c0_6 = arith.constant 0 : index
    %7 = vector.load %arg5[%c0_5, %c0_6] : memref<16x128xf32, #tpu.memory_space<vmem>>, vector<16x128xf32>
    tpu.vector_store %arg5[%c0_5, %c0_6], %6 {strides = array<i32>} : memref<16x128xf32, #tpu.memory_space<vmem>>, vector<16x128xf32>,
    return
  }
  func.func @transform_0(%arg0: i32, %arg1: i32) -> (i32, i32) {
    %c0_i32 = arith.constant 0 : i32
    %c0_i32_0 = arith.constant 0 : i32
    return %arg0, %c0_i32 : i32, i32
  }
  func.func @transform_1(%arg0: i32, %arg1: i32) -> (i32, i32) {
    %c0_i32 = arith.constant 0 : i32
    %c0_i32_0 = arith.constant 0 : i32
    return %c0_i32, %arg1 : i32, i32
  }
  func.func @transform_2(%arg0: i32, %arg1: i32) -> (i32, i32) {
    %c0_i32 = arith.constant 0 : i32
    %c0_i32_0 = arith.constant 0 : i32
    return %c0_i32, %arg1 : i32, i32
  }
  func.func @transform_3(%arg0: i32, %arg1: i32) -> (i32, i32) {
    %c0_i32 = arith.constant 0 : i32
    return %arg0, %arg1 : i32, i32
  }
}

</mosaic_0001>

<llo_original>
// kernel: transformer_forward.17
$region0: #{transformer_forward.17}
  #allocation0 [shape = 'u32[]', space=smem, size = 0x4, offset = 0x4, fixed_abs, tag = 'smem constant byte address 0x4 - core index']
  #allocation1 [shape = 'u32[144,128]{1,0:T(1,128)}', space=vmem, size = 0x12000, scoped, tag = 'internal scratch']
  %s0 = inlined_call_operand.vmem [shape: f32[16,32], index: 0, kind: input, shape index: {}]
  %s1 = inlined_call_operand.vmem [shape: f32[1,32], index: 1, kind: input, shape index: {}]
  %s2 = inlined_call_operand.vmem [shape: f32[1,32], index: 2, kind: input, shape index: {}]
  %s3 = inlined_call_operand.vmem [shape: f32[16,32], index: 3, kind: output, shape index: {}]
  %s4 = sld [smem:[#allocation0]]
  $region22: #{transformer_forward.17} parent=0
    _
  %s6 = ssub.s32 1, %s4
  %s7 = scalar_select 0, %s6, %s4
  // Predicated region
  $region2: #{transformer_forward.17} parent=0 // pred_check
    _
  $region3: #{transformer_forward.17} parent=0 // pred_check_branch
    %9 = sbr.rel (0) target = $region5
  $region4: #{transformer_forward.17} parent=0 // pred_region
    _
  $region5: #{transformer_forward.17} parent=0 // pred_fallthru
    _
  // Predicated region
  $region6: #{transformer_forward.17} parent=0 // pred_check
    _
  $region7: #{transformer_forward.17} parent=0 // pred_check_branch
    %11 = sbr.rel (0) target = $region9
  $region8: #{transformer_forward.17} parent=0 // pred_region
    _
  $region9: #{transformer_forward.17} parent=0 // pred_fallthru
    _
  // Predicated region
  $region10: #{transformer_forward.17} parent=0 // pred_check
    _
  $region11: #{transformer_forward.17} parent=0 // pred_check_branch
    %13 = sbr.rel (0) target = $region13
  $region12: #{transformer_forward.17} parent=0 // pred_region
    _
  $region13: #{transformer_forward.17} parent=0 // pred_fallthru
    _
  %v14 = vld [vmem:[%s0] sm:$0xff]
  %v15 = vld [vmem:[%s0 + $0x8] sm:$0xff]
  %vm16 = vcmask 261120
  %v17 = vsel %vm16, %v14, 0.0
  %18 = vadd.xlane.f32.xlu0 %v17
  %v19 = vpop.xlane.xlu0 %18
  %v20 = vsel %vm16, %v15, 0.0
  %21 = vadd.xlane.f32.xlu0 %v20
  %v22 = vpop.xlane.xlu0 %21
  %v23 = vrcp.pop 32.0
  %v24 = vmul.f32 %v19, %v23
  %v25 = vmul.f32 %v22, %v23
  %v26 = vsub.f32 %v14, %v24
  %v27 = vsub.f32 %v15, %v25
  %v28 = vmul.f32 %v26, %v26
  %v29 = vmul.f32 %v27, %v27
  %v30 = vsel %vm16, %v28, 0.0
  %31 = vadd.xlane.f32.xlu0 %v30
  %v32 = vpop.xlane.xlu0 %31
  %v33 = vsel %vm16, %v29, 0.0
  %34 = vadd.xlane.f32.xlu0 %v33
  %v35 = vpop.xlane.xlu0 %34
  %v36 = vmul.f32 %v32, %v23
  %v37 = vmul.f32 %v35, %v23
  %v38 = vadd.f32 %v36, 1e-05
  %v39 = vadd.f32 %v37, 1e-05
  %v40 = vrsqrt.pop %v38
  %v41 = vrsqrt.pop %v39
  %v42 = vmul.f32 %v26, %v40
  %v43 = vmul.f32 %v27, %v41
  %v44 = vld [vmem:[%s1] sm:$0x1]
  %v46 = vlaneseq
  %v47 = vshrl.u32 %v46, 7
  %v48 = vsub.s32 0, %v47
  %v49 = vrot.slane %v44, %v48
  %v51 = vmul.f32 %v42, %v49
  %v52 = vmul.f32 %v43, %v49
  %v53 = vld [vmem:[%s2] sm:$0x1]
  %v55 = vlaneseq
  %v56 = vshrl.u32 %v55, 7
  %v57 = vsub.s32 0, %v56
  %v58 = vrot.slane %v53, %v57
  %v60 = vadd.f32 %v51, %v58
  %v61 = vadd.f32 %v52, %v58
  %62 = vst.msk [vmem:[%s3] sm:$0xff] %vm16, %v60
  %63 = vst.msk [vmem:[%s3 + $0x8] sm:$0xff] %vm16, %v61
  // Predicated region
  $region14: #{transformer_forward.17} parent=0 // pred_check
    _
  $region15: #{transformer_forward.17} parent=0 // pred_check_branch
    %65 = sbr.rel (0) target = $region17
  $region16: #{transformer_forward.17} parent=0 // pred_region
    _
  $region17: #{transformer_forward.17} parent=0 // pred_fallthru
    _
  // Predicated region
  $region18: #{transformer_forward.17} parent=0 // pred_check
    _
  $region19: #{transformer_forward.17} parent=0 // pred_check_branch
    %67 = sbr.rel (0) target = $region21
  $region20: #{transformer_forward.17} parent=0 // pred_region
    _
  $region21: #{transformer_forward.17} parent=0 // pred_fallthru
    _

// kernel: transformer_forward.14
$region0: #{transformer_forward.14}
  #allocation0 [shape = 'u32[]', space=smem, size = 0x4, offset = 0x4, fixed_abs, tag = 'smem constant byte address 0x4 - core index']
  #allocation1 [shape = 'u32[144,128]{1,0:T(1,128)}', space=vmem, size = 0x12000, scoped, tag = 'internal scratch']
  %s0 = inlined_call_operand.vmem [shape: f32[16,32], index: 0, kind: input, shape index: {}]
  %s1 = inlined_call_operand.vmem [shape: bf16[32,64], index: 1, kind: input, shape index: {}]
  %s2 = inlined_call_operand.vmem [shape: f32[1,64], index: 2, kind: input, shape index: {}]
  %s3 = inlined_call_operand.vmem [shape: bf16[64,32], index: 3, kind: input, shape index: {}]
  %s4 = inlined_call_operand.vmem [shape: f32[1,32], index: 4, kind: input, shape index: {}]
  %s5 = inlined_call_operand.vmem [shape: f32[1,32], index: 5, kind: input, shape index: {}]
  %s6 = inlined_call_operand.vmem [shape: f32[1,32], index: 6, kind: input, shape index: {}]
  %s7 = inlined_call_operand.vmem [shape: f32[16,32], index: 7, kind: output, shape index: {}]
  %s8 = sld [smem:[#allocation0]]
  $region38: #{transformer_forward.14} parent=0
    _
  %s10 = ssub.s32 1, %s8
  %s11 = scalar_select 0, %s10, %s8
  // Predicated region
  $region2: #{transformer_forward.14} parent=0 // pred_check
    _
  $region3: #{transformer_forward.14} parent=0 // pred_check_branch
    %13 = sbr.rel (0) target = $region5
  $region4: #{transformer_forward.14} parent=0 // pred_region
    _
  $region5: #{transformer_forward.14} parent=0 // pred_fallthru
    _
  // Predicated region
  $region6: #{transformer_forward.14} parent=0 // pred_check
    _
  $region7: #{transformer_forward.14} parent=0 // pred_check_branch
    %15 = sbr.rel (0) target = $region9
  $region8: #{transformer_forward.14} parent=0 // pred_region
    _
  $region9: #{transformer_forward.14} parent=0 // pred_fallthru
    _
  // Predicated region
  $region10: #{transformer_forward.14} parent=0 // pred_check
    _
  $region11: #{transformer_forward.14} parent=0 // pred_check_branch
    %17 = sbr.rel (0) target = $region13
  $region12: #{transformer_forward.14} parent=0 // pred_region
    _
  $region13: #{transformer_forward.14} parent=0 // pred_fallthru
    _
  // Predicated region
  $region14: #{transformer_forward.14} parent=0 // pred_check
    _
  $region15: #{transformer_forward.14} parent=0 // pred_check_branch
    %19 = sbr.rel (0) target = $region17
  $region16: #{transformer_forward.14} parent=0 // pred_region
    _
  $region17: #{transformer_forward.14} parent=0 // pred_fallthru
    _
  // Predicated region
  $region18: #{transformer_forward.14} parent=0 // pred_check
    _
  $region19: #{transformer_forward.14} parent=0 // pred_check_branch
    %21 = sbr.rel (0) target = $region21
  $region20: #{transformer_forward.14} parent=0 // pred_region
    _
  $region21: #{transformer_forward.14} parent=0 // pred_fallthru
    _
  // Predicated region
  $region22: #{transformer_forward.14} parent=0 // pred_check
    _
  $region23: #{transformer_forward.14} parent=0 // pred_check_branch
    %23 = sbr.rel (0) target = $region25
  $region24: #{transformer_forward.14} parent=0 // pred_region
    _
  $region25: #{transformer_forward.14} parent=0 // pred_fallthru
    _
  // Predicated region
  $region26: #{transformer_forward.14} parent=0 // pred_check
    _
  $region27: #{transformer_forward.14} parent=0 // pred_check_branch
    %25 = sbr.rel (0) target = $region29
  $region28: #{transformer_forward.14} parent=0 // pred_region
    _
  $region29: #{transformer_forward.14} parent=0 // pred_fallthru
    _
  %v27 = vld [vmem:[%s0] sm:$0xff]
  %v28 = vld [vmem:[%s0 + $0x8] sm:$0xff]
  %v29 = vpack.c.bf16 %v28, %v27
  %v30 = vld [vmem:[%s1] sm:$0xf]
  %v31 = vld [vmem:[%s1 + $0x4] sm:$0xf]
  %v32 = vld [vmem:[%s1 + $0x8] sm:$0xf]
  %v33 = vld [vmem:[%s1 + $0xc] sm:$0xf]
  %v34 = vld [vmem:[%s2] sm:$0x1]
  %v36 = vlaneseq
  %v37 = vshrl.u32 %v36, 7
  %v38 = vsub.s32 0, %v37
  %v39 = vrot.slane %v34, %v38
  %v45 = vunpack.c.l.b16 %v30
  %v46 = vunpack.c.l.b16 %v31
  %v47 = vunpack.c.l.b16 %v32
  %v48 = vunpack.c.l.b16 %v33
  %v49 = vpack.c.b16 %v46, %v45
  %v50 = vpack.c.b16 %v48, %v47
  %vm53 = vcmask 261120
  %v55 = vsel %vm53, %v29, 0
  %57 = vmatprep.subr.bf16.mxu0 0
  %58 = vmatpush1.bf16.msra.mxu0 %v49
  %59 = vmatprep.subr.bf16.mxu0 0
  %60 = vmatpush1.bf16.msra.mxu0 %v50
  %61 = vmatprep.subr.bf16.mxu0 0
  %62 = vmatpush1.bf16.msra.mxu0 0
  %63 = vmatprep.subr.bf16.mxu0 0
  %64 = vmatpush1.bf16.msra.mxu0 0
  %65 = vmatprep.subr.bf16.mxu0 0
  %66 = vmatpush1.bf16.msra.mxu0 0
  %67 = vmatprep.subr.bf16.mxu0 0
  %68 = vmatpush1.bf16.msra.mxu0 0
  %69 = vmatprep.subr.bf16.mxu0 0
  %70 = vmatpush1.bf16.msra.mxu0 0
  %71 = vmatprep.subr.bf16.mxu0 0
  %72 = vmatpush1.bf16.msra.mxu0 0
  %73 = vmatprep.subr.bf16.mxu0 0
  %74 = vmatpush1.bf16.msra.mxu0 0
  %75 = vmatprep.subr.bf16.mxu0 0
  %76 = vmatpush1.bf16.msra.mxu0 0
  %77 = vmatprep.subr.bf16.mxu0 0
  %78 = vmatpush1.bf16.msra.mxu0 0
  %79 = vmatprep.subr.bf16.mxu0 0
  %80 = vmatpush1.bf16.msra.mxu0 0
  %81 = vmatprep.subr.bf16.mxu0 0
  %82 = vmatpush1.bf16.msra.mxu0 0
  %83 = vmatprep.subr.bf16.mxu0 0
  %84 = vmatpush1.bf16.msra.mxu0 0
  %85 = vmatprep.subr.bf16.mxu0 0
  %86 = vmatpush1.bf16.msra.mxu0 0
  %87 = vmatprep.subr.bf16.mxu0 0
  %88 = vmatpush1.bf16.msra.mxu0 0
  %89 = vmatprep.mubr.bf16.mxu0 0
  %90 = vmatmul.mubr.bf16.gmra.mrb[0].mxu0 %v55
  %v91 = vpop.f32.mrb[0].mxu0
  %v92 = vadd.f32 %v39, %v91
  %v93 = vpop.f32.mrb[0].mxu0
  %v94 = vpop.f32.mrb[0].mxu0
  %v95 = vadd.f32 %v39, %v94
  %v96 = vpop.f32.mrb[0].mxu0
  %97 = vdwg.mxu0
  %v98 = vmax.f32 %v92, 0.0
  %v99 = vmax.f32 %v95, 0.0
  %v100 = vpack.c.bf16 %v99, %v98
  %v101 = vld [vmem:[%s3] sm:$0xf]
  %v102 = vld [vmem:[%s3 + $0x4] sm:$0xf]
  %v103 = vld [vmem:[%s3 + $0x8] sm:$0xf]
  %v104 = vld [vmem:[%s3 + $0xc] sm:$0xf]
  %v105 = vld [vmem:[%s3 + $0x10] sm:$0xf]
  %v106 = vld [vmem:[%s3 + $0x14] sm:$0xf]
  %v107 = vld [vmem:[%s3 + $0x18] sm:$0xf]
  %v108 = vld [vmem:[%s3 + $0x1c] sm:$0xf]
  %v109 = vld [vmem:[%s4] sm:$0x1]
  %v111 = vlaneseq
  %v112 = vshrl.u32 %v111, 7
  %v113 = vsub.s32 0, %v112
  %v114 = vrot.slane %v109, %v113
  %v124 = vunpack.c.l.b16 %v101
  %v125 = vunpack.c.l.b16 %v102
  %v126 = vunpack.c.l.b16 %v103
  %v127 = vunpack.c.l.b16 %v104
  %v128 = vunpack.c.l.b16 %v105
  %v129 = vunpack.c.l.b16 %v106
  %v130 = vunpack.c.l.b16 %v107
  %v131 = vunpack.c.l.b16 %v108
  %v132 = vpack.c.b16 %v125, %v124
  %v133 = vpack.c.b16 %v127, %v126
  %v134 = vpack.c.b16 %v129, %v128
  %v135 = vpack.c.b16 %v131, %v130
  %vm140 = vcmask 523264
  %v142 = vsel %vm140, %v100, 0
  %144 = vmatprep.subr.bf16.mxu0 0
  %145 = vmatpush1.bf16.msra.mxu0 %v132
  %146 = vmatprep.subr.bf16.mxu0 0
  %147 = vmatpush1.bf16.msra.mxu0 %v133
  %148 = vmatprep.subr.bf16.mxu0 0
  %149 = vmatpush1.bf16.msra.mxu0 %v134
  %150 = vmatprep.subr.bf16.mxu0 0
  %151 = vmatpush1.bf16.msra.mxu0 %v135
  %152 = vmatprep.subr.bf16.mxu0 0
  %153 = vmatpush1.bf16.msra.mxu0 0
  %154 = vmatprep.subr.bf16.mxu0 0
  %155 = vmatpush1.bf16.msra.mxu0 0
  %156 = vmatprep.subr.bf16.mxu0 0
  %157 = vmatpush1.bf16.msra.mxu0 0
  %158 = vmatprep.subr.bf16.mxu0 0
  %159 = vmatpush1.bf16.msra.mxu0 0
  %160 = vmatprep.subr.bf16.mxu0 0
  %161 = vmatpush1.bf16.msra.mxu0 0
  %162 = vmatprep.subr.bf16.mxu0 0
  %163 = vmatpush1.bf16.msra.mxu0 0
  %164 = vmatprep.subr.bf16.mxu0 0
  %165 = vmatpush1.bf16.msra.mxu0 0
  %166 = vmatprep.subr.bf16.mxu0 0
  %167 = vmatpush1.bf16.msra.mxu0 0
  %168 = vmatprep.subr.bf16.mxu0 0
  %169 = vmatpush1.bf16.msra.mxu0 0
  %170 = vmatprep.subr.bf16.mxu0 0
  %171 = vmatpush1.bf16.msra.mxu0 0
  %172 = vmatprep.subr.bf16.mxu0 0
  %173 = vmatpush1.bf16.msra.mxu0 0
  %174 = vmatprep.subr.bf16.mxu0 0
  %175 = vmatpush1.bf16.msra.mxu0 0
  %176 = vmatprep.mubr.bf16.mxu0 0
  %177 = vmatmul.mubr.bf16.gmra.mrb[0].mxu0 %v142
  %v178 = vpop.f32.mrb[0].mxu0
  %v179 = vadd.f32 %v114, %v178
  %v180 = vpop.f32.mrb[0].mxu0
  %v181 = vpop.f32.mrb[0].mxu0
  %v182 = vadd.f32 %v114, %v181
  %v183 = vpop.f32.mrb[0].mxu0
  %184 = vdwg.mxu0
  %v185 = vadd.f32 %v27, %v179
  %v186 = vadd.f32 %v28, %v182
  %v187 = vsel %vm53, %v185, 0.0
  %188 = vadd.xlane.f32.xlu0 %v187
  %v189 = vpop.xlane.xlu0 %188
  %v190 = vsel %vm53, %v186, 0.0
  %191 = vadd.xlane.f32.xlu0 %v190
  %v192 = vpop.xlane.xlu0 %191
  %v193 = vrcp.pop 32.0
  %v194 = vmul.f32 %v189, %v193
  %v195 = vmul.f32 %v192, %v193
  %v196 = vsub.f32 %v185, %v194
  %v197 = vsub.f32 %v186, %v195
  %v198 = vmul.f32 %v196, %v196
  %v199 = vmul.f32 %v197, %v197
  %v200 = vsel %vm53, %v198, 0.0
  %201 = vadd.xlane.f32.xlu0 %v200
  %v202 = vpop.xlane.xlu0 %201
  %v203 = vsel %vm53, %v199, 0.0
  %204 = vadd.xlane.f32.xlu0 %v203
  %v205 = vpop.xlane.xlu0 %204
  %v206 = vmul.f32 %v202, %v193
  %v207 = vmul.f32 %v205, %v193
  %v208 = vadd.f32 %v206, 1e-05
  %v209 = vadd.f32 %v207, 1e-05
  %v210 = vrsqrt.pop %v208
  %v211 = vrsqrt.pop %v209
  %v212 = vmul.f32 %v196, %v210
  %v213 = vmul.f32 %v197, %v211
  %v214 = vld [vmem:[%s5] sm:$0x1]
  %v216 = vlaneseq
  %v217 = vshrl.u32 %v216, 7
  %v218 = vsub.s32 0, %v217
  %v219 = vrot.slane %v214, %v218
  %v221 = vmul.f32 %v212, %v219
  %v222 = vmul.f32 %v213, %v219
  %v223 = vld [vmem:[%s6] sm:$0x1]
  %v225 = vlaneseq
  %v226 = vshrl.u32 %v225, 7
  %v227 = vsub.s32 0, %v226
  %v228 = vrot.slane %v223, %v227
  %v230 = vadd.f32 %v221, %v228
  %v231 = vadd.f32 %v222, %v228
  %232 = vst.msk [vmem:[%s7] sm:$0xff] %vm53, %v230
  %233 = vst.msk [vmem:[%s7 + $0x8] sm:$0xff] %vm53, %v231
  // Predicated region
  $region30: #{transformer_forward.14} parent=0 // pred_check
    _
  $region31: #{transformer_forward.14} parent=0 // pred_check_branch
    %235 = sbr.rel (0) target = $region33
  $region32: #{transformer_forward.14} parent=0 // pred_region
    _
  $region33: #{transformer_forward.14} parent=0 // pred_fallthru
    _
  // Predicated region
  $region34: #{transformer_forward.14} parent=0 // pred_check
    _
  $region35: #{transformer_forward.14} parent=0 // pred_check_branch
    %237 = sbr.rel (0) target = $region37
  $region36: #{transformer_forward.14} parent=0 // pred_region
    _
  $region37: #{transformer_forward.14} parent=0 // pred_fallthru
    _

// kernel: transformer_forward.13
$region0: #{transformer_forward.13}
  #allocation0 [shape = 'u32[]', space=smem, size = 0x4, offset = 0x4, fixed_abs, tag = 'smem constant byte address 0x4 - core index']
  #allocation1 [shape = 'u32[144,128]{1,0:T(1,128)}', space=vmem, size = 0x12000, scoped, tag = 'internal scratch']
  #allocation2 [shape = 'f32[8,32]{1,0:T(8,128)}', space=vmem, size = 0x1000, scoped, tag = 'scratch operand']
  %s0 = inlined_call_operand.vmem [shape: f32[2,8,32], index: 0, kind: input, shape index: {}, may-alias: {0,1}]
  %s1 = inlined_call_operand.vmem [shape: f32[2,8,32], index: 1, kind: input, shape index: {}, may-alias: {0,1}]
  %s2 = inlined_call_operand.vmem [shape: f32[8,8], index: 2, kind: input, shape index: {}]
  %s3 = inlined_call_operand.vmem [shape: f32[2,1,8], index: 3, kind: input, shape index: {}]
  %s4 = inlined_call_operand.vmem [shape: bf16[32,32], index: 4, kind: input, shape index: {}]
  %s5 = inlined_call_operand.vmem [shape: f32[1,32], index: 5, kind: input, shape index: {}]
  %s6 = inlined_call_operand.vmem [shape: bf16[32,64], index: 6, kind: input, shape index: {}]
  %s7 = inlined_call_operand.vmem [shape: f32[1,64], index: 7, kind: input, shape index: {}]
  %s8 = inlined_call_operand.vmem [shape: bf16[32,32], index: 8, kind: input, shape index: {}]
  %s9 = inlined_call_operand.vmem [shape: f32[1,32], index: 9, kind: input, shape index: {}]
  %s10 = inlined_call_operand.vmem [shape: f32[1,32], index: 10, kind: input, shape index: {}]
  %s11 = inlined_call_operand.vmem [shape: f32[1,32], index: 11, kind: input, shape index: {}]
  %s12 = inlined_call_operand.vmem [shape: f32[2,8,32], index: 12, kind: output, shape index: {}]
  %s13 = sld [smem:[#allocation0]]
  $region81: #{transformer_forward.13} parent=0
    _
  %s15 = ssub.s32 1, %s13
  %s16 = scalar_select 0, %s15, %s13
  loop: start=0, step=1, limit=4
  $region2: #{transformer_forward.13} parent=0 // loop_pre_header
    _
  $region3: #{transformer_forward.13} parent=0 // loop_header
    %s18 = sphi 0, %s22
    %p19 = scmp.ge.s32.totalorder %s18, 4
    %s25 = sphi 0, %s37
    %s26 = sphi 0, %s33
    %s27 = sphi 0, %s25
    %s28 = sphi 0, %s26
    %s29 = sphi 0, %s27
    %s30 = sphi 0, %s28
    %s42 = sphi 0, %s44
    %s45 = sphi 0, %s42
    %s46 = sphi 0, %s45
    %s62 = sphi 0, %s46
    %s68 = sphi 0, %s70
    %s71 = sphi 0, %s68
    %s72 = sphi 0, %s71
    %s88 = sphi 0, %s72
    %s94 = sphi 0, %s96
    %s97 = sphi 0, %s94
    %s98 = sphi 0, %s97
    %s114 = sphi 0, %s98
    %s120 = sphi 0, %s122
    %s123 = sphi 0, %s120
    %s124 = sphi 0, %s123
    %s140 = sphi 0, %s124
    %s144 = sphi 0, %s144
    %s146 = sphi 0, %s144
    %s147 = sphi 0, %s146
    %s161 = sphi 0, %s147
    %s165 = sphi 0, %s165
    %s167 = sphi 0, %s165
    %s168 = sphi 0, %s167
    %s182 = sphi 0, %s168
    %s186 = sphi 0, %s186
    %s188 = sphi 0, %s186
    %s189 = sphi 0, %s188
    %s203 = sphi 0, %s189
    %s207 = sphi 0, %s207
    %s209 = sphi 0, %s207
    %s210 = sphi 0, %s209
    %s224 = sphi 0, %s210
    %s228 = sphi 0, %s228
    %s230 = sphi 0, %s228
    %s231 = sphi 0, %s230
    %s245 = sphi 0, %s231
    %s249 = sphi 0, %s249
    %s251 = sphi 0, %s249
    %s252 = sphi 0, %s251
    %s266 = sphi 0, %s252
    %s270 = sphi 0, %s270
    %s272 = sphi 0, %s270
    %s273 = sphi 0, %s272
    %s287 = sphi 0, %s273
    %s291 = sphi 0, %s291
    %s293 = sphi 0, %s291
    %s294 = sphi 0, %s293
    %s308 = sphi 0, %s294
    %s316 = sphi 0, %s318
    %s319 = sphi 0, %s316
    %s320 = sphi 0, %s319
    %s336 = sphi 0, %s320
  $region4: #{transformer_forward.13} parent=0 // loop_header_branch
    %21 = sbr.rel (%p19) target = $region8
  $region5: #{transformer_forward.13} parent=0 // loop_body
    %s23 = ssub.s32 %s18, 1
    %s24 = ssub.s32 %s18, 2
    %s31 = sadd.s32 1, %s26
    %p32 = scmp.ge.s32.totalorder %s31, 1
    %s33 = scalar_select %p32, 0, %s31
    %s34 = sadd.s32 1, %s25
    %s35 = scalar_select %p32, %s34, %s25
    %p36 = scmp.ge.s32.totalorder %s35, 2
    %s37 = scalar_select %p36, 0, %s35
    %s38 = ssub.s32 %s25, %s37
    %s39 = ssub.s32 %s26, %s33
    %s40 = sor.u32 %s38, %s39
    %p41 = scmp.eq.s32.totalorder %s40, 0
    %s43 = sadd.s32 %s42, 1
    %s44 = scalar_select %p41, %s42, %s43
    %p47 = pneg %p41
    %p48 = scmp.eq.s32.totalorder %s18, 1
    %p49 = por %p47, %p48
    %p50 = scmp.ne.s32.totalorder %s42, %s45
    %p51 = scmp.eq.s32.totalorder %s18, 0
    %p52 = por %p50, %p51
    %p53 = scmp.ne.s32.totalorder %s42, %s45
    %p54 = scmp.eq.s32.totalorder %s23, 1
    %p55 = por %p53, %p54
    %p56 = scmp.ne.s32.totalorder %s45, %s46
    %p57 = scmp.eq.s32.totalorder %s23, 0
    %p58 = por %p56, %p57
    %p59 = scmp.ne.s32.totalorder %s45, %s46
    %p60 = scmp.eq.s32.totalorder %s24, 1
    %p61 = por %p59, %p60
    %p63 = scmp.ne.s32.totalorder %s46, %s62
    %p64 = scmp.eq.s32.totalorder %s24, 0
    %p65 = por %p63, %p64
    %s66 = ssub.s32 %s25, %s37
    %p67 = scmp.eq.s32.totalorder %s66, 0
    %s69 = sadd.s32 %s68, 1
    %s70 = scalar_select %p67, %s68, %s69
    %p73 = pneg %p67
    %p74 = scmp.eq.s32.totalorder %s18, 1
    %p75 = por %p73, %p74
    %p76 = scmp.ne.s32.totalorder %s68, %s71
    %p77 = scmp.eq.s32.totalorder %s18, 0
    %p78 = por %p76, %p77
    %p79 = scmp.ne.s32.totalorder %s68, %s71
    %p80 = scmp.eq.s32.totalorder %s23, 1
    %p81 = por %p79, %p80
    %p82 = scmp.ne.s32.totalorder %s71, %s72
    %p83 = scmp.eq.s32.totalorder %s23, 0
    %p84 = por %p82, %p83
    %p85 = scmp.ne.s32.totalorder %s71, %s72
    %p86 = scmp.eq.s32.totalorder %s24, 1
    %p87 = por %p85, %p86
    %p89 = scmp.ne.s32.totalorder %s72, %s88
    %p90 = scmp.eq.s32.totalorder %s24, 0
    %p91 = por %p89, %p90
    %s92 = ssub.s32 %s26, %s33
    %p93 = scmp.eq.s32.totalorder %s92, 0
    %s95 = sadd.s32 %s94, 1
    %s96 = scalar_select %p93, %s94, %s95
    %p99 = pneg %p93
    %p100 = scmp.eq.s32.totalorder %s18, 1
    %p101 = por %p99, %p100
    %p102 = scmp.ne.s32.totalorder %s94, %s97
    %p103 = scmp.eq.s32.totalorder %s18, 0
    %p104 = por %p102, %p103
    %p105 = scmp.ne.s32.totalorder %s94, %s97
    %p106 = scmp.eq.s32.totalorder %s23, 1
    %p107 = por %p105, %p106
    %p108 = scmp.ne.s32.totalorder %s97, %s98
    %p109 = scmp.eq.s32.totalorder %s23, 0
    %p110 = por %p108, %p109
    %p111 = scmp.ne.s32.totalorder %s97, %s98
    %p112 = scmp.eq.s32.totalorder %s24, 1
    %p113 = por %p111, %p112
    %p115 = scmp.ne.s32.totalorder %s98, %s114
    %p116 = scmp.eq.s32.totalorder %s24, 0
    %p117 = por %p115, %p116
    %s118 = ssub.s32 %s25, %s37
    %p119 = scmp.eq.s32.totalorder %s118, 0
    %s121 = sadd.s32 %s120, 1
    %s122 = scalar_select %p119, %s120, %s121
    %p125 = pneg %p119
    %p126 = scmp.eq.s32.totalorder %s18, 1
    %p127 = por %p125, %p126
    %p128 = scmp.ne.s32.totalorder %s120, %s123
    %p129 = scmp.eq.s32.totalorder %s18, 0
    %p130 = por %p128, %p129
    %p131 = scmp.ne.s32.totalorder %s120, %s123
    %p132 = scmp.eq.s32.totalorder %s23, 1
    %p133 = por %p131, %p132
    %p134 = scmp.ne.s32.totalorder %s123, %s124
    %p135 = scmp.eq.s32.totalorder %s23, 0
    %p136 = por %p134, %p135
    %p137 = scmp.ne.s32.totalorder %s123, %s124
    %p138 = scmp.eq.s32.totalorder %s24, 1
    %p139 = por %p137, %p138
    %p141 = scmp.ne.s32.totalorder %s124, %s140
    %p142 = scmp.eq.s32.totalorder %s24, 0
    %p143 = por %p141, %p142
    %s145 = sadd.s32 %s144, 1
    %p148 = scmp.eq.s32.totalorder %s18, 1
    %p149 = scmp.ne.s32.totalorder %s144, %s146
    %p150 = scmp.eq.s32.totalorder %s18, 0
    %p151 = por %p149, %p150
    %p152 = scmp.ne.s32.totalorder %s144, %s146
    %p153 = scmp.eq.s32.totalorder %s23, 1
    %p154 = por %p152, %p153
    %p155 = scmp.ne.s32.totalorder %s146, %s147
    %p156 = scmp.eq.s32.totalorder %s23, 0
    %p157 = por %p155, %p156
    %p158 = scmp.ne.s32.totalorder %s146, %s147
    %p159 = scmp.eq.s32.totalorder %s24, 1
    %p160 = por %p158, %p159
    %p162 = scmp.ne.s32.totalorder %s147, %s161
    %p163 = scmp.eq.s32.totalorder %s24, 0
    %p164 = por %p162, %p163
    %s166 = sadd.s32 %s165, 1
    %p169 = scmp.eq.s32.totalorder %s18, 1
    %p170 = scmp.ne.s32.totalorder %s165, %s167
    %p171 = scmp.eq.s32.totalorder %s18, 0
    %p172 = por %p170, %p171
    %p173 = scmp.ne.s32.totalorder %s165, %s167
    %p174 = scmp.eq.s32.totalorder %s23, 1
    %p175 = por %p173, %p174
    %p176 = scmp.ne.s32.totalorder %s167, %s168
    %p177 = scmp.eq.s32.totalorder %s23, 0
    %p178 = por %p176, %p177
    %p179 = scmp.ne.s32.totalorder %s167, %s168
    %p180 = scmp.eq.s32.totalorder %s24, 1
    %p181 = por %p179, %p180
    %p183 = scmp.ne.s32.totalorder %s168, %s182
    %p184 = scmp.eq.s32.totalorder %s24, 0
    %p185 = por %p183, %p184
    %s187 = sadd.s32 %s186, 1
    %p190 = scmp.eq.s32.totalorder %s18, 1
    %p191 = scmp.ne.s32.totalorder %s186, %s188
    %p192 = scmp.eq.s32.totalorder %s18, 0
    %p193 = por %p191, %p192
    %p194 = scmp.ne.s32.totalorder %s186, %s188
    %p195 = scmp.eq.s32.totalorder %s23, 1
    %p196 = por %p194, %p195
    %p197 = scmp.ne.s32.totalorder %s188, %s189
    %p198 = scmp.eq.s32.totalorder %s23, 0
    %p199 = por %p197, %p198
    %p200 = scmp.ne.s32.totalorder %s188, %s189
    %p201 = scmp.eq.s32.totalorder %s24, 1
    %p202 = por %p200, %p201
    %p204 = scmp.ne.s32.totalorder %s189, %s203
    %p205 = scmp.eq.s32.totalorder %s24, 0
    %p206 = por %p204, %p205
    %s208 = sadd.s32 %s207, 1
    %p211 = scmp.eq.s32.totalorder %s18, 1
    %p212 = scmp.ne.s32.totalorder %s207, %s209
    %p213 = scmp.eq.s32.totalorder %s18, 0
    %p214 = por %p212, %p213
    %p215 = scmp.ne.s32.totalorder %s207, %s209
    %p216 = scmp.eq.s32.totalorder %s23, 1
    %p217 = por %p215, %p216
    %p218 = scmp.ne.s32.totalorder %s209, %s210
    %p219 = scmp.eq.s32.totalorder %s23, 0
    %p220 = por %p218, %p219
    %p221 = scmp.ne.s32.totalorder %s209, %s210
    %p222 = scmp.eq.s32.totalorder %s24, 1
    %p223 = por %p221, %p222
    %p225 = scmp.ne.s32.totalorder %s210, %s224
    %p226 = scmp.eq.s32.totalorder %s24, 0
    %p227 = por %p225, %p226
    %s229 = sadd.s32 %s228, 1
    %p232 = scmp.eq.s32.totalorder %s18, 1
    %p233 = scmp.ne.s32.totalorder %s228, %s230
    %p234 = scmp.eq.s32.totalorder %s18, 0
    %p235 = por %p233, %p234
    %p236 = scmp.ne.s32.totalorder %s228, %s230
    %p237 = scmp.eq.s32.totalorder %s23, 1
    %p238 = por %p236, %p237
    %p239 = scmp.ne.s32.totalorder %s230, %s231
    %p240 = scmp.eq.s32.totalorder %s23, 0
    %p241 = por %p239, %p240
    %p242 = scmp.ne.s32.totalorder %s230, %s231
    %p243 = scmp.eq.s32.totalorder %s24, 1
    %p244 = por %p242, %p243
    %p246 = scmp.ne.s32.totalorder %s231, %s245
    %p247 = scmp.eq.s32.totalorder %s24, 0
    %p248 = por %p246, %p247
    %s250 = sadd.s32 %s249, 1
    %p253 = scmp.eq.s32.totalorder %s18, 1
    %p254 = scmp.ne.s32.totalorder %s249, %s251
    %p255 = scmp.eq.s32.totalorder %s18, 0
    %p256 = por %p254, %p255
    %p257 = scmp.ne.s32.totalorder %s249, %s251
    %p258 = scmp.eq.s32.totalorder %s23, 1
    %p259 = por %p257, %p258
    %p260 = scmp.ne.s32.totalorder %s251, %s252
    %p261 = scmp.eq.s32.totalorder %s23, 0
    %p262 = por %p260, %p261
    %p263 = scmp.ne.s32.totalorder %s251, %s252
    %p264 = scmp.eq.s32.totalorder %s24, 1
    %p265 = por %p263, %p264
    %p267 = scmp.ne.s32.totalorder %s252, %s266
    %p268 = scmp.eq.s32.totalorder %s24, 0
    %p269 = por %p267, %p268
    %s271 = sadd.s32 %s270, 1
    %p274 = scmp.eq.s32.totalorder %s18, 1
    %p275 = scmp.ne.s32.totalorder %s270, %s272
    %p276 = scmp.eq.s32.totalorder %s18, 0
    %p277 = por %p275, %p276
    %p278 = scmp.ne.s32.totalorder %s270, %s272
    %p279 = scmp.eq.s32.totalorder %s23, 1
    %p280 = por %p278, %p279
    %p281 = scmp.ne.s32.totalorder %s272, %s273
    %p282 = scmp.eq.s32.totalorder %s23, 0
    %p283 = por %p281, %p282
    %p284 = scmp.ne.s32.totalorder %s272, %s273
    %p285 = scmp.eq.s32.totalorder %s24, 1
    %p286 = por %p284, %p285
    %p288 = scmp.ne.s32.totalorder %s273, %s287
    %p289 = scmp.eq.s32.totalorder %s24, 0
    %p290 = por %p288, %p289
    %s292 = sadd.s32 %s291, 1
    %p295 = scmp.eq.s32.totalorder %s18, 1
    %p296 = scmp.ne.s32.totalorder %s291, %s293
    %p297 = scmp.eq.s32.totalorder %s18, 0
    %p298 = por %p296, %p297
    %p299 = scmp.ne.s32.totalorder %s291, %s293
    %p300 = scmp.eq.s32.totalorder %s23, 1
    %p301 = por %p299, %p300
    %p302 = scmp.ne.s32.totalorder %s293, %s294
    %p303 = scmp.eq.s32.totalorder %s23, 0
    %p304 = por %p302, %p303
    %p305 = scmp.ne.s32.totalorder %s293, %s294
    %p306 = scmp.eq.s32.totalorder %s24, 1
    %p307 = por %p305, %p306
    %p309 = scmp.ne.s32.totalorder %s294, %s308
    %p310 = scmp.eq.s32.totalorder %s24, 0
    %p311 = por %p309, %p310
    %s312 = ssub.s32 %s25, %s37
    %s313 = ssub.s32 %s26, %s33
    %s314 = sor.u32 %s312, %s313
    %p315 = scmp.eq.s32.totalorder %s314, 0
    %s317 = sadd.s32 %s316, 1
    %s318 = scalar_select %p315, %s316, %s317
    %p321 = pneg %p315
    %p322 = scmp.eq.s32.totalorder %s18, 1
    %p323 = por %p321, %p322
    %p324 = scmp.ne.s32.totalorder %s316, %s319
    %p325 = scmp.eq.s32.totalorder %s18, 0
    %p326 = por %p324, %p325
    %p327 = scmp.ne.s32.totalorder %s316, %s319
    %p328 = scmp.eq.s32.totalorder %s23, 1
    %p329 = por %p327, %p328
    %p330 = scmp.ne.s32.totalorder %s319, %s320
    %p331 = scmp.eq.s32.totalorder %s23, 0
    %p332 = por %p330, %p331
    %p333 = scmp.ne.s32.totalorder %s319, %s320
    %p334 = scmp.eq.s32.totalorder %s24, 1
    %p335 = por %p333, %p334
    %p337 = scmp.ne.s32.totalorder %s320, %s336
    %p338 = scmp.eq.s32.totalorder %s24, 0
    %p339 = por %p337, %p338
    %p340 = scmp.le.s32.totalorder 1, %s18
    %p341 = scmp.lt.s32.totalorder %s18, 3
    %p342 = pnand %p340, %p341
    %p343 = pneg %p342
    // Predicated region
    $region9: #{transformer_forward.13} parent=5 // pred_check
      _
    $region10: #{transformer_forward.13} parent=5 // pred_check_branch
      %345 = sbr.rel (%p342) target = $region12
    $region11: #{transformer_forward.13} parent=5 // pred_region
      %s346 = ssub.s32 %s18, 1
      // Predicated region
      $region13: #{transformer_forward.13} parent=11 // pred_check
        %p347 = pneg %p110
      $region14: #{transformer_forward.13} parent=11 // pred_check_branch
        %349 = sbr.rel (%p347) target = $region16
      $region15: #{transformer_forward.13} parent=11 // pred_region
        %p350 = scmp.lt.s32.totalorder %s28, 0
        %s351 = scalar_select %p350, %s28, 0
        %s352 = smul.addr %s351, 8
        %s353 = scalar_lea.vmem %s2, %s352
      $region16: #{transformer_forward.13} parent=11 // pred_fallthru
        _
      // Predicated region
      $region17: #{transformer_forward.13} parent=11 // pred_check
        %p354 = pneg %p157
      $region18: #{transformer_forward.13} parent=11 // pred_check_branch
        %356 = sbr.rel (%p354) target = $region20
      $region19: #{transformer_forward.13} parent=11 // pred_region
        _
      $region20: #{transformer_forward.13} parent=11 // pred_fallthru
        _
      // Predicated region
      $region21: #{transformer_forward.13} parent=11 // pred_check
        %p357 = pneg %p178
      $region22: #{transformer_forward.13} parent=11 // pred_check_branch
        %359 = sbr.rel (%p357) target = $region24
      $region23: #{transformer_forward.13} parent=11 // pred_region
        _
      $region24: #{transformer_forward.13} parent=11 // pred_fallthru
        _
      // Predicated region
      $region25: #{transformer_forward.13} parent=11 // pred_check
        %p360 = pneg %p199
      $region26: #{transformer_forward.13} parent=11 // pred_check_branch
        %362 = sbr.rel (%p360) target = $region28
      $region27: #{transformer_forward.13} parent=11 // pred_region
        _
      $region28: #{transformer_forward.13} parent=11 // pred_fallthru
        _
      // Predicated region
      $region29: #{transformer_forward.13} parent=11 // pred_check
        %p363 = pneg %p220
      $region30: #{transformer_forward.13} parent=11 // pred_check_branch
        %365 = sbr.rel (%p363) target = $region32
      $region31: #{transformer_forward.13} parent=11 // pred_region
        _
      $region32: #{transformer_forward.13} parent=11 // pred_fallthru
        _
      // Predicated region
      $region33: #{transformer_forward.13} parent=11 // pred_check
        %p366 = pneg %p241
      $region34: #{transformer_forward.13} parent=11 // pred_check_branch
        %368 = sbr.rel (%p366) target = $region36
      $region35: #{transformer_forward.13} parent=11 // pred_region
        _
      $region36: #{transformer_forward.13} parent=11 // pred_fallthru
        _
      // Predicated region
      $region37: #{transformer_forward.13} parent=11 // pred_check
        %p369 = pneg %p262
      $region38: #{transformer_forward.13} parent=11 // pred_check_branch
        %371 = sbr.rel (%p369) target = $region40
      $region39: #{transformer_forward.13} parent=11 // pred_region
        _
      $region40: #{transformer_forward.13} parent=11 // pred_fallthru
        _
      // Predicated region
      $region41: #{transformer_forward.13} parent=11 // pred_check
        %p372 = pneg %p283
      $region42: #{transformer_forward.13} parent=11 // pred_check_branch
        %374 = sbr.rel (%p372) target = $region44
      $region43: #{transformer_forward.13} parent=11 // pred_region
        _
      $region44: #{transformer_forward.13} parent=11 // pred_fallthru
        _
      // Predicated region
      $region45: #{transformer_forward.13} parent=11 // pred_check
        %p375 = pneg %p304
      $region46: #{transformer_forward.13} parent=11 // pred_check_branch
        %377 = sbr.rel (%p375) target = $region48
      $region47: #{transformer_forward.13} parent=11 // pred_region
        _
      $region48: #{transformer_forward.13} parent=11 // pred_fallthru
        _
    $region12: #{transformer_forward.13} parent=5 // pred_fallthru
      _
    %p378 = scmp.lt.s32.totalorder %s18, 2
    // Predicated region
    $region49: #{transformer_forward.13} parent=5 // pred_check
      %p379 = pneg %p378
    $region50: #{transformer_forward.13} parent=5 // pred_check_branch
      %381 = sbr.rel (%p379) target = $region52
    $region51: #{transformer_forward.13} parent=5 // pred_region
      // Predicated region
      $region53: #{transformer_forward.13} parent=51 // pred_check
        %p382 = pneg %p52
      $region54: #{transformer_forward.13} parent=51 // pred_check_branch
        %384 = sbr.rel (%p382) target = $region56
      $region55: #{transformer_forward.13} parent=51 // pred_region
        %p385 = scmp.lt.s32.totalorder %s25, 1
        %s386 = scalar_select %p385, %s25, 1
        %p387 = scmp.lt.s32.totalorder %s26, 0
        %s388 = scalar_select %p387, %s26, 0
        %s389 = sadd.s32 %s388, %s386
        %s390 = smul.addr %s389, 8
        %s391 = scalar_lea.vmem %s0, %s390
      $region56: #{transformer_forward.13} parent=51 // pred_fallthru
        _
      // Predicated region
      $region57: #{transformer_forward.13} parent=51 // pred_check
        %p392 = pneg %p78
      $region58: #{transformer_forward.13} parent=51 // pred_check_branch
        %394 = sbr.rel (%p392) target = $region60
      $region59: #{transformer_forward.13} parent=51 // pred_region
        %p395 = scmp.lt.s32.totalorder %s25, 1
        %s396 = scalar_select %p395, %s25, 1
        %s397 = smul.addr %s396, 8
        %s398 = scalar_lea.vmem %s1, %s397
      $region60: #{transformer_forward.13} parent=51 // pred_fallthru
        _
      // Predicated region
      $region61: #{transformer_forward.13} parent=51 // pred_check
        %p399 = pneg %p130
      $region62: #{transformer_forward.13} parent=51 // pred_check_branch
        %401 = sbr.rel (%p399) target = $region64
      $region63: #{transformer_forward.13} parent=51 // pred_region
        %p402 = scmp.lt.s32.totalorder %s25, 1
        %s403 = scalar_select %p402, %s25, 1
        %s404 = scalar_lea.vmem %s3, %s403
      $region64: #{transformer_forward.13} parent=51 // pred_fallthru
        _
    $region52: #{transformer_forward.13} parent=5 // pred_fallthru
      _
    %p405 = scmp.le.s32.totalorder 1, %s18
    %p406 = scmp.lt.s32.totalorder %s18, 3
    %p407 = pnand %p405, %p406
    %p408 = pneg %p407
    // Predicated region
    $region65: #{transformer_forward.13} parent=5 // pred_check
      _
    $region66: #{transformer_forward.13} parent=5 // pred_check_branch
      %410 = sbr.rel (%p407) target = $region68
    $region67: #{transformer_forward.13} parent=5 // pred_region
      %s411 = ssub.s32 %s18, 1
      %p412 = scmp.lt.s32.totalorder %s27, 1
      %s413 = scalar_select %p412, %s27, 1
      %p414 = scmp.lt.s32.totalorder %s28, 0
      %s415 = scalar_select %p414, %s28, 0
      %s416 = sadd.s32 %s415, %s413
      %s417 = smul.addr %s416, 8
      %s418 = scalar_lea.vmem %s0, %s417
      %p419 = pneg %p58
      %p420 = pneg %p55
      %p421 = scmp.lt.s32.totalorder %s27, 1
      %s422 = scalar_select %p421, %s27, 1
      %s423 = smul.addr %s422, 8
      %s424 = scalar_lea.vmem %s1, %s423
      %p425 = pneg %p84
      %p426 = pneg %p81
      %p427 = scmp.lt.s32.totalorder %s28, 0
      %s428 = scalar_select %p427, %s28, 0
      %s429 = smul.addr %s428, 8
      %s430 = scalar_lea.vmem %s2, %s429
      %p431 = pneg %p110
      %p432 = pneg %p107
      %p433 = scmp.lt.s32.totalorder %s27, 1
      %s434 = scalar_select %p433, %s27, 1
      %s435 = scalar_lea.vmem %s3, %s434
      %p436 = pneg %p136
      %p437 = pneg %p133
      %p438 = pneg %p157
      %p439 = pneg %p154
      %p440 = pneg %p178
      %p441 = pneg %p175
      %p442 = pneg %p199
      %p443 = pneg %p196
      %p444 = pneg %p220
      %p445 = pneg %p217
      %p446 = pneg %p241
      %p447 = pneg %p238
      %p448 = pneg %p262
      %p449 = pneg %p259
      %p450 = pneg %p283
      %p451 = pneg %p280
      %p452 = pneg %p304
      %p453 = pneg %p301
      %p454 = pneg %p332
      %p455 = pneg %p329
      %p456 = scmp.lt.s32.totalorder %s27, 1
      %s457 = scalar_select %p456, %s27, 1
      %p458 = scmp.lt.s32.totalorder %s28, 0
      %s459 = scalar_select %p458, %s28, 0
      %s460 = sadd.s32 %s459, %s457
      %s461 = smul.addr %s460, 8
      %s462 = scalar_lea.vmem %s12, %s461
      %p463 = scmp.lt.s32.totalorder %s27, 1
      %s464 = scalar_select %p463, %s27, 1
      %p465 = scmp.lt.s32.totalorder %s28, 0
      %s466 = scalar_select %p465, %s28, 0
      %s467 = sadd.s32 %s466, %s464
      %s468 = smul.addr %s467, 8
      %s469 = scalar_lea.vmem %s0, %s468
      %p470 = scmp.lt.s32.totalorder %s27, 1
      %s471 = scalar_select %p470, %s27, 1
      %s472 = smul.addr %s471, 8
      %s473 = scalar_lea.vmem %s1, %s472
      %p474 = scmp.lt.s32.totalorder %s28, 0
      %s475 = scalar_select %p474, %s28, 0
      %s476 = smul.addr %s475, 8
      %s477 = scalar_lea.vmem %s2, %s476
      %p478 = scmp.lt.s32.totalorder %s27, 1
      %s479 = scalar_select %p478, %s27, 1
      %s480 = scalar_lea.vmem %s3, %s479
      %p481 = scmp.lt.s32.totalorder %s27, 1
      %s482 = scalar_select %p481, %s27, 1
      %p483 = scmp.lt.s32.totalorder %s28, 0
      %s484 = scalar_select %p483, %s28, 0
      %s485 = sadd.s32 %s484, %s482
      %s486 = smul.addr %s485, 8
      %s487 = scalar_lea.vmem %s12, %s486
      %v489 = vld [vmem:[%s469] sm:$0xff]
      %v490 = vld [vmem:[%s473] sm:$0xff]
      %v491 = vpack.c.bf16 %v489, %v489
      %v492 = vld [vmem:[%s4] sm:$0xf]
      %v493 = vld [vmem:[%s4 + $0x4] sm:$0xf]
      %v494 = vld [vmem:[%s4 + $0x8] sm:$0xf]
      %v495 = vld [vmem:[%s4 + $0xc] sm:$0xf]
      %v496 = vld [vmem:[%s5] sm:$0x1]
      %v498 = vlaneseq
      %v499 = vshrl.u32 %v498, 7
      %v500 = vsub.s32 0, %v499
      %v501 = vrot.slane %v496, %v500
      %v507 = vunpack.c.l.b16 %v492
      %v508 = vunpack.c.l.b16 %v493
      %v509 = vunpack.c.l.b16 %v494
      %v510 = vunpack.c.l.b16 %v495
      %v511 = vpack.c.b16 %v508, %v507
      %v512 = vpack.c.b16 %v510, %v509
      %vm515 = vcmask 261120
      %v517 = vsel %vm515, %v491, 0
      %519 = vmatprep.subr.bf16.mxu0 0
      %520 = vmatpush1.bf16.msra.mxu0 %v511
      %521 = vmatprep.subr.bf16.mxu0 0
      %522 = vmatpush1.bf16.msra.mxu0 %v512
      %523 = vmatprep.subr.bf16.mxu0 0
      %524 = vmatpush1.bf16.msra.mxu0 0
      %525 = vmatprep.subr.bf16.mxu0 0
      %526 = vmatpush1.bf16.msra.mxu0 0
      %527 = vmatprep.subr.bf16.mxu0 0
      %528 = vmatpush1.bf16.msra.mxu0 0
      %529 = vmatprep.subr.bf16.mxu0 0
      %530 = vmatpush1.bf16.msra.mxu0 0
      %531 = vmatprep.subr.bf16.mxu0 0
      %532 = vmatpush1.bf16.msra.mxu0 0
      %533 = vmatprep.subr.bf16.mxu0 0
      %534 = vmatpush1.bf16.msra.mxu0 0
      %535 = vmatprep.subr.bf16.mxu0 0
      %536 = vmatpush1.bf16.msra.mxu0 0
      %537 = vmatprep.subr.bf16.mxu0 0
      %538 = vmatpush1.bf16.msra.mxu0 0
      %539 = vmatprep.subr.bf16.mxu0 0
      %540 = vmatpush1.bf16.msra.mxu0 0
      %541 = vmatprep.subr.bf16.mxu0 0
      %542 = vmatpush1.bf16.msra.mxu0 0
      %543 = vmatprep.subr.bf16.mxu0 0
      %544 = vmatpush1.bf16.msra.mxu0 0
      %545 = vmatprep.subr.bf16.mxu0 0
      %546 = vmatpush1.bf16.msra.mxu0 0
      %547 = vmatprep.subr.bf16.mxu0 0
      %548 = vmatpush1.bf16.msra.mxu0 0
      %549 = vmatprep.subr.bf16.mxu0 0
      %550 = vmatpush1.bf16.msra.mxu0 0
      %551 = vmatprep.mubr.bf16.mxu0 0
      %552 = vmatmul.mubr.bf16.gmra.mrb[0].mxu0 %v517
      %v553 = vpop.f32.mrb[0].mxu0
      %v554 = vadd.f32 %v501, %v553
      %v555 = vpop.f32.mrb[0].mxu0
      %v556 = vpop.f32.mrb[0].mxu0
      %v557 = vpop.f32.mrb[0].mxu0
      %558 = vdwg.mxu0
      %v559 = vpack.c.bf16 %v490, %v490
      %v560 = vld [vmem:[%s6] sm:$0xf]
      %v561 = vld [vmem:[%s6 + $0x4] sm:$0xf]
      %v562 = vld [vmem:[%s6 + $0x8] sm:$0xf]
      %v563 = vld [vmem:[%s6 + $0xc] sm:$0xf]
      %v564 = vld [vmem:[%s7] sm:$0x1]
      %v566 = vlaneseq
      %v567 = vshrl.u32 %v566, 7
      %v568 = vsub.s32 0, %v567
      %v569 = vrot.slane %v564, %v568
      %v575 = vunpack.c.l.b16 %v560
      %v576 = vunpack.c.l.b16 %v561
      %v577 = vunpack.c.l.b16 %v562
      %v578 = vunpack.c.l.b16 %v563
      %v579 = vpack.c.b16 %v576, %v575
      %v580 = vpack.c.b16 %v578, %v577
      %v584 = vsel %vm515, %v559, 0
      %586 = vmatprep.subr.bf16.mxu0 0
      %587 = vmatpush1.bf16.msra.mxu0 %v579
      %588 = vmatprep.subr.bf16.mxu0 0
      %589 = vmatpush1.bf16.msra.mxu0 %v580
      %590 = vmatprep.subr.bf16.mxu0 0
      %591 = vmatpush1.bf16.msra.mxu0 0
      %592 = vmatprep.subr.bf16.mxu0 0
      %593 = vmatpush1.bf16.msra.mxu0 0
      %594 = vmatprep.subr.bf16.mxu0 0
      %595 = vmatpush1.bf16.msra.mxu0 0
      %596 = vmatprep.subr.bf16.mxu0 0
      %597 = vmatpush1.bf16.msra.mxu0 0
      %598 = vmatprep.subr.bf16.mxu0 0
      %599 = vmatpush1.bf16.msra.mxu0 0
      %600 = vmatprep.subr.bf16.mxu0 0
      %601 = vmatpush1.bf16.msra.mxu0 0
      %602 = vmatprep.subr.bf16.mxu0 0
      %603 = vmatpush1.bf16.msra.mxu0 0
      %604 = vmatprep.subr.bf16.mxu0 0
      %605 = vmatpush1.bf16.msra.mxu0 0
      %606 = vmatprep.subr.bf16.mxu0 0
      %607 = vmatpush1.bf16.msra.mxu0 0
      %608 = vmatprep.subr.bf16.mxu0 0
      %609 = vmatpush1.bf16.msra.mxu0 0
      %610 = vmatprep.subr.bf16.mxu0 0
      %611 = vmatpush1.bf16.msra.mxu0 0
      %612 = vmatprep.subr.bf16.mxu0 0
      %613 = vmatpush1.bf16.msra.mxu0 0
      %614 = vmatprep.subr.bf16.mxu0 0
      %615 = vmatpush1.bf16.msra.mxu0 0
      %616 = vmatprep.subr.bf16.mxu0 0
      %617 = vmatpush1.bf16.msra.mxu0 0
      %618 = vmatprep.mubr.bf16.mxu0 0
      %619 = vmatmul.mubr.bf16.gmra.mrb[0].mxu0 %v584
      %v620 = vpop.f32.mrb[0].mxu0
      %v621 = vadd.f32 %v569, %v620
      %v622 = vpop.f32.mrb[0].mxu0
      %v623 = vpop.f32.mrb[0].mxu0
      %v624 = vpop.f32.mrb[0].mxu0
      %625 = vdwg.mxu0
      %v626 = vld [vmem:[%s480] sm:$0x1]
      %v627 = vld [vmem:[%s477] sm:$0xff]
      %v629 = vlaneseq
      %v630 = vshrl.u32 %v629, 7
      %v631 = vsub.s32 0, %v630
      %v632 = vrot.slane %v626, %v631
      %v634 = vadd.f32 %v627, %v632
      %v635 = vpack.c.bf16 %v554, %v554
      %v636 = vpack.c.bf16 %v621, %v621
      %vm637 = vcmask 64512
      %v639 = vsel %vm637, %v635, 0
      %v642 = vsel %vm637, %v636, 0
      %644 = vmatprep.subr.bf16.mxu0 0
      %645 = vmatpush1.bf16.xpose.msra.mxu0 %v642
      %646 = vmatprep.subr.bf16.mxu0 0
      %647 = vmatpush1.bf16.xpose.msra.mxu0 0
      %648 = vmatprep.subr.bf16.mxu0 0
      %649 = vmatpush1.bf16.xpose.msra.mxu0 0
      %650 = vmatprep.subr.bf16.mxu0 0
      %651 = vmatpush1.bf16.xpose.msra.mxu0 0
      %652 = vmatprep.subr.bf16.mxu0 0
      %653 = vmatpush1.bf16.xpose.msra.mxu0 0
      %654 = vmatprep.subr.bf16.mxu0 0
      %655 = vmatpush1.bf16.xpose.msra.mxu0 0
      %656 = vmatprep.subr.bf16.mxu0 0
      %657 = vmatpush1.bf16.xpose.msra.mxu0 0
      %658 = vmatprep.subr.bf16.mxu0 0
      %659 = vmatpush1.bf16.xpose.msra.mxu0 0
      %660 = vmatprep.subr.bf16.mxu0 0
      %661 = vmatpush1.bf16.xpose.msra.mxu0 0
      %662 = vmatprep.subr.bf16.mxu0 0
      %663 = vmatpush1.bf16.xpose.msra.mxu0 0
      %664 = vmatprep.subr.bf16.mxu0 0
      %665 = vmatpush1.bf16.xpose.msra.mxu0 0
      %666 = vmatprep.subr.bf16.mxu0 0
      %667 = vmatpush1.bf16.xpose.msra.mxu0 0
      %668 = vmatprep.subr.bf16.mxu0 0
      %669 = vmatpush1.bf16.xpose.msra.mxu0 0
      %670 = vmatprep.subr.bf16.mxu0 0
      %671 = vmatpush1.bf16.xpose.msra.mxu0 0
      %672 = vmatprep.subr.bf16.mxu0 0
      %673 = vmatpush1.bf16.xpose.msra.mxu0 0
      %674 = vmatprep.subr.bf16.mxu0 0
      %675 = vmatpush1.bf16.xpose.msra.mxu0 0
      %676 = vmatprep.mubr.bf16.mxu0 0
      %677 = vmatmul.mubr.bf16.gmra.mrb[0].mxu0 %v639
      %v678 = vpop.f32.mrb[0].mxu0
      %v679 = vadd.f32 %v634, %v678
      %v680 = vpop.f32.mrb[0].mxu0
      %v681 = vpop.f32.mrb[0].mxu0
      %v682 = vpop.f32.mrb[0].mxu0
      %683 = vdwg.mxu0
      %v684 = vsel %vm637, %v679, -inf
      %685 = vmax.xlane.f32.xlu0 %v684
      %v686 = vpop.xlane.xlu0 %685
      %v687 = vsub.f32 %v679, %v686
      %v688 = vmul.f32 %v687, 1.442695
      %v689 = vpow.pop %v688
      %v690 = vsel %vm637, %v689, 0.0
      %691 = vadd.xlane.f32.xlu0 %v690
      %v692 = vpop.xlane.xlu0 %691
      %v693 = vrcp.pop %v692
      %v694 = vmul.f32 %v689, %v693
      %v695 = vpack.c.bf16 %v694, %v694
      %697 = vrot.lane.b32.xlu0 %v636, 96
      %v698 = vpop.permute.xlu0 %697
      %v700 = vsel %vm637, %v695, 0
      %vm702 = vcmask 1043456
      %v704 = vsel %vm702, %v698, 0
      %706 = vmatprep.subr.bf16.mxu0 0
      %707 = vmatpush1.bf16.msra.mxu0 %v704
      %708 = vmatprep.subr.bf16.mxu0 0
      %709 = vmatpush1.bf16.msra.mxu0 0
      %710 = vmatprep.subr.bf16.mxu0 0
      %711 = vmatpush1.bf16.msra.mxu0 0
      %712 = vmatprep.subr.bf16.mxu0 0
      %713 = vmatpush1.bf16.msra.mxu0 0
      %714 = vmatprep.subr.bf16.mxu0 0
      %715 = vmatpush1.bf16.msra.mxu0 0
      %716 = vmatprep.subr.bf16.mxu0 0
      %717 = vmatpush1.bf16.msra.mxu0 0
      %718 = vmatprep.subr.bf16.mxu0 0
      %719 = vmatpush1.bf16.msra.mxu0 0
      %720 = vmatprep.subr.bf16.mxu0 0
      %721 = vmatpush1.bf16.msra.mxu0 0
      %722 = vmatprep.subr.bf16.mxu0 0
      %723 = vmatpush1.bf16.msra.mxu0 0
      %724 = vmatprep.subr.bf16.mxu0 0
      %725 = vmatpush1.bf16.msra.mxu0 0
      %726 = vmatprep.subr.bf16.mxu0 0
      %727 = vmatpush1.bf16.msra.mxu0 0
      %728 = vmatprep.subr.bf16.mxu0 0
      %729 = vmatpush1.bf16.msra.mxu0 0
      %730 = vmatprep.subr.bf16.mxu0 0
      %731 = vmatpush1.bf16.msra.mxu0 0
      %732 = vmatprep.subr.bf16.mxu0 0
      %733 = vmatpush1.bf16.msra.mxu0 0
      %734 = vmatprep.subr.bf16.mxu0 0
      %735 = vmatpush1.bf16.msra.mxu0 0
      %736 = vmatprep.subr.bf16.mxu0 0
      %737 = vmatpush1.bf16.msra.mxu0 0
      %738 = vmatprep.mubr.bf16.mxu0 0
      %739 = vmatmul.mubr.bf16.gmra.mrb[0].mxu0 %v700
      %v740 = vpop.f32.mrb[0].mxu0
      %v741 = vadd.f32 0.0, %v740
      %v742 = vpop.f32.mrb[0].mxu0
      %v743 = vpop.f32.mrb[0].mxu0
      %v744 = vpop.f32.mrb[0].mxu0
      %745 = vdwg.mxu0
      %746 = vst.msk [vmem:[#allocation2] sm:$0xff] %vm637, %v741
      %748 = vrot.lane.b32.xlu0 %v635, 120
      %v749 = vpop.permute.xlu0 %748
      %750 = vrot.lane.b32.xlu0 %v636, 120
      %v751 = vpop.permute.xlu0 %750
      %v753 = vsel %vm637, %v749, 0
      %v756 = vsel %vm637, %v751, 0
      %758 = vmatprep.subr.bf16.mxu0 0
      %759 = vmatpush1.bf16.xpose.msra.mxu0 %v756
      %760 = vmatprep.subr.bf16.mxu0 0
      %761 = vmatpush1.bf16.xpose.msra.mxu0 0
      %762 = vmatprep.subr.bf16.mxu0 0
      %763 = vmatpush1.bf16.xpose.msra.mxu0 0
      %764 = vmatprep.subr.bf16.mxu0 0
      %765 = vmatpush1.bf16.xpose.msra.mxu0 0
      %766 = vmatprep.subr.bf16.mxu0 0
      %767 = vmatpush1.bf16.xpose.msra.mxu0 0
      %768 = vmatprep.subr.bf16.mxu0 0
      %769 = vmatpush1.bf16.xpose.msra.mxu0 0
      %770 = vmatprep.subr.bf16.mxu0 0
      %771 = vmatpush1.bf16.xpose.msra.mxu0 0
      %772 = vmatprep.subr.bf16.mxu0 0
      %773 = vmatpush1.bf16.xpose.msra.mxu0 0
      %774 = vmatprep.subr.bf16.mxu0 0
      %775 = vmatpush1.bf16.xpose.msra.mxu0 0
      %776 = vmatprep.subr.bf16.mxu0 0
      %777 = vmatpush1.bf16.xpose.msra.mxu0 0
      %778 = vmatprep.subr.bf16.mxu0 0
      %779 = vmatpush1.bf16.xpose.msra.mxu0 0
      %780 = vmatprep.subr.bf16.mxu0 0
      %781 = vmatpush1.bf16.xpose.msra.mxu0 0
      %782 = vmatprep.subr.bf16.mxu0 0
      %783 = vmatpush1.bf16.xpose.msra.mxu0 0
      %784 = vmatprep.subr.bf16.mxu0 0
      %785 = vmatpush1.bf16.xpose.msra.mxu0 0
      %786 = vmatprep.subr.bf16.mxu0 0
      %787 = vmatpush1.bf16.xpose.msra.mxu0 0
      %788 = vmatprep.subr.bf16.mxu0 0
      %789 = vmatpush1.bf16.xpose.msra.mxu0 0
      %790 = vmatprep.mubr.bf16.mxu0 0
      %791 = vmatmul.mubr.bf16.gmra.mrb[0].mxu0 %v753
      %v792 = vpop.f32.mrb[0].mxu0
      %v793 = vadd.f32 %v634, %v792
      %v794 = vpop.f32.mrb[0].mxu0
      %v795 = vpop.f32.mrb[0].mxu0
      %v796 = vpop.f32.mrb[0].mxu0
      %797 = vdwg.mxu0
      %v798 = vsel %vm637, %v793, -inf
      %799 = vmax.xlane.f32.xlu0 %v798
      %v800 = vpop.xlane.xlu0 %799
      %v801 = vsub.f32 %v793, %v800
      %v802 = vmul.f32 %v801, 1.442695
      %v803 = vpow.pop %v802
      %v804 = vsel %vm637, %v803, 0.0
      %805 = vadd.xlane.f32.xlu0 %v804
      %v806 = vpop.xlane.xlu0 %805
      %v807 = vrcp.pop %v806
      %v808 = vmul.f32 %v803, %v807
      %v809 = vpack.c.bf16 %v808, %v808
      %810 = vrot.lane.b32.xlu0 %v636, 88
      %v811 = vpop.permute.xlu0 %810
      %v813 = vsel %vm637, %v809, 0
      %v816 = vsel %vm702, %v811, 0
      %818 = vmatprep.subr.bf16.mxu0 0
      %819 = vmatpush1.bf16.msra.mxu0 %v816
      %820 = vmatprep.subr.bf16.mxu0 0
      %821 = vmatpush1.bf16.msra.mxu0 0
      %822 = vmatprep.subr.bf16.mxu0 0
      %823 = vmatpush1.bf16.msra.mxu0 0
      %824 = vmatprep.subr.bf16.mxu0 0
      %825 = vmatpush1.bf16.msra.mxu0 0
      %826 = vmatprep.subr.bf16.mxu0 0
      %827 = vmatpush1.bf16.msra.mxu0 0
      %828 = vmatprep.subr.bf16.mxu0 0
      %829 = vmatpush1.bf16.msra.mxu0 0
      %830 = vmatprep.subr.bf16.mxu0 0
      %831 = vmatpush1.bf16.msra.mxu0 0
      %832 = vmatprep.subr.bf16.mxu0 0
      %833 = vmatpush1.bf16.msra.mxu0 0
      %834 = vmatprep.subr.bf16.mxu0 0
      %835 = vmatpush1.bf16.msra.mxu0 0
      %836 = vmatprep.subr.bf16.mxu0 0
      %837 = vmatpush1.bf16.msra.mxu0 0
      %838 = vmatprep.subr.bf16.mxu0 0
      %839 = vmatpush1.bf16.msra.mxu0 0
      %840 = vmatprep.subr.bf16.mxu0 0
      %841 = vmatpush1.bf16.msra.mxu0 0
      %842 = vmatprep.subr.bf16.mxu0 0
      %843 = vmatpush1.bf16.msra.mxu0 0
      %844 = vmatprep.subr.bf16.mxu0 0
      %845 = vmatpush1.bf16.msra.mxu0 0
      %846 = vmatprep.subr.bf16.mxu0 0
      %847 = vmatpush1.bf16.msra.mxu0 0
      %848 = vmatprep.subr.bf16.mxu0 0
      %849 = vmatpush1.bf16.msra.mxu0 0
      %850 = vmatprep.mubr.bf16.mxu0 0
      %851 = vmatmul.mubr.bf16.gmra.mrb[0].mxu0 %v813
      %v852 = vpop.f32.mrb[0].mxu0
      %v853 = vadd.f32 0.0, %v852
      %v854 = vpop.f32.mrb[0].mxu0
      %v855 = vpop.f32.mrb[0].mxu0
      %v856 = vpop.f32.mrb[0].mxu0
      %857 = vdwg.mxu0
      %859 = vrot.lane.b32.xlu0 %v853, 8
      %v860 = vpop.permute.xlu0 %859
      %vm862 = vcmask 130112
      %863 = vst.msk [vmem:[#allocation2] sm:$0xff] %vm862, %v860
      %864 = vrot.lane.b32.xlu0 %v635, 112
      %v865 = vpop.permute.xlu0 %864
      %866 = vrot.lane.b32.xlu0 %v636, 112
      %v867 = vpop.permute.xlu0 %866
      %v869 = vsel %vm637, %v865, 0
      %v872 = vsel %vm637, %v867, 0
      %874 = vmatprep.subr.bf16.mxu0 0
      %875 = vmatpush1.bf16.xpose.msra.mxu0 %v872
      %876 = vmatprep.subr.bf16.mxu0 0
      %877 = vmatpush1.bf16.xpose.msra.mxu0 0
      %878 = vmatprep.subr.bf16.mxu0 0
      %879 = vmatpush1.bf16.xpose.msra.mxu0 0
      %880 = vmatprep.subr.bf16.mxu0 0
      %881 = vmatpush1.bf16.xpose.msra.mxu0 0
      %882 = vmatprep.subr.bf16.mxu0 0
      %883 = vmatpush1.bf16.xpose.msra.mxu0 0
      %884 = vmatprep.subr.bf16.mxu0 0
      %885 = vmatpush1.bf16.xpose.msra.mxu0 0
      %886 = vmatprep.subr.bf16.mxu0 0
      %887 = vmatpush1.bf16.xpose.msra.mxu0 0
      %888 = vmatprep.subr.bf16.mxu0 0
      %889 = vmatpush1.bf16.xpose.msra.mxu0 0
      %890 = vmatprep.subr.bf16.mxu0 0
      %891 = vmatpush1.bf16.xpose.msra.mxu0 0
      %892 = vmatprep.subr.bf16.mxu0 0
      %893 = vmatpush1.bf16.xpose.msra.mxu0 0
      %894 = vmatprep.subr.bf16.mxu0 0
      %895 = vmatpush1.bf16.xpose.msra.mxu0 0
      %896 = vmatprep.subr.bf16.mxu0 0
      %897 = vmatpush1.bf16.xpose.msra.mxu0 0
      %898 = vmatprep.subr.bf16.mxu0 0
      %899 = vmatpush1.bf16.xpose.msra.mxu0 0
      %900 = vmatprep.subr.bf16.mxu0 0
      %901 = vmatpush1.bf16.xpose.msra.mxu0 0
      %902 = vmatprep.subr.bf16.mxu0 0
      %903 = vmatpush1.bf16.xpose.msra.mxu0 0
      %904 = vmatprep.subr.bf16.mxu0 0
      %905 = vmatpush1.bf16.xpose.msra.mxu0 0
      %906 = vmatprep.mubr.bf16.mxu0 0
      %907 = vmatmul.mubr.bf16.gmra.mrb[0].mxu0 %v869
      %v908 = vpop.f32.mrb[0].mxu0
      %v909 = vadd.f32 %v634, %v908
      %v910 = vpop.f32.mrb[0].mxu0
      %v911 = vpop.f32.mrb[0].mxu0
      %v912 = vpop.f32.mrb[0].mxu0
      %913 = vdwg.mxu0
      %v914 = vsel %vm637, %v909, -inf
      %915 = vmax.xlane.f32.xlu0 %v914
      %v916 = vpop.xlane.xlu0 %915
      %v917 = vsub.f32 %v909, %v916
      %v918 = vmul.f32 %v917, 1.442695
      %v919 = vpow.pop %v918
      %v920 = vsel %vm637, %v919, 0.0
      %921 = vadd.xlane.f32.xlu0 %v920
      %v922 = vpop.xlane.xlu0 %921
      %v923 = vrcp.pop %v922
      %v924 = vmul.f32 %v919, %v923
      %v925 = vpack.c.bf16 %v924, %v924
      %926 = vrot.lane.b32.xlu0 %v636, 80
      %v927 = vpop.permute.xlu0 %926
      %v929 = vsel %vm637, %v925, 0
      %v932 = vsel %vm702, %v927, 0
      %934 = vmatprep.subr.bf16.mxu0 0
      %935 = vmatpush1.bf16.msra.mxu0 %v932
      %936 = vmatprep.subr.bf16.mxu0 0
      %937 = vmatpush1.bf16.msra.mxu0 0
      %938 = vmatprep.subr.bf16.mxu0 0
      %939 = vmatpush1.bf16.msra.mxu0 0
      %940 = vmatprep.subr.bf16.mxu0 0
      %941 = vmatpush1.bf16.msra.mxu0 0
      %942 = vmatprep.subr.bf16.mxu0 0
      %943 = vmatpush1.bf16.msra.mxu0 0
      %944 = vmatprep.subr.bf16.mxu0 0
      %945 = vmatpush1.bf16.msra.mxu0 0
      %946 = vmatprep.subr.bf16.mxu0 0
      %947 = vmatpush1.bf16.msra.mxu0 0
      %948 = vmatprep.subr.bf16.mxu0 0
      %949 = vmatpush1.bf16.msra.mxu0 0
      %950 = vmatprep.subr.bf16.mxu0 0
      %951 = vmatpush1.bf16.msra.mxu0 0
      %952 = vmatprep.subr.bf16.mxu0 0
      %953 = vmatpush1.bf16.msra.mxu0 0
      %954 = vmatprep.subr.bf16.mxu0 0
      %955 = vmatpush1.bf16.msra.mxu0 0
      %956 = vmatprep.subr.bf16.mxu0 0
      %957 = vmatpush1.bf16.msra.mxu0 0
      %958 = vmatprep.subr.bf16.mxu0 0
      %959 = vmatpush1.bf16.msra.mxu0 0
      %960 = vmatprep.subr.bf16.mxu0 0
      %961 = vmatpush1.bf16.msra.mxu0 0
      %962 = vmatprep.subr.bf16.mxu0 0
      %963 = vmatpush1.bf16.msra.mxu0 0
      %964 = vmatprep.subr.bf16.mxu0 0
      %965 = vmatpush1.bf16.msra.mxu0 0
      %966 = vmatprep.mubr.bf16.mxu0 0
      %967 = vmatmul.mubr.bf16.gmra.mrb[0].mxu0 %v929
      %v968 = vpop.f32.mrb[0].mxu0
      %v969 = vadd.f32 0.0, %v968
      %v970 = vpop.f32.mrb[0].mxu0
      %v971 = vpop.f32.mrb[0].mxu0
      %v972 = vpop.f32.mrb[0].mxu0
      %973 = vdwg.mxu0
      %975 = vrot.lane.b32.xlu0 %v969, 16
      %v976 = vpop.permute.xlu0 %975
      %vm978 = vcmask 195712
      %979 = vst.msk [vmem:[#allocation2] sm:$0xff] %vm978, %v976
      %980 = vrot.lane.b32.xlu0 %v635, 104
      %v981 = vpop.permute.xlu0 %980
      %982 = vrot.lane.b32.xlu0 %v636, 104
      %v983 = vpop.permute.xlu0 %982
      %v985 = vsel %vm637, %v981, 0
      %v988 = vsel %vm637, %v983, 0
      %990 = vmatprep.subr.bf16.mxu0 0
      %991 = vmatpush1.bf16.xpose.msra.mxu0 %v988
      %992 = vmatprep.subr.bf16.mxu0 0
      %993 = vmatpush1.bf16.xpose.msra.mxu0 0
      %994 = vmatprep.subr.bf16.mxu0 0
      %995 = vmatpush1.bf16.xpose.msra.mxu0 0
      %996 = vmatprep.subr.bf16.mxu0 0
      %997 = vmatpush1.bf16.xpose.msra.mxu0 0
      %998 = vmatprep.subr.bf16.mxu0 0
      %999 = vmatpush1.bf16.xpose.msra.mxu0 0
      %1000 = vmatprep.subr.bf16.mxu0 0
      %1001 = vmatpush1.bf16.xpose.msra.mxu0 0
      %1002 = vmatprep.subr.bf16.mxu0 0
      %1003 = vmatpush1.bf16.xpose.msra.mxu0 0
      %1004 = vmatprep.subr.bf16.mxu0 0
      %1005 = vmatpush1.bf16.xpose.msra.mxu0 0
      %1006 = vmatprep.subr.bf16.mxu0 0
      %1007 = vmatpush1.bf16.xpose.msra.mxu0 0
      %1008 = vmatprep.subr.bf16.mxu0 0
      %1009 = vmatpush1.bf16.xpose.msra.mxu0 0
      %1010 = vmatprep.subr.bf16.mxu0 0
      %1011 = vmatpush1.bf16.xpose.msra.mxu0 0
      %1012 = vmatprep.subr.bf16.mxu0 0
      %1013 = vmatpush1.bf16.xpose.msra.mxu0 0
      %1014 = vmatprep.subr.bf16.mxu0 0
      %1015 = vmatpush1.bf16.xpose.msra.mxu0 0
      %1016 = vmatprep.subr.bf16.mxu0 0
      %1017 = vmatpush1.bf16.xpose.msra.mxu0 0
      %1018 = vmatprep.subr.bf16.mxu0 0
      %1019 = vmatpush1.bf16.xpose.msra.mxu0 0
      %1020 = vmatprep.subr.bf16.mxu0 0
      %1021 = vmatpush1.bf16.xpose.msra.mxu0 0
      %1022 = vmatprep.mubr.bf16.mxu0 0
      %1023 = vmatmul.mubr.bf16.gmra.mrb[0].mxu0 %v985
      %v1024 = vpop.f32.mrb[0].mxu0
      %v1025 = vadd.f32 %v634, %v1024
      %v1026 = vpop.f32.mrb[0].mxu0
      %v1027 = vpop.f32.mrb[0].mxu0
      %v1028 = vpop.f32.mrb[0].mxu0
      %1029 = vdwg.mxu0
      %v1030 = vsel %vm637, %v1025, -inf
      %1031 = vmax.xlane.f32.xlu0 %v1030
      %v1032 = vpop.xlane.xlu0 %1031
      %v1033 = vsub.f32 %v1025, %v1032
      %v1034 = vmul.f32 %v1033, 1.442695
      %v1035 = vpow.pop %v1034
      %v1036 = vsel %vm637, %v1035, 0.0
      %1037 = vadd.xlane.f32.xlu0 %v1036
      %v1038 = vpop.xlane.xlu0 %1037
      %v1039 = vrcp.pop %v1038
      %v1040 = vmul.f32 %v1035, %v1039
      %v1041 = vpack.c.bf16 %v1040, %v1040
      %1042 = vrot.lane.b32.xlu0 %v636, 72
      %v1043 = vpop.permute.xlu0 %1042
      %v1045 = vsel %vm637, %v1041, 0
      %v1048 = vsel %vm702, %v1043, 0
      %1050 = vmatprep.subr.bf16.mxu0 0
      %1051 = vmatpush1.bf16.msra.mxu0 %v1048
      %1052 = vmatprep.subr.bf16.mxu0 0
      %1053 = vmatpush1.bf16.msra.mxu0 0
      %1054 = vmatprep.subr.bf16.mxu0 0
      %1055 = vmatpush1.bf16.msra.mxu0 0
      %1056 = vmatprep.subr.bf16.mxu0 0
      %1057 = vmatpush1.bf16.msra.mxu0 0
      %1058 = vmatprep.subr.bf16.mxu0 0
      %1059 = vmatpush1.bf16.msra.mxu0 0
      %1060 = vmatprep.subr.bf16.mxu0 0
      %1061 = vmatpush1.bf16.msra.mxu0 0
      %1062 = vmatprep.subr.bf16.mxu0 0
      %1063 = vmatpush1.bf16.msra.mxu0 0
      %1064 = vmatprep.subr.bf16.mxu0 0
      %1065 = vmatpush1.bf16.msra.mxu0 0
      %1066 = vmatprep.subr.bf16.mxu0 0
      %1067 = vmatpush1.bf16.msra.mxu0 0
      %1068 = vmatprep.subr.bf16.mxu0 0
      %1069 = vmatpush1.bf16.msra.mxu0 0
      %1070 = vmatprep.subr.bf16.mxu0 0
      %1071 = vmatpush1.bf16.msra.mxu0 0
      %1072 = vmatprep.subr.bf16.mxu0 0
      %1073 = vmatpush1.bf16.msra.mxu0 0
      %1074 = vmatprep.subr.bf16.mxu0 0
      %1075 = vmatpush1.bf16.msra.mxu0 0
      %1076 = vmatprep.subr.bf16.mxu0 0
      %1077 = vmatpush1.bf16.msra.mxu0 0
      %1078 = vmatprep.subr.bf16.mxu0 0
      %1079 = vmatpush1.bf16.msra.mxu0 0
      %1080 = vmatprep.subr.bf16.mxu0 0
      %1081 = vmatpush1.bf16.msra.mxu0 0
      %1082 = vmatprep.mubr.bf16.mxu0 0
      %1083 = vmatmul.mubr.bf16.gmra.mrb[0].mxu0 %v1045
      %v1084 = vpop.f32.mrb[0].mxu0
      %v1085 = vadd.f32 0.0, %v1084
      %v1086 = vpop.f32.mrb[0].mxu0
      %v1087 = vpop.f32.mrb[0].mxu0
      %v1088 = vpop.f32.mrb[0].mxu0
      %1089 = vdwg.mxu0
      %1091 = vrot.lane.b32.xlu0 %v1085, 24
      %v1092 = vpop.permute.xlu0 %1091
      %vm1094 = vcmask 261312
      %1095 = vst.msk [vmem:[#allocation2] sm:$0xff] %vm1094, %v1092
      %v1096 = vld [vmem:[#allocation2] sm:$0xff]
      %v1097 = vpack.c.bf16 %v1096, %v1096
      %v1098 = vld [vmem:[%s8] sm:$0xf]
      %v1099 = vld [vmem:[%s8 + $0x4] sm:$0xf]
      %v1100 = vld [vmem:[%s8 + $0x8] sm:$0xf]
      %v1101 = vld [vmem:[%s8 + $0xc] sm:$0xf]
      %v1102 = vld [vmem:[%s9] sm:$0x1]
      %v1104 = vlaneseq
      %v1105 = vshrl.u32 %v1104, 7
      %v1106 = vsub.s32 0, %v1105
      %v1107 = vrot.slane %v1102, %v1106
      %v1113 = vunpack.c.l.b16 %v1098
      %v1114 = vunpack.c.l.b16 %v1099
      %v1115 = vunpack.c.l.b16 %v1100
      %v1116 = vunpack.c.l.b16 %v1101
      %v1117 = vpack.c.b16 %v1114, %v1113
      %v1118 = vpack.c.b16 %v1116, %v1115
      %v1122 = vsel %vm515, %v1097, 0
      %1124 = vmatprep.subr.bf16.mxu0 0
      %1125 = vmatpush1.bf16.msra.mxu0 %v1117
      %1126 = vmatprep.subr.bf16.mxu0 0
      %1127 = vmatpush1.bf16.msra.mxu0 %v1118
      %1128 = vmatprep.subr.bf16.mxu0 0
      %1129 = vmatpush1.bf16.msra.mxu0 0
      %1130 = vmatprep.subr.bf16.mxu0 0
      %1131 = vmatpush1.bf16.msra.mxu0 0
      %1132 = vmatprep.subr.bf16.mxu0 0
      %1133 = vmatpush1.bf16.msra.mxu0 0
      %1134 = vmatprep.subr.bf16.mxu0 0
      %1135 = vmatpush1.bf16.msra.mxu0 0
      %1136 = vmatprep.subr.bf16.mxu0 0
      %1137 = vmatpush1.bf16.msra.mxu0 0
      %1138 = vmatprep.subr.bf16.mxu0 0
      %1139 = vmatpush1.bf16.msra.mxu0 0
      %1140 = vmatprep.subr.bf16.mxu0 0
      %1141 = vmatpush1.bf16.msra.mxu0 0
      %1142 = vmatprep.subr.bf16.mxu0 0
      %1143 = vmatpush1.bf16.msra.mxu0 0
      %1144 = vmatprep.subr.bf16.mxu0 0
      %1145 = vmatpush1.bf16.msra.mxu0 0
      %1146 = vmatprep.subr.bf16.mxu0 0
      %1147 = vmatpush1.bf16.msra.mxu0 0
      %1148 = vmatprep.subr.bf16.mxu0 0
      %1149 = vmatpush1.bf16.msra.mxu0 0
      %1150 = vmatprep.subr.bf16.mxu0 0
      %1151 = vmatpush1.bf16.msra.mxu0 0
      %1152 = vmatprep.subr.bf16.mxu0 0
      %1153 = vmatpush1.bf16.msra.mxu0 0
      %1154 = vmatprep.subr.bf16.mxu0 0
      %1155 = vmatpush1.bf16.msra.mxu0 0
      %1156 = vmatprep.mubr.bf16.mxu0 0
      %1157 = vmatmul.mubr.bf16.gmra.mrb[0].mxu0 %v1122
      %v1158 = vpop.f32.mrb[0].mxu0
      %v1159 = vadd.f32 %v1107, %v1158
      %v1160 = vpop.f32.mrb[0].mxu0
      %v1161 = vpop.f32.mrb[0].mxu0
      %v1162 = vpop.f32.mrb[0].mxu0
      %1163 = vdwg.mxu0
      %v1164 = vadd.f32 %v489, %v1159
      %v1165 = vsel %vm515, %v1164, 0.0
      %1166 = vadd.xlane.f32.xlu0 %v1165
      %v1167 = vpop.xlane.xlu0 %1166
      %v1168 = vrcp.pop 32.0
      %v1169 = vmul.f32 %v1167, %v1168
      %v1170 = vsub.f32 %v1164, %v1169
      %v1171 = vmul.f32 %v1170, %v1170
      %v1172 = vsel %vm515, %v1171, 0.0
      %1173 = vadd.xlane.f32.xlu0 %v1172
      %v1174 = vpop.xlane.xlu0 %1173
      %v1175 = vmul.f32 %v1174, %v1168
      %v1176 = vadd.f32 %v1175, 1e-05
      %v1177 = vrsqrt.pop %v1176
      %v1178 = vmul.f32 %v1170, %v1177
      %v1179 = vld [vmem:[%s10] sm:$0x1]
      %v1181 = vlaneseq
      %v1182 = vshrl.u32 %v1181, 7
      %v1183 = vsub.s32 0, %v1182
      %v1184 = vrot.slane %v1179, %v1183
      %v1186 = vmul.f32 %v1178, %v1184
      %v1187 = vld [vmem:[%s11] sm:$0x1]
      %v1189 = vlaneseq
      %v1190 = vshrl.u32 %v1189, 7
      %v1191 = vsub.s32 0, %v1190
      %v1192 = vrot.slane %v1187, %v1191
      %v1194 = vadd.f32 %v1186, %v1192
      %1195 = vst.msk [vmem:[%s487] sm:$0xff] %vm515, %v1194
      %p1196 = scmp.lt.s32.totalorder %s27, 1
      %s1197 = scalar_select %p1196, %s27, 1
      %p1198 = scmp.lt.s32.totalorder %s28, 0
      %s1199 = scalar_select %p1198, %s28, 0
      %s1200 = sadd.s32 %s1199, %s1197
      %s1201 = smul.addr %s1200, 8
      %s1202 = scalar_lea.vmem %s12, %s1201
      // Predicated region
      $region69: #{transformer_forward.13} parent=67 // pred_check
        %p1203 = pneg %p329
      $region70: #{transformer_forward.13} parent=67 // pred_check_branch
        %1205 = sbr.rel (%p1203) target = $region72
      $region71: #{transformer_forward.13} parent=67 // pred_region
        _
      $region72: #{transformer_forward.13} parent=67 // pred_fallthru
        _
    $region68: #{transformer_forward.13} parent=5 // pred_fallthru
      _
    %p1206 = scmp.le.s32.totalorder 2, %s18
    // Predicated region
    $region73: #{transformer_forward.13} parent=5 // pred_check
      %p1207 = pneg %p1206
    $region74: #{transformer_forward.13} parent=5 // pred_check_branch
      %1209 = sbr.rel (%p1207) target = $region76
    $region75: #{transformer_forward.13} parent=5 // pred_region
      %s1210 = ssub.s32 %s18, 2
      // Predicated region
      $region77: #{transformer_forward.13} parent=75 // pred_check
        %p1211 = pneg %p335
      $region78: #{transformer_forward.13} parent=75 // pred_check_branch
        %1213 = sbr.rel (%p1211) target = $region80
      $region79: #{transformer_forward.13} parent=75 // pred_region
        %p1214 = scmp.lt.s32.totalorder %s29, 1
        %s1215 = scalar_select %p1214, %s29, 1
        %p1216 = scmp.lt.s32.totalorder %s30, 0
        %s1217 = scalar_select %p1216, %s30, 0
        %s1218 = sadd.s32 %s1217, %s1215
        %s1219 = smul.addr %s1218, 8
        %s1220 = scalar_lea.vmem %s12, %s1219
      $region80: #{transformer_forward.13} parent=75 // pred_fallthru
        _
    $region76: #{transformer_forward.13} parent=5 // pred_fallthru
      _
  $region6: #{transformer_forward.13} parent=0 // loop_footer
    %s22 = sadd.s32 1, %s18
  $region7: #{transformer_forward.13} parent=0 // loop_footer_branch
    %17 = sbr.rel target = $region3
  $region8: #{transformer_forward.13} parent=0 // loop_exit
    _

// kernel: transformer_forward.19
$region0: #{transformer_forward.19}
  #allocation0 [shape = 'u32[]', space=smem, size = 0x4, offset = 0x4, fixed_abs, tag = 'smem constant byte address 0x4 - core index']
  #allocation1 [shape = 'u32[144,128]{1,0:T(1,128)}', space=vmem, size = 0x12000, scoped, tag = 'internal scratch']
  #allocation2 [shape = 'f32[8,32]{1,0:T(8,128)}', space=vmem, size = 0x1000, scoped, tag = 'scratch operand']
  %s0 = inlined_call_operand.vmem [shape: f32[2,8,32], index: 0, kind: input, shape index: {}]
  %s1 = inlined_call_operand.vmem [shape: f32[2,8,32], index: 1, kind: input, shape index: {}]
  %s2 = inlined_call_operand.vmem [shape: f32[2,1,8], index: 2, kind: input, shape index: {}]
  %s3 = inlined_call_operand.vmem [shape: bf16[32,32], index: 3, kind: input, shape index: {}]
  %s4 = inlined_call_operand.vmem [shape: f32[1,32], index: 4, kind: input, shape index: {}]
  %s5 = inlined_call_operand.vmem [shape: bf16[32,64], index: 5, kind: input, shape index: {}]
  %s6 = inlined_call_operand.vmem [shape: f32[1,64], index: 6, kind: input, shape index: {}]
  %s7 = inlined_call_operand.vmem [shape: bf16[32,32], index: 7, kind: input, shape index: {}]
  %s8 = inlined_call_operand.vmem [shape: f32[1,32], index: 8, kind: input, shape index: {}]
  %s9 = inlined_call_operand.vmem [shape: f32[1,32], index: 9, kind: input, shape index: {}]
  %s10 = inlined_call_operand.vmem [shape: f32[1,32], index: 10, kind: input, shape index: {}]
  %s11 = inlined_call_operand.vmem [shape: f32[2,8,32], index: 11, kind: output, shape index: {}]
  %s12 = sld [smem:[#allocation0]]
  $region77: #{transformer_forward.19} parent=0
    _
  %s14 = ssub.s32 1, %s12
  %s15 = scalar_select 0, %s14, %s12
  loop: start=0, step=1, limit=4
  $region2: #{transformer_forward.19} parent=0 // loop_pre_header
    _
  $region3: #{transformer_forward.19} parent=0 // loop_header
    %s17 = sphi 0, %s21
    %p18 = scmp.ge.s32.totalorder %s17, 4
    %s24 = sphi 0, %s36
    %s25 = sphi 0, %s32
    %s26 = sphi 0, %s24
    %s27 = sphi 0, %s25
    %s28 = sphi 0, %s26
    %s29 = sphi 0, %s27
    %s41 = sphi 0, %s43
    %s44 = sphi 0, %s41
    %s45 = sphi 0, %s44
    %s61 = sphi 0, %s45
    %s67 = sphi 0, %s69
    %s70 = sphi 0, %s67
    %s71 = sphi 0, %s70
    %s87 = sphi 0, %s71
    %s93 = sphi 0, %s95
    %s96 = sphi 0, %s93
    %s97 = sphi 0, %s96
    %s113 = sphi 0, %s97
    %s117 = sphi 0, %s117
    %s119 = sphi 0, %s117
    %s120 = sphi 0, %s119
    %s134 = sphi 0, %s120
    %s138 = sphi 0, %s138
    %s140 = sphi 0, %s138
    %s141 = sphi 0, %s140
    %s155 = sphi 0, %s141
    %s159 = sphi 0, %s159
    %s161 = sphi 0, %s159
    %s162 = sphi 0, %s161
    %s176 = sphi 0, %s162
    %s180 = sphi 0, %s180
    %s182 = sphi 0, %s180
    %s183 = sphi 0, %s182
    %s197 = sphi 0, %s183
    %s201 = sphi 0, %s201
    %s203 = sphi 0, %s201
    %s204 = sphi 0, %s203
    %s218 = sphi 0, %s204
    %s222 = sphi 0, %s222
    %s224 = sphi 0, %s222
    %s225 = sphi 0, %s224
    %s239 = sphi 0, %s225
    %s243 = sphi 0, %s243
    %s245 = sphi 0, %s243
    %s246 = sphi 0, %s245
    %s260 = sphi 0, %s246
    %s264 = sphi 0, %s264
    %s266 = sphi 0, %s264
    %s267 = sphi 0, %s266
    %s281 = sphi 0, %s267
    %s289 = sphi 0, %s291
    %s292 = sphi 0, %s289
    %s293 = sphi 0, %s292
    %s309 = sphi 0, %s293
  $region4: #{transformer_forward.19} parent=0 // loop_header_branch
    %20 = sbr.rel (%p18) target = $region8
  $region5: #{transformer_forward.19} parent=0 // loop_body
    %s22 = ssub.s32 %s17, 1
    %s23 = ssub.s32 %s17, 2
    %s30 = sadd.s32 1, %s25
    %p31 = scmp.ge.s32.totalorder %s30, 1
    %s32 = scalar_select %p31, 0, %s30
    %s33 = sadd.s32 1, %s24
    %s34 = scalar_select %p31, %s33, %s24
    %p35 = scmp.ge.s32.totalorder %s34, 2
    %s36 = scalar_select %p35, 0, %s34
    %s37 = ssub.s32 %s24, %s36
    %s38 = ssub.s32 %s25, %s32
    %s39 = sor.u32 %s37, %s38
    %p40 = scmp.eq.s32.totalorder %s39, 0
    %s42 = sadd.s32 %s41, 1
    %s43 = scalar_select %p40, %s41, %s42
    %p46 = pneg %p40
    %p47 = scmp.eq.s32.totalorder %s17, 1
    %p48 = por %p46, %p47
    %p49 = scmp.ne.s32.totalorder %s41, %s44
    %p50 = scmp.eq.s32.totalorder %s17, 0
    %p51 = por %p49, %p50
    %p52 = scmp.ne.s32.totalorder %s41, %s44
    %p53 = scmp.eq.s32.totalorder %s22, 1
    %p54 = por %p52, %p53
    %p55 = scmp.ne.s32.totalorder %s44, %s45
    %p56 = scmp.eq.s32.totalorder %s22, 0
    %p57 = por %p55, %p56
    %p58 = scmp.ne.s32.totalorder %s44, %s45
    %p59 = scmp.eq.s32.totalorder %s23, 1
    %p60 = por %p58, %p59
    %p62 = scmp.ne.s32.totalorder %s45, %s61
    %p63 = scmp.eq.s32.totalorder %s23, 0
    %p64 = por %p62, %p63
    %s65 = ssub.s32 %s24, %s36
    %p66 = scmp.eq.s32.totalorder %s65, 0
    %s68 = sadd.s32 %s67, 1
    %s69 = scalar_select %p66, %s67, %s68
    %p72 = pneg %p66
    %p73 = scmp.eq.s32.totalorder %s17, 1
    %p74 = por %p72, %p73
    %p75 = scmp.ne.s32.totalorder %s67, %s70
    %p76 = scmp.eq.s32.totalorder %s17, 0
    %p77 = por %p75, %p76
    %p78 = scmp.ne.s32.totalorder %s67, %s70
    %p79 = scmp.eq.s32.totalorder %s22, 1
    %p80 = por %p78, %p79
    %p81 = scmp.ne.s32.totalorder %s70, %s71
    %p82 = scmp.eq.s32.totalorder %s22, 0
    %p83 = por %p81, %p82
    %p84 = scmp.ne.s32.totalorder %s70, %s71
    %p85 = scmp.eq.s32.totalorder %s23, 1
    %p86 = por %p84, %p85
    %p88 = scmp.ne.s32.totalorder %s71, %s87
    %p89 = scmp.eq.s32.totalorder %s23, 0
    %p90 = por %p88, %p89
    %s91 = ssub.s32 %s24, %s36
    %p92 = scmp.eq.s32.totalorder %s91, 0
    %s94 = sadd.s32 %s93, 1
    %s95 = scalar_select %p92, %s93, %s94
    %p98 = pneg %p92
    %p99 = scmp.eq.s32.totalorder %s17, 1
    %p100 = por %p98, %p99
    %p101 = scmp.ne.s32.totalorder %s93, %s96
    %p102 = scmp.eq.s32.totalorder %s17, 0
    %p103 = por %p101, %p102
    %p104 = scmp.ne.s32.totalorder %s93, %s96
    %p105 = scmp.eq.s32.totalorder %s22, 1
    %p106 = por %p104, %p105
    %p107 = scmp.ne.s32.totalorder %s96, %s97
    %p108 = scmp.eq.s32.totalorder %s22, 0
    %p109 = por %p107, %p108
    %p110 = scmp.ne.s32.totalorder %s96, %s97
    %p111 = scmp.eq.s32.totalorder %s23, 1
    %p112 = por %p110, %p111
    %p114 = scmp.ne.s32.totalorder %s97, %s113
    %p115 = scmp.eq.s32.totalorder %s23, 0
    %p116 = por %p114, %p115
    %s118 = sadd.s32 %s117, 1
    %p121 = scmp.eq.s32.totalorder %s17, 1
    %p122 = scmp.ne.s32.totalorder %s117, %s119
    %p123 = scmp.eq.s32.totalorder %s17, 0
    %p124 = por %p122, %p123
    %p125 = scmp.ne.s32.totalorder %s117, %s119
    %p126 = scmp.eq.s32.totalorder %s22, 1
    %p127 = por %p125, %p126
    %p128 = scmp.ne.s32.totalorder %s119, %s120
    %p129 = scmp.eq.s32.totalorder %s22, 0
    %p130 = por %p128, %p129
    %p131 = scmp.ne.s32.totalorder %s119, %s120
    %p132 = scmp.eq.s32.totalorder %s23, 1
    %p133 = por %p131, %p132
    %p135 = scmp.ne.s32.totalorder %s120, %s134
    %p136 = scmp.eq.s32.totalorder %s23, 0
    %p137 = por %p135, %p136
    %s139 = sadd.s32 %s138, 1
    %p142 = scmp.eq.s32.totalorder %s17, 1
    %p143 = scmp.ne.s32.totalorder %s138, %s140
    %p144 = scmp.eq.s32.totalorder %s17, 0
    %p145 = por %p143, %p144
    %p146 = scmp.ne.s32.totalorder %s138, %s140
    %p147 = scmp.eq.s32.totalorder %s22, 1
    %p148 = por %p146, %p147
    %p149 = scmp.ne.s32.totalorder %s140, %s141
    %p150 = scmp.eq.s32.totalorder %s22, 0
    %p151 = por %p149, %p150
    %p152 = scmp.ne.s32.totalorder %s140, %s141
    %p153 = scmp.eq.s32.totalorder %s23, 1
    %p154 = por %p152, %p153
    %p156 = scmp.ne.s32.totalorder %s141, %s155
    %p157 = scmp.eq.s32.totalorder %s23, 0
    %p158 = por %p156, %p157
    %s160 = sadd.s32 %s159, 1
    %p163 = scmp.eq.s32.totalorder %s17, 1
    %p164 = scmp.ne.s32.totalorder %s159, %s161
    %p165 = scmp.eq.s32.totalorder %s17, 0
    %p166 = por %p164, %p165
    %p167 = scmp.ne.s32.totalorder %s159, %s161
    %p168 = scmp.eq.s32.totalorder %s22, 1
    %p169 = por %p167, %p168
    %p170 = scmp.ne.s32.totalorder %s161, %s162
    %p171 = scmp.eq.s32.totalorder %s22, 0
    %p172 = por %p170, %p171
    %p173 = scmp.ne.s32.totalorder %s161, %s162
    %p174 = scmp.eq.s32.totalorder %s23, 1
    %p175 = por %p173, %p174
    %p177 = scmp.ne.s32.totalorder %s162, %s176
    %p178 = scmp.eq.s32.totalorder %s23, 0
    %p179 = por %p177, %p178
    %s181 = sadd.s32 %s180, 1
    %p184 = scmp.eq.s32.totalorder %s17, 1
    %p185 = scmp.ne.s32.totalorder %s180, %s182
    %p186 = scmp.eq.s32.totalorder %s17, 0
    %p187 = por %p185, %p186
    %p188 = scmp.ne.s32.totalorder %s180, %s182
    %p189 = scmp.eq.s32.totalorder %s22, 1
    %p190 = por %p188, %p189
    %p191 = scmp.ne.s32.totalorder %s182, %s183
    %p192 = scmp.eq.s32.totalorder %s22, 0
    %p193 = por %p191, %p192
    %p194 = scmp.ne.s32.totalorder %s182, %s183
    %p195 = scmp.eq.s32.totalorder %s23, 1
    %p196 = por %p194, %p195
    %p198 = scmp.ne.s32.totalorder %s183, %s197
    %p199 = scmp.eq.s32.totalorder %s23, 0
    %p200 = por %p198, %p199
    %s202 = sadd.s32 %s201, 1
    %p205 = scmp.eq.s32.totalorder %s17, 1
    %p206 = scmp.ne.s32.totalorder %s201, %s203
    %p207 = scmp.eq.s32.totalorder %s17, 0
    %p208 = por %p206, %p207
    %p209 = scmp.ne.s32.totalorder %s201, %s203
    %p210 = scmp.eq.s32.totalorder %s22, 1
    %p211 = por %p209, %p210
    %p212 = scmp.ne.s32.totalorder %s203, %s204
    %p213 = scmp.eq.s32.totalorder %s22, 0
    %p214 = por %p212, %p213
    %p215 = scmp.ne.s32.totalorder %s203, %s204
    %p216 = scmp.eq.s32.totalorder %s23, 1
    %p217 = por %p215, %p216
    %p219 = scmp.ne.s32.totalorder %s204, %s218
    %p220 = scmp.eq.s32.totalorder %s23, 0
    %p221 = por %p219, %p220
    %s223 = sadd.s32 %s222, 1
    %p226 = scmp.eq.s32.totalorder %s17, 1
    %p227 = scmp.ne.s32.totalorder %s222, %s224
    %p228 = scmp.eq.s32.totalorder %s17, 0
    %p229 = por %p227, %p228
    %p230 = scmp.ne.s32.totalorder %s222, %s224
    %p231 = scmp.eq.s32.totalorder %s22, 1
    %p232 = por %p230, %p231
    %p233 = scmp.ne.s32.totalorder %s224, %s225
    %p234 = scmp.eq.s32.totalorder %s22, 0
    %p235 = por %p233, %p234
    %p236 = scmp.ne.s32.totalorder %s224, %s225
    %p237 = scmp.eq.s32.totalorder %s23, 1
    %p238 = por %p236, %p237
    %p240 = scmp.ne.s32.totalorder %s225, %s239
    %p241 = scmp.eq.s32.totalorder %s23, 0
    %p242 = por %p240, %p241
    %s244 = sadd.s32 %s243, 1
    %p247 = scmp.eq.s32.totalorder %s17, 1
    %p248 = scmp.ne.s32.totalorder %s243, %s245
    %p249 = scmp.eq.s32.totalorder %s17, 0
    %p250 = por %p248, %p249
    %p251 = scmp.ne.s32.totalorder %s243, %s245
    %p252 = scmp.eq.s32.totalorder %s22, 1
    %p253 = por %p251, %p252
    %p254 = scmp.ne.s32.totalorder %s245, %s246
    %p255 = scmp.eq.s32.totalorder %s22, 0
    %p256 = por %p254, %p255
    %p257 = scmp.ne.s32.totalorder %s245, %s246
    %p258 = scmp.eq.s32.totalorder %s23, 1
    %p259 = por %p257, %p258
    %p261 = scmp.ne.s32.totalorder %s246, %s260
    %p262 = scmp.eq.s32.totalorder %s23, 0
    %p263 = por %p261, %p262
    %s265 = sadd.s32 %s264, 1
    %p268 = scmp.eq.s32.totalorder %s17, 1
    %p269 = scmp.ne.s32.totalorder %s264, %s266
    %p270 = scmp.eq.s32.totalorder %s17, 0
    %p271 = por %p269, %p270
    %p272 = scmp.ne.s32.totalorder %s264, %s266
    %p273 = scmp.eq.s32.totalorder %s22, 1
    %p274 = por %p272, %p273
    %p275 = scmp.ne.s32.totalorder %s266, %s267
    %p276 = scmp.eq.s32.totalorder %s22, 0
    %p277 = por %p275, %p276
    %p278 = scmp.ne.s32.totalorder %s266, %s267
    %p279 = scmp.eq.s32.totalorder %s23, 1
    %p280 = por %p278, %p279
    %p282 = scmp.ne.s32.totalorder %s267, %s281
    %p283 = scmp.eq.s32.totalorder %s23, 0
    %p284 = por %p282, %p283
    %s285 = ssub.s32 %s24, %s36
    %s286 = ssub.s32 %s25, %s32
    %s287 = sor.u32 %s285, %s286
    %p288 = scmp.eq.s32.totalorder %s287, 0
    %s290 = sadd.s32 %s289, 1
    %s291 = scalar_select %p288, %s289, %s290
    %p294 = pneg %p288
    %p295 = scmp.eq.s32.totalorder %s17, 1
    %p296 = por %p294, %p295
    %p297 = scmp.ne.s32.totalorder %s289, %s292
    %p298 = scmp.eq.s32.totalorder %s17, 0
    %p299 = por %p297, %p298
    %p300 = scmp.ne.s32.totalorder %s289, %s292
    %p301 = scmp.eq.s32.totalorder %s22, 1
    %p302 = por %p300, %p301
    %p303 = scmp.ne.s32.totalorder %s292, %s293
    %p304 = scmp.eq.s32.totalorder %s22, 0
    %p305 = por %p303, %p304
    %p306 = scmp.ne.s32.totalorder %s292, %s293
    %p307 = scmp.eq.s32.totalorder %s23, 1
    %p308 = por %p306, %p307
    %p310 = scmp.ne.s32.totalorder %s293, %s309
    %p311 = scmp.eq.s32.totalorder %s23, 0
    %p312 = por %p310, %p311
    %p313 = scmp.le.s32.totalorder 1, %s17
    %p314 = scmp.lt.s32.totalorder %s17, 3
    %p315 = pnand %p313, %p314
    %p316 = pneg %p315
    // Predicated region
    $region9: #{transformer_forward.19} parent=5 // pred_check
      _
    $region10: #{transformer_forward.19} parent=5 // pred_check_branch
      %318 = sbr.rel (%p315) target = $region12
    $region11: #{transformer_forward.19} parent=5 // pred_region
      %s319 = ssub.s32 %s17, 1
      // Predicated region
      $region13: #{transformer_forward.19} parent=11 // pred_check
        %p320 = pneg %p130
      $region14: #{transformer_forward.19} parent=11 // pred_check_branch
        %322 = sbr.rel (%p320) target = $region16
      $region15: #{transformer_forward.19} parent=11 // pred_region
        _
      $region16: #{transformer_forward.19} parent=11 // pred_fallthru
        _
      // Predicated region
      $region17: #{transformer_forward.19} parent=11 // pred_check
        %p323 = pneg %p151
      $region18: #{transformer_forward.19} parent=11 // pred_check_branch
        %325 = sbr.rel (%p323) target = $region20
      $region19: #{transformer_forward.19} parent=11 // pred_region
        _
      $region20: #{transformer_forward.19} parent=11 // pred_fallthru
        _
      // Predicated region
      $region21: #{transformer_forward.19} parent=11 // pred_check
        %p326 = pneg %p172
      $region22: #{transformer_forward.19} parent=11 // pred_check_branch
        %328 = sbr.rel (%p326) target = $region24
      $region23: #{transformer_forward.19} parent=11 // pred_region
        _
      $region24: #{transformer_forward.19} parent=11 // pred_fallthru
        _
      // Predicated region
      $region25: #{transformer_forward.19} parent=11 // pred_check
        %p329 = pneg %p193
      $region26: #{transformer_forward.19} parent=11 // pred_check_branch
        %331 = sbr.rel (%p329) target = $region28
      $region27: #{transformer_forward.19} parent=11 // pred_region
        _
      $region28: #{transformer_forward.19} parent=11 // pred_fallthru
        _
      // Predicated region
      $region29: #{transformer_forward.19} parent=11 // pred_check
        %p332 = pneg %p214
      $region30: #{transformer_forward.19} parent=11 // pred_check_branch
        %334 = sbr.rel (%p332) target = $region32
      $region31: #{transformer_forward.19} parent=11 // pred_region
        _
      $region32: #{transformer_forward.19} parent=11 // pred_fallthru
        _
      // Predicated region
      $region33: #{transformer_forward.19} parent=11 // pred_check
        %p335 = pneg %p235
      $region34: #{transformer_forward.19} parent=11 // pred_check_branch
        %337 = sbr.rel (%p335) target = $region36
      $region35: #{transformer_forward.19} parent=11 // pred_region
        _
      $region36: #{transformer_forward.19} parent=11 // pred_fallthru
        _
      // Predicated region
      $region37: #{transformer_forward.19} parent=11 // pred_check
        %p338 = pneg %p256
      $region38: #{transformer_forward.19} parent=11 // pred_check_branch
        %340 = sbr.rel (%p338) target = $region40
      $region39: #{transformer_forward.19} parent=11 // pred_region
        _
      $region40: #{transformer_forward.19} parent=11 // pred_fallthru
        _
      // Predicated region
      $region41: #{transformer_forward.19} parent=11 // pred_check
        %p341 = pneg %p277
      $region42: #{transformer_forward.19} parent=11 // pred_check_branch
        %343 = sbr.rel (%p341) target = $region44
      $region43: #{transformer_forward.19} parent=11 // pred_region
        _
      $region44: #{transformer_forward.19} parent=11 // pred_fallthru
        _
    $region12: #{transformer_forward.19} parent=5 // pred_fallthru
      _
    %p344 = scmp.lt.s32.totalorder %s17, 2
    // Predicated region
    $region45: #{transformer_forward.19} parent=5 // pred_check
      %p345 = pneg %p344
    $region46: #{transformer_forward.19} parent=5 // pred_check_branch
      %347 = sbr.rel (%p345) target = $region48
    $region47: #{transformer_forward.19} parent=5 // pred_region
      // Predicated region
      $region49: #{transformer_forward.19} parent=47 // pred_check
        %p348 = pneg %p51
      $region50: #{transformer_forward.19} parent=47 // pred_check_branch
        %350 = sbr.rel (%p348) target = $region52
      $region51: #{transformer_forward.19} parent=47 // pred_region
        %p351 = scmp.lt.s32.totalorder %s24, 1
        %s352 = scalar_select %p351, %s24, 1
        %p353 = scmp.lt.s32.totalorder %s25, 0
        %s354 = scalar_select %p353, %s25, 0
        %s355 = sadd.s32 %s354, %s352
        %s356 = smul.addr %s355, 8
        %s357 = scalar_lea.vmem %s0, %s356
      $region52: #{transformer_forward.19} parent=47 // pred_fallthru
        _
      // Predicated region
      $region53: #{transformer_forward.19} parent=47 // pred_check
        %p358 = pneg %p77
      $region54: #{transformer_forward.19} parent=47 // pred_check_branch
        %360 = sbr.rel (%p358) target = $region56
      $region55: #{transformer_forward.19} parent=47 // pred_region
        %p361 = scmp.lt.s32.totalorder %s24, 1
        %s362 = scalar_select %p361, %s24, 1
        %s363 = smul.addr %s362, 8
        %s364 = scalar_lea.vmem %s1, %s363
      $region56: #{transformer_forward.19} parent=47 // pred_fallthru
        _
      // Predicated region
      $region57: #{transformer_forward.19} parent=47 // pred_check
        %p365 = pneg %p103
      $region58: #{transformer_forward.19} parent=47 // pred_check_branch
        %367 = sbr.rel (%p365) target = $region60
      $region59: #{transformer_forward.19} parent=47 // pred_region
        %p368 = scmp.lt.s32.totalorder %s24, 1
        %s369 = scalar_select %p368, %s24, 1
        %s370 = scalar_lea.vmem %s2, %s369
      $region60: #{transformer_forward.19} parent=47 // pred_fallthru
        _
    $region48: #{transformer_forward.19} parent=5 // pred_fallthru
      _
    %p371 = scmp.le.s32.totalorder 1, %s17
    %p372 = scmp.lt.s32.totalorder %s17, 3
    %p373 = pnand %p371, %p372
    %p374 = pneg %p373
    // Predicated region
    $region61: #{transformer_forward.19} parent=5 // pred_check
      _
    $region62: #{transformer_forward.19} parent=5 // pred_check_branch
      %376 = sbr.rel (%p373) target = $region64
    $region63: #{transformer_forward.19} parent=5 // pred_region
      %s377 = ssub.s32 %s17, 1
      %p378 = scmp.lt.s32.totalorder %s26, 1
      %s379 = scalar_select %p378, %s26, 1
      %p380 = scmp.lt.s32.totalorder %s27, 0
      %s381 = scalar_select %p380, %s27, 0
      %s382 = sadd.s32 %s381, %s379
      %s383 = smul.addr %s382, 8
      %s384 = scalar_lea.vmem %s0, %s383
      %p385 = pneg %p57
      %p386 = pneg %p54
      %p387 = scmp.lt.s32.totalorder %s26, 1
      %s388 = scalar_select %p387, %s26, 1
      %s389 = smul.addr %s388, 8
      %s390 = scalar_lea.vmem %s1, %s389
      %p391 = pneg %p83
      %p392 = pneg %p80
      %p393 = scmp.lt.s32.totalorder %s26, 1
      %s394 = scalar_select %p393, %s26, 1
      %s395 = scalar_lea.vmem %s2, %s394
      %p396 = pneg %p109
      %p397 = pneg %p106
      %p398 = pneg %p130
      %p399 = pneg %p127
      %p400 = pneg %p151
      %p401 = pneg %p148
      %p402 = pneg %p172
      %p403 = pneg %p169
      %p404 = pneg %p193
      %p405 = pneg %p190
      %p406 = pneg %p214
      %p407 = pneg %p211
      %p408 = pneg %p235
      %p409 = pneg %p232
      %p410 = pneg %p256
      %p411 = pneg %p253
      %p412 = pneg %p277
      %p413 = pneg %p274
      %p414 = pneg %p305
      %p415 = pneg %p302
      %p416 = scmp.lt.s32.totalorder %s26, 1
      %s417 = scalar_select %p416, %s26, 1
      %p418 = scmp.lt.s32.totalorder %s27, 0
      %s419 = scalar_select %p418, %s27, 0
      %s420 = sadd.s32 %s419, %s417
      %s421 = smul.addr %s420, 8
      %s422 = scalar_lea.vmem %s11, %s421
      %p423 = scmp.lt.s32.totalorder %s26, 1
      %s424 = scalar_select %p423, %s26, 1
      %p425 = scmp.lt.s32.totalorder %s27, 0
      %s426 = scalar_select %p425, %s27, 0
      %s427 = sadd.s32 %s426, %s424
      %s428 = smul.addr %s427, 8
      %s429 = scalar_lea.vmem %s0, %s428
      %p430 = scmp.lt.s32.totalorder %s26, 1
      %s431 = scalar_select %p430, %s26, 1
      %s432 = smul.addr %s431, 8
      %s433 = scalar_lea.vmem %s1, %s432
      %p434 = scmp.lt.s32.totalorder %s26, 1
      %s435 = scalar_select %p434, %s26, 1
      %s436 = scalar_lea.vmem %s2, %s435
      %p437 = scmp.lt.s32.totalorder %s26, 1
      %s438 = scalar_select %p437, %s26, 1
      %p439 = scmp.lt.s32.totalorder %s27, 0
      %s440 = scalar_select %p439, %s27, 0
      %s441 = sadd.s32 %s440, %s438
      %s442 = smul.addr %s441, 8
      %s443 = scalar_lea.vmem %s11, %s442
      %v445 = vld [vmem:[%s429] sm:$0xff]
      %v446 = vld [vmem:[%s433] sm:$0xff]
      %v447 = vpack.c.bf16 %v445, %v445
      %v448 = vld [vmem:[%s3] sm:$0xf]
      %v449 = vld [vmem:[%s3 + $0x4] sm:$0xf]
      %v450 = vld [vmem:[%s3 + $0x8] sm:$0xf]
      %v451 = vld [vmem:[%s3 + $0xc] sm:$0xf]
      %v452 = vld [vmem:[%s4] sm:$0x1]
      %v454 = vlaneseq
      %v455 = vshrl.u32 %v454, 7
      %v456 = vsub.s32 0, %v455
      %v457 = vrot.slane %v452, %v456
      %v463 = vunpack.c.l.b16 %v448
      %v464 = vunpack.c.l.b16 %v449
      %v465 = vunpack.c.l.b16 %v450
      %v466 = vunpack.c.l.b16 %v451
      %v467 = vpack.c.b16 %v464, %v463
      %v468 = vpack.c.b16 %v466, %v465
      %vm471 = vcmask 261120
      %v473 = vsel %vm471, %v447, 0
      %475 = vmatprep.subr.bf16.mxu0 0
      %476 = vmatpush1.bf16.msra.mxu0 %v467
      %477 = vmatprep.subr.bf16.mxu0 0
      %478 = vmatpush1.bf16.msra.mxu0 %v468
      %479 = vmatprep.subr.bf16.mxu0 0
      %480 = vmatpush1.bf16.msra.mxu0 0
      %481 = vmatprep.subr.bf16.mxu0 0
      %482 = vmatpush1.bf16.msra.mxu0 0
      %483 = vmatprep.subr.bf16.mxu0 0
      %484 = vmatpush1.bf16.msra.mxu0 0
      %485 = vmatprep.subr.bf16.mxu0 0
      %486 = vmatpush1.bf16.msra.mxu0 0
      %487 = vmatprep.subr.bf16.mxu0 0
      %488 = vmatpush1.bf16.msra.mxu0 0
      %489 = vmatprep.subr.bf16.mxu0 0
      %490 = vmatpush1.bf16.msra.mxu0 0
      %491 = vmatprep.subr.bf16.mxu0 0
      %492 = vmatpush1.bf16.msra.mxu0 0
      %493 = vmatprep.subr.bf16.mxu0 0
      %494 = vmatpush1.bf16.msra.mxu0 0
      %495 = vmatprep.subr.bf16.mxu0 0
      %496 = vmatpush1.bf16.msra.mxu0 0
      %497 = vmatprep.subr.bf16.mxu0 0
      %498 = vmatpush1.bf16.msra.mxu0 0
      %499 = vmatprep.subr.bf16.mxu0 0
      %500 = vmatpush1.bf16.msra.mxu0 0
      %501 = vmatprep.subr.bf16.mxu0 0
      %502 = vmatpush1.bf16.msra.mxu0 0
      %503 = vmatprep.subr.bf16.mxu0 0
      %504 = vmatpush1.bf16.msra.mxu0 0
      %505 = vmatprep.subr.bf16.mxu0 0
      %506 = vmatpush1.bf16.msra.mxu0 0
      %507 = vmatprep.mubr.bf16.mxu0 0
      %508 = vmatmul.mubr.bf16.gmra.mrb[0].mxu0 %v473
      %v509 = vpop.f32.mrb[0].mxu0
      %v510 = vadd.f32 %v457, %v509
      %v511 = vpop.f32.mrb[0].mxu0
      %v512 = vpop.f32.mrb[0].mxu0
      %v513 = vpop.f32.mrb[0].mxu0
      %514 = vdwg.mxu0
      %v515 = vpack.c.bf16 %v446, %v446
      %v516 = vld [vmem:[%s5] sm:$0xf]
      %v517 = vld [vmem:[%s5 + $0x4] sm:$0xf]
      %v518 = vld [vmem:[%s5 + $0x8] sm:$0xf]
      %v519 = vld [vmem:[%s5 + $0xc] sm:$0xf]
      %v520 = vld [vmem:[%s6] sm:$0x1]
      %v522 = vlaneseq
      %v523 = vshrl.u32 %v522, 7
      %v524 = vsub.s32 0, %v523
      %v525 = vrot.slane %v520, %v524
      %v531 = vunpack.c.l.b16 %v516
      %v532 = vunpack.c.l.b16 %v517
      %v533 = vunpack.c.l.b16 %v518
      %v534 = vunpack.c.l.b16 %v519
      %v535 = vpack.c.b16 %v532, %v531
      %v536 = vpack.c.b16 %v534, %v533
      %v540 = vsel %vm471, %v515, 0
      %542 = vmatprep.subr.bf16.mxu0 0
      %543 = vmatpush1.bf16.msra.mxu0 %v535
      %544 = vmatprep.subr.bf16.mxu0 0
      %545 = vmatpush1.bf16.msra.mxu0 %v536
      %546 = vmatprep.subr.bf16.mxu0 0
      %547 = vmatpush1.bf16.msra.mxu0 0
      %548 = vmatprep.subr.bf16.mxu0 0
      %549 = vmatpush1.bf16.msra.mxu0 0
      %550 = vmatprep.subr.bf16.mxu0 0
      %551 = vmatpush1.bf16.msra.mxu0 0
      %552 = vmatprep.subr.bf16.mxu0 0
      %553 = vmatpush1.bf16.msra.mxu0 0
      %554 = vmatprep.subr.bf16.mxu0 0
      %555 = vmatpush1.bf16.msra.mxu0 0
      %556 = vmatprep.subr.bf16.mxu0 0
      %557 = vmatpush1.bf16.msra.mxu0 0
      %558 = vmatprep.subr.bf16.mxu0 0
      %559 = vmatpush1.bf16.msra.mxu0 0
      %560 = vmatprep.subr.bf16.mxu0 0
      %561 = vmatpush1.bf16.msra.mxu0 0
      %562 = vmatprep.subr.bf16.mxu0 0
      %563 = vmatpush1.bf16.msra.mxu0 0
      %564 = vmatprep.subr.bf16.mxu0 0
      %565 = vmatpush1.bf16.msra.mxu0 0
      %566 = vmatprep.subr.bf16.mxu0 0
      %567 = vmatpush1.bf16.msra.mxu0 0
      %568 = vmatprep.subr.bf16.mxu0 0
      %569 = vmatpush1.bf16.msra.mxu0 0
      %570 = vmatprep.subr.bf16.mxu0 0
      %571 = vmatpush1.bf16.msra.mxu0 0
      %572 = vmatprep.subr.bf16.mxu0 0
      %573 = vmatpush1.bf16.msra.mxu0 0
      %574 = vmatprep.mubr.bf16.mxu0 0
      %575 = vmatmul.mubr.bf16.gmra.mrb[0].mxu0 %v540
      %v576 = vpop.f32.mrb[0].mxu0
      %v577 = vadd.f32 %v525, %v576
      %v578 = vpop.f32.mrb[0].mxu0
      %v579 = vpop.f32.mrb[0].mxu0
      %v580 = vpop.f32.mrb[0].mxu0
      %581 = vdwg.mxu0
      %v582 = vld [vmem:[%s436] sm:$0x1]
      %v583 = vpack.c.bf16 %v510, %v510
      %v584 = vpack.c.bf16 %v577, %v577
      %v586 = vlaneseq
      %v587 = vshrl.u32 %v586, 7
      %v588 = vsub.s32 0, %v587
      %v589 = vrot.slane %v582, %v588
      %vm591 = vcmask 64512
      %v593 = vsel %vm591, %v583, 0
      %v596 = vsel %vm591, %v584, 0
      %598 = vmatprep.subr.bf16.mxu0 0
      %599 = vmatpush1.bf16.xpose.msra.mxu0 %v596
      %600 = vmatprep.subr.bf16.mxu0 0
      %601 = vmatpush1.bf16.xpose.msra.mxu0 0
      %602 = vmatprep.subr.bf16.mxu0 0
      %603 = vmatpush1.bf16.xpose.msra.mxu0 0
      %604 = vmatprep.subr.bf16.mxu0 0
      %605 = vmatpush1.bf16.xpose.msra.mxu0 0
      %606 = vmatprep.subr.bf16.mxu0 0
      %607 = vmatpush1.bf16.xpose.msra.mxu0 0
      %608 = vmatprep.subr.bf16.mxu0 0
      %609 = vmatpush1.bf16.xpose.msra.mxu0 0
      %610 = vmatprep.subr.bf16.mxu0 0
      %611 = vmatpush1.bf16.xpose.msra.mxu0 0
      %612 = vmatprep.subr.bf16.mxu0 0
      %613 = vmatpush1.bf16.xpose.msra.mxu0 0
      %614 = vmatprep.subr.bf16.mxu0 0
      %615 = vmatpush1.bf16.xpose.msra.mxu0 0
      %616 = vmatprep.subr.bf16.mxu0 0
      %617 = vmatpush1.bf16.xpose.msra.mxu0 0
      %618 = vmatprep.subr.bf16.mxu0 0
      %619 = vmatpush1.bf16.xpose.msra.mxu0 0
      %620 = vmatprep.subr.bf16.mxu0 0
      %621 = vmatpush1.bf16.xpose.msra.mxu0 0
      %622 = vmatprep.subr.bf16.mxu0 0
      %623 = vmatpush1.bf16.xpose.msra.mxu0 0
      %624 = vmatprep.subr.bf16.mxu0 0
      %625 = vmatpush1.bf16.xpose.msra.mxu0 0
      %626 = vmatprep.subr.bf16.mxu0 0
      %627 = vmatpush1.bf16.xpose.msra.mxu0 0
      %628 = vmatprep.subr.bf16.mxu0 0
      %629 = vmatpush1.bf16.xpose.msra.mxu0 0
      %630 = vmatprep.mubr.bf16.mxu0 0
      %631 = vmatmul.mubr.bf16.gmra.mrb[0].mxu0 %v593
      %v632 = vpop.f32.mrb[0].mxu0
      %v633 = vadd.f32 %v589, %v632
      %v634 = vpop.f32.mrb[0].mxu0
      %v635 = vpop.f32.mrb[0].mxu0
      %v636 = vpop.f32.mrb[0].mxu0
      %637 = vdwg.mxu0
      %v638 = vsel %vm591, %v633, -inf
      %639 = vmax.xlane.f32.xlu0 %v638
      %v640 = vpop.xlane.xlu0 %639
      %v641 = vsub.f32 %v633, %v640
      %v642 = vmul.f32 %v641, 1.442695
      %v643 = vpow.pop %v642
      %v644 = vsel %vm591, %v643, 0.0
      %645 = vadd.xlane.f32.xlu0 %v644
      %v646 = vpop.xlane.xlu0 %645
      %v647 = vrcp.pop %v646
      %v648 = vmul.f32 %v643, %v647
      %v649 = vpack.c.bf16 %v648, %v648
      %651 = vrot.lane.b32.xlu0 %v584, 96
      %v652 = vpop.permute.xlu0 %651
      %v654 = vsel %vm591, %v649, 0
      %vm656 = vcmask 1043456
      %v658 = vsel %vm656, %v652, 0
      %660 = vmatprep.subr.bf16.mxu0 0
      %661 = vmatpush1.bf16.msra.mxu0 %v658
      %662 = vmatprep.subr.bf16.mxu0 0
      %663 = vmatpush1.bf16.msra.mxu0 0
      %664 = vmatprep.subr.bf16.mxu0 0
      %665 = vmatpush1.bf16.msra.mxu0 0
      %666 = vmatprep.subr.bf16.mxu0 0
      %667 = vmatpush1.bf16.msra.mxu0 0
      %668 = vmatprep.subr.bf16.mxu0 0
      %669 = vmatpush1.bf16.msra.mxu0 0
      %670 = vmatprep.subr.bf16.mxu0 0
      %671 = vmatpush1.bf16.msra.mxu0 0
      %672 = vmatprep.subr.bf16.mxu0 0
      %673 = vmatpush1.bf16.msra.mxu0 0
      %674 = vmatprep.subr.bf16.mxu0 0
      %675 = vmatpush1.bf16.msra.mxu0 0
      %676 = vmatprep.subr.bf16.mxu0 0
      %677 = vmatpush1.bf16.msra.mxu0 0
      %678 = vmatprep.subr.bf16.mxu0 0
      %679 = vmatpush1.bf16.msra.mxu0 0
      %680 = vmatprep.subr.bf16.mxu0 0
      %681 = vmatpush1.bf16.msra.mxu0 0
      %682 = vmatprep.subr.bf16.mxu0 0
      %683 = vmatpush1.bf16.msra.mxu0 0
      %684 = vmatprep.subr.bf16.mxu0 0
      %685 = vmatpush1.bf16.msra.mxu0 0
      %686 = vmatprep.subr.bf16.mxu0 0
      %687 = vmatpush1.bf16.msra.mxu0 0
      %688 = vmatprep.subr.bf16.mxu0 0
      %689 = vmatpush1.bf16.msra.mxu0 0
      %690 = vmatprep.subr.bf16.mxu0 0
      %691 = vmatpush1.bf16.msra.mxu0 0
      %692 = vmatprep.mubr.bf16.mxu0 0
      %693 = vmatmul.mubr.bf16.gmra.mrb[0].mxu0 %v654
      %v694 = vpop.f32.mrb[0].mxu0
      %v695 = vadd.f32 0.0, %v694
      %v696 = vpop.f32.mrb[0].mxu0
      %v697 = vpop.f32.mrb[0].mxu0
      %v698 = vpop.f32.mrb[0].mxu0
      %699 = vdwg.mxu0
      %700 = vst.msk [vmem:[#allocation2] sm:$0xff] %vm591, %v695
      %702 = vrot.lane.b32.xlu0 %v583, 120
      %v703 = vpop.permute.xlu0 %702
      %704 = vrot.lane.b32.xlu0 %v584, 120
      %v705 = vpop.permute.xlu0 %704
      %v707 = vsel %vm591, %v703, 0
      %v710 = vsel %vm591, %v705, 0
      %712 = vmatprep.subr.bf16.mxu0 0
      %713 = vmatpush1.bf16.xpose.msra.mxu0 %v710
      %714 = vmatprep.subr.bf16.mxu0 0
      %715 = vmatpush1.bf16.xpose.msra.mxu0 0
      %716 = vmatprep.subr.bf16.mxu0 0
      %717 = vmatpush1.bf16.xpose.msra.mxu0 0
      %718 = vmatprep.subr.bf16.mxu0 0
      %719 = vmatpush1.bf16.xpose.msra.mxu0 0
      %720 = vmatprep.subr.bf16.mxu0 0
      %721 = vmatpush1.bf16.xpose.msra.mxu0 0
      %722 = vmatprep.subr.bf16.mxu0 0
      %723 = vmatpush1.bf16.xpose.msra.mxu0 0
      %724 = vmatprep.subr.bf16.mxu0 0
      %725 = vmatpush1.bf16.xpose.msra.mxu0 0
      %726 = vmatprep.subr.bf16.mxu0 0
      %727 = vmatpush1.bf16.xpose.msra.mxu0 0
      %728 = vmatprep.subr.bf16.mxu0 0
      %729 = vmatpush1.bf16.xpose.msra.mxu0 0
      %730 = vmatprep.subr.bf16.mxu0 0
      %731 = vmatpush1.bf16.xpose.msra.mxu0 0
      %732 = vmatprep.subr.bf16.mxu0 0
      %733 = vmatpush1.bf16.xpose.msra.mxu0 0
      %734 = vmatprep.subr.bf16.mxu0 0
      %735 = vmatpush1.bf16.xpose.msra.mxu0 0
      %736 = vmatprep.subr.bf16.mxu0 0
      %737 = vmatpush1.bf16.xpose.msra.mxu0 0
      %738 = vmatprep.subr.bf16.mxu0 0
      %739 = vmatpush1.bf16.xpose.msra.mxu0 0
      %740 = vmatprep.subr.bf16.mxu0 0
      %741 = vmatpush1.bf16.xpose.msra.mxu0 0
      %742 = vmatprep.subr.bf16.mxu0 0
      %743 = vmatpush1.bf16.xpose.msra.mxu0 0
      %744 = vmatprep.mubr.bf16.mxu0 0
      %745 = vmatmul.mubr.bf16.gmra.mrb[0].mxu0 %v707
      %v746 = vpop.f32.mrb[0].mxu0
      %v747 = vadd.f32 %v589, %v746
      %v748 = vpop.f32.mrb[0].mxu0
      %v749 = vpop.f32.mrb[0].mxu0
      %v750 = vpop.f32.mrb[0].mxu0
      %751 = vdwg.mxu0
      %v752 = vsel %vm591, %v747, -inf
      %753 = vmax.xlane.f32.xlu0 %v752
      %v754 = vpop.xlane.xlu0 %753
      %v755 = vsub.f32 %v747, %v754
      %v756 = vmul.f32 %v755, 1.442695
      %v757 = vpow.pop %v756
      %v758 = vsel %vm591, %v757, 0.0
      %759 = vadd.xlane.f32.xlu0 %v758
      %v760 = vpop.xlane.xlu0 %759
      %v761 = vrcp.pop %v760
      %v762 = vmul.f32 %v757, %v761
      %v763 = vpack.c.bf16 %v762, %v762
      %764 = vrot.lane.b32.xlu0 %v584, 88
      %v765 = vpop.permute.xlu0 %764
      %v767 = vsel %vm591, %v763, 0
      %v770 = vsel %vm656, %v765, 0
      %772 = vmatprep.subr.bf16.mxu0 0
      %773 = vmatpush1.bf16.msra.mxu0 %v770
      %774 = vmatprep.subr.bf16.mxu0 0
      %775 = vmatpush1.bf16.msra.mxu0 0
      %776 = vmatprep.subr.bf16.mxu0 0
      %777 = vmatpush1.bf16.msra.mxu0 0
      %778 = vmatprep.subr.bf16.mxu0 0
      %779 = vmatpush1.bf16.msra.mxu0 0
      %780 = vmatprep.subr.bf16.mxu0 0
      %781 = vmatpush1.bf16.msra.mxu0 0
      %782 = vmatprep.subr.bf16.mxu0 0
      %783 = vmatpush1.bf16.msra.mxu0 0
      %784 = vmatprep.subr.bf16.mxu0 0
      %785 = vmatpush1.bf16.msra.mxu0 0
      %786 = vmatprep.subr.bf16.mxu0 0
      %787 = vmatpush1.bf16.msra.mxu0 0
      %788 = vmatprep.subr.bf16.mxu0 0
      %789 = vmatpush1.bf16.msra.mxu0 0
      %790 = vmatprep.subr.bf16.mxu0 0
      %791 = vmatpush1.bf16.msra.mxu0 0
      %792 = vmatprep.subr.bf16.mxu0 0
      %793 = vmatpush1.bf16.msra.mxu0 0
      %794 = vmatprep.subr.bf16.mxu0 0
      %795 = vmatpush1.bf16.msra.mxu0 0
      %796 = vmatprep.subr.bf16.mxu0 0
      %797 = vmatpush1.bf16.msra.mxu0 0
      %798 = vmatprep.subr.bf16.mxu0 0
      %799 = vmatpush1.bf16.msra.mxu0 0
      %800 = vmatprep.subr.bf16.mxu0 0
      %801 = vmatpush1.bf16.msra.mxu0 0
      %802 = vmatprep.subr.bf16.mxu0 0
      %803 = vmatpush1.bf16.msra.mxu0 0
      %804 = vmatprep.mubr.bf16.mxu0 0
      %805 = vmatmul.mubr.bf16.gmra.mrb[0].mxu0 %v767
      %v806 = vpop.f32.mrb[0].mxu0
      %v807 = vadd.f32 0.0, %v806
      %v808 = vpop.f32.mrb[0].mxu0
      %v809 = vpop.f32.mrb[0].mxu0
      %v810 = vpop.f32.mrb[0].mxu0
      %811 = vdwg.mxu0
      %813 = vrot.lane.b32.xlu0 %v807, 8
      %v814 = vpop.permute.xlu0 %813
      %vm816 = vcmask 130112
      %817 = vst.msk [vmem:[#allocation2] sm:$0xff] %vm816, %v814
      %818 = vrot.lane.b32.xlu0 %v583, 112
      %v819 = vpop.permute.xlu0 %818
      %820 = vrot.lane.b32.xlu0 %v584, 112
      %v821 = vpop.permute.xlu0 %820
      %v823 = vsel %vm591, %v819, 0
      %v826 = vsel %vm591, %v821, 0
      %828 = vmatprep.subr.bf16.mxu0 0
      %829 = vmatpush1.bf16.xpose.msra.mxu0 %v826
      %830 = vmatprep.subr.bf16.mxu0 0
      %831 = vmatpush1.bf16.xpose.msra.mxu0 0
      %832 = vmatprep.subr.bf16.mxu0 0
      %833 = vmatpush1.bf16.xpose.msra.mxu0 0
      %834 = vmatprep.subr.bf16.mxu0 0
      %835 = vmatpush1.bf16.xpose.msra.mxu0 0
      %836 = vmatprep.subr.bf16.mxu0 0
      %837 = vmatpush1.bf16.xpose.msra.mxu0 0
      %838 = vmatprep.subr.bf16.mxu0 0
      %839 = vmatpush1.bf16.xpose.msra.mxu0 0
      %840 = vmatprep.subr.bf16.mxu0 0
      %841 = vmatpush1.bf16.xpose.msra.mxu0 0
      %842 = vmatprep.subr.bf16.mxu0 0
      %843 = vmatpush1.bf16.xpose.msra.mxu0 0
      %844 = vmatprep.subr.bf16.mxu0 0
      %845 = vmatpush1.bf16.xpose.msra.mxu0 0
      %846 = vmatprep.subr.bf16.mxu0 0
      %847 = vmatpush1.bf16.xpose.msra.mxu0 0
      %848 = vmatprep.subr.bf16.mxu0 0
      %849 = vmatpush1.bf16.xpose.msra.mxu0 0
      %850 = vmatprep.subr.bf16.mxu0 0
      %851 = vmatpush1.bf16.xpose.msra.mxu0 0
      %852 = vmatprep.subr.bf16.mxu0 0
      %853 = vmatpush1.bf16.xpose.msra.mxu0 0
      %854 = vmatprep.subr.bf16.mxu0 0
      %855 = vmatpush1.bf16.xpose.msra.mxu0 0
      %856 = vmatprep.subr.bf16.mxu0 0
      %857 = vmatpush1.bf16.xpose.msra.mxu0 0
      %858 = vmatprep.subr.bf16.mxu0 0
      %859 = vmatpush1.bf16.xpose.msra.mxu0 0
      %860 = vmatprep.mubr.bf16.mxu0 0
      %861 = vmatmul.mubr.bf16.gmra.mrb[0].mxu0 %v823
      %v862 = vpop.f32.mrb[0].mxu0
      %v863 = vadd.f32 %v589, %v862
      %v864 = vpop.f32.mrb[0].mxu0
      %v865 = vpop.f32.mrb[0].mxu0
      %v866 = vpop.f32.mrb[0].mxu0
      %867 = vdwg.mxu0
      %v868 = vsel %vm591, %v863, -inf
      %869 = vmax.xlane.f32.xlu0 %v868
      %v870 = vpop.xlane.xlu0 %869
      %v871 = vsub.f32 %v863, %v870
      %v872 = vmul.f32 %v871, 1.442695
      %v873 = vpow.pop %v872
      %v874 = vsel %vm591, %v873, 0.0
      %875 = vadd.xlane.f32.xlu0 %v874
      %v876 = vpop.xlane.xlu0 %875
      %v877 = vrcp.pop %v876
      %v878 = vmul.f32 %v873, %v877
      %v879 = vpack.c.bf16 %v878, %v878
      %880 = vrot.lane.b32.xlu0 %v584, 80
      %v881 = vpop.permute.xlu0 %880
      %v883 = vsel %vm591, %v879, 0
      %v886 = vsel %vm656, %v881, 0
      %888 = vmatprep.subr.bf16.mxu0 0
      %889 = vmatpush1.bf16.msra.mxu0 %v886
      %890 = vmatprep.subr.bf16.mxu0 0
      %891 = vmatpush1.bf16.msra.mxu0 0
      %892 = vmatprep.subr.bf16.mxu0 0
      %893 = vmatpush1.bf16.msra.mxu0 0
      %894 = vmatprep.subr.bf16.mxu0 0
      %895 = vmatpush1.bf16.msra.mxu0 0
      %896 = vmatprep.subr.bf16.mxu0 0
      %897 = vmatpush1.bf16.msra.mxu0 0
      %898 = vmatprep.subr.bf16.mxu0 0
      %899 = vmatpush1.bf16.msra.mxu0 0
      %900 = vmatprep.subr.bf16.mxu0 0
      %901 = vmatpush1.bf16.msra.mxu0 0
      %902 = vmatprep.subr.bf16.mxu0 0
      %903 = vmatpush1.bf16.msra.mxu0 0
      %904 = vmatprep.subr.bf16.mxu0 0
      %905 = vmatpush1.bf16.msra.mxu0 0
      %906 = vmatprep.subr.bf16.mxu0 0
      %907 = vmatpush1.bf16.msra.mxu0 0
      %908 = vmatprep.subr.bf16.mxu0 0
      %909 = vmatpush1.bf16.msra.mxu0 0
      %910 = vmatprep.subr.bf16.mxu0 0
      %911 = vmatpush1.bf16.msra.mxu0 0
      %912 = vmatprep.subr.bf16.mxu0 0
      %913 = vmatpush1.bf16.msra.mxu0 0
      %914 = vmatprep.subr.bf16.mxu0 0
      %915 = vmatpush1.bf16.msra.mxu0 0
      %916 = vmatprep.subr.bf16.mxu0 0
      %917 = vmatpush1.bf16.msra.mxu0 0
      %918 = vmatprep.subr.bf16.mxu0 0
      %919 = vmatpush1.bf16.msra.mxu0 0
      %920 = vmatprep.mubr.bf16.mxu0 0
      %921 = vmatmul.mubr.bf16.gmra.mrb[0].mxu0 %v883
      %v922 = vpop.f32.mrb[0].mxu0
      %v923 = vadd.f32 0.0, %v922
      %v924 = vpop.f32.mrb[0].mxu0
      %v925 = vpop.f32.mrb[0].mxu0
      %v926 = vpop.f32.mrb[0].mxu0
      %927 = vdwg.mxu0
      %929 = vrot.lane.b32.xlu0 %v923, 16
      %v930 = vpop.permute.xlu0 %929
      %vm932 = vcmask 195712
      %933 = vst.msk [vmem:[#allocation2] sm:$0xff] %vm932, %v930
      %934 = vrot.lane.b32.xlu0 %v583, 104
      %v935 = vpop.permute.xlu0 %934
      %936 = vrot.lane.b32.xlu0 %v584, 104
      %v937 = vpop.permute.xlu0 %936
      %v939 = vsel %vm591, %v935, 0
      %v942 = vsel %vm591, %v937, 0
      %944 = vmatprep.subr.bf16.mxu0 0
      %945 = vmatpush1.bf16.xpose.msra.mxu0 %v942
      %946 = vmatprep.subr.bf16.mxu0 0
      %947 = vmatpush1.bf16.xpose.msra.mxu0 0
      %948 = vmatprep.subr.bf16.mxu0 0
      %949 = vmatpush1.bf16.xpose.msra.mxu0 0
      %950 = vmatprep.subr.bf16.mxu0 0
      %951 = vmatpush1.bf16.xpose.msra.mxu0 0
      %952 = vmatprep.subr.bf16.mxu0 0
      %953 = vmatpush1.bf16.xpose.msra.mxu0 0
      %954 = vmatprep.subr.bf16.mxu0 0
      %955 = vmatpush1.bf16.xpose.msra.mxu0 0
      %956 = vmatprep.subr.bf16.mxu0 0
      %957 = vmatpush1.bf16.xpose.msra.mxu0 0
      %958 = vmatprep.subr.bf16.mxu0 0
      %959 = vmatpush1.bf16.xpose.msra.mxu0 0
      %960 = vmatprep.subr.bf16.mxu0 0
      %961 = vmatpush1.bf16.xpose.msra.mxu0 0
      %962 = vmatprep.subr.bf16.mxu0 0
      %963 = vmatpush1.bf16.xpose.msra.mxu0 0
      %964 = vmatprep.subr.bf16.mxu0 0
      %965 = vmatpush1.bf16.xpose.msra.mxu0 0
      %966 = vmatprep.subr.bf16.mxu0 0
      %967 = vmatpush1.bf16.xpose.msra.mxu0 0
      %968 = vmatprep.subr.bf16.mxu0 0
      %969 = vmatpush1.bf16.xpose.msra.mxu0 0
      %970 = vmatprep.subr.bf16.mxu0 0
      %971 = vmatpush1.bf16.xpose.msra.mxu0 0
      %972 = vmatprep.subr.bf16.mxu0 0
      %973 = vmatpush1.bf16.xpose.msra.mxu0 0
      %974 = vmatprep.subr.bf16.mxu0 0
      %975 = vmatpush1.bf16.xpose.msra.mxu0 0
      %976 = vmatprep.mubr.bf16.mxu0 0
      %977 = vmatmul.mubr.bf16.gmra.mrb[0].mxu0 %v939
      %v978 = vpop.f32.mrb[0].mxu0
      %v979 = vadd.f32 %v589, %v978
      %v980 = vpop.f32.mrb[0].mxu0
      %v981 = vpop.f32.mrb[0].mxu0
      %v982 = vpop.f32.mrb[0].mxu0
      %983 = vdwg.mxu0
      %v984 = vsel %vm591, %v979, -inf
      %985 = vmax.xlane.f32.xlu0 %v984
      %v986 = vpop.xlane.xlu0 %985
      %v987 = vsub.f32 %v979, %v986
      %v988 = vmul.f32 %v987, 1.442695
      %v989 = vpow.pop %v988
      %v990 = vsel %vm591, %v989, 0.0
      %991 = vadd.xlane.f32.xlu0 %v990
      %v992 = vpop.xlane.xlu0 %991
      %v993 = vrcp.pop %v992
      %v994 = vmul.f32 %v989, %v993
      %v995 = vpack.c.bf16 %v994, %v994
      %996 = vrot.lane.b32.xlu0 %v584, 72
      %v997 = vpop.permute.xlu0 %996
      %v999 = vsel %vm591, %v995, 0
      %v1002 = vsel %vm656, %v997, 0
      %1004 = vmatprep.subr.bf16.mxu0 0
      %1005 = vmatpush1.bf16.msra.mxu0 %v1002
      %1006 = vmatprep.subr.bf16.mxu0 0
      %1007 = vmatpush1.bf16.msra.mxu0 0
      %1008 = vmatprep.subr.bf16.mxu0 0
      %1009 = vmatpush1.bf16.msra.mxu0 0
      %1010 = vmatprep.subr.bf16.mxu0 0
      %1011 = vmatpush1.bf16.msra.mxu0 0
      %1012 = vmatprep.subr.bf16.mxu0 0
      %1013 = vmatpush1.bf16.msra.mxu0 0
      %1014 = vmatprep.subr.bf16.mxu0 0
      %1015 = vmatpush1.bf16.msra.mxu0 0
      %1016 = vmatprep.subr.bf16.mxu0 0
      %1017 = vmatpush1.bf16.msra.mxu0 0
      %1018 = vmatprep.subr.bf16.mxu0 0
      %1019 = vmatpush1.bf16.msra.mxu0 0
      %1020 = vmatprep.subr.bf16.mxu0 0
      %1021 = vmatpush1.bf16.msra.mxu0 0
      %1022 = vmatprep.subr.bf16.mxu0 0
      %1023 = vmatpush1.bf16.msra.mxu0 0
      %1024 = vmatprep.subr.bf16.mxu0 0
      %1025 = vmatpush1.bf16.msra.mxu0 0
      %1026 = vmatprep.subr.bf16.mxu0 0
      %1027 = vmatpush1.bf16.msra.mxu0 0
      %1028 = vmatprep.subr.bf16.mxu0 0
      %1029 = vmatpush1.bf16.msra.mxu0 0
      %1030 = vmatprep.subr.bf16.mxu0 0
      %1031 = vmatpush1.bf16.msra.mxu0 0
      %1032 = vmatprep.subr.bf16.mxu0 0
      %1033 = vmatpush1.bf16.msra.mxu0 0
      %1034 = vmatprep.subr.bf16.mxu0 0
      %1035 = vmatpush1.bf16.msra.mxu0 0
      %1036 = vmatprep.mubr.bf16.mxu0 0
      %1037 = vmatmul.mubr.bf16.gmra.mrb[0].mxu0 %v999
      %v1038 = vpop.f32.mrb[0].mxu0
      %v1039 = vadd.f32 0.0, %v1038
      %v1040 = vpop.f32.mrb[0].mxu0
      %v1041 = vpop.f32.mrb[0].mxu0
      %v1042 = vpop.f32.mrb[0].mxu0
      %1043 = vdwg.mxu0
      %1045 = vrot.lane.b32.xlu0 %v1039, 24
      %v1046 = vpop.permute.xlu0 %1045
      %vm1048 = vcmask 261312
      %1049 = vst.msk [vmem:[#allocation2] sm:$0xff] %vm1048, %v1046
      %v1050 = vld [vmem:[#allocation2] sm:$0xff]
      %v1051 = vpack.c.bf16 %v1050, %v1050
      %v1052 = vld [vmem:[%s7] sm:$0xf]
      %v1053 = vld [vmem:[%s7 + $0x4] sm:$0xf]
      %v1054 = vld [vmem:[%s7 + $0x8] sm:$0xf]
      %v1055 = vld [vmem:[%s7 + $0xc] sm:$0xf]
      %v1056 = vld [vmem:[%s8] sm:$0x1]
      %v1058 = vlaneseq
      %v1059 = vshrl.u32 %v1058, 7
      %v1060 = vsub.s32 0, %v1059
      %v1061 = vrot.slane %v1056, %v1060
      %v1067 = vunpack.c.l.b16 %v1052
      %v1068 = vunpack.c.l.b16 %v1053
      %v1069 = vunpack.c.l.b16 %v1054
      %v1070 = vunpack.c.l.b16 %v1055
      %v1071 = vpack.c.b16 %v1068, %v1067
      %v1072 = vpack.c.b16 %v1070, %v1069
      %v1076 = vsel %vm471, %v1051, 0
      %1078 = vmatprep.subr.bf16.mxu0 0
      %1079 = vmatpush1.bf16.msra.mxu0 %v1071
      %1080 = vmatprep.subr.bf16.mxu0 0
      %1081 = vmatpush1.bf16.msra.mxu0 %v1072
      %1082 = vmatprep.subr.bf16.mxu0 0
      %1083 = vmatpush1.bf16.msra.mxu0 0
      %1084 = vmatprep.subr.bf16.mxu0 0
      %1085 = vmatpush1.bf16.msra.mxu0 0
      %1086 = vmatprep.subr.bf16.mxu0 0
      %1087 = vmatpush1.bf16.msra.mxu0 0
      %1088 = vmatprep.subr.bf16.mxu0 0
      %1089 = vmatpush1.bf16.msra.mxu0 0
      %1090 = vmatprep.subr.bf16.mxu0 0
      %1091 = vmatpush1.bf16.msra.mxu0 0
      %1092 = vmatprep.subr.bf16.mxu0 0
      %1093 = vmatpush1.bf16.msra.mxu0 0
      %1094 = vmatprep.subr.bf16.mxu0 0
      %1095 = vmatpush1.bf16.msra.mxu0 0
      %1096 = vmatprep.subr.bf16.mxu0 0
      %1097 = vmatpush1.bf16.msra.mxu0 0
      %1098 = vmatprep.subr.bf16.mxu0 0
      %1099 = vmatpush1.bf16.msra.mxu0 0
      %1100 = vmatprep.subr.bf16.mxu0 0
      %1101 = vmatpush1.bf16.msra.mxu0 0
      %1102 = vmatprep.subr.bf16.mxu0 0
      %1103 = vmatpush1.bf16.msra.mxu0 0
      %1104 = vmatprep.subr.bf16.mxu0 0
      %1105 = vmatpush1.bf16.msra.mxu0 0
      %1106 = vmatprep.subr.bf16.mxu0 0
      %1107 = vmatpush1.bf16.msra.mxu0 0
      %1108 = vmatprep.subr.bf16.mxu0 0
      %1109 = vmatpush1.bf16.msra.mxu0 0
      %1110 = vmatprep.mubr.bf16.mxu0 0
      %1111 = vmatmul.mubr.bf16.gmra.mrb[0].mxu0 %v1076
      %v1112 = vpop.f32.mrb[0].mxu0
      %v1113 = vadd.f32 %v1061, %v1112
      %v1114 = vpop.f32.mrb[0].mxu0
      %v1115 = vpop.f32.mrb[0].mxu0
      %v1116 = vpop.f32.mrb[0].mxu0
      %1117 = vdwg.mxu0
      %v1118 = vadd.f32 %v445, %v1113
      %v1119 = vsel %vm471, %v1118, 0.0
      %1120 = vadd.xlane.f32.xlu0 %v1119
      %v1121 = vpop.xlane.xlu0 %1120
      %v1122 = vrcp.pop 32.0
      %v1123 = vmul.f32 %v1121, %v1122
      %v1124 = vsub.f32 %v1118, %v1123
      %v1125 = vmul.f32 %v1124, %v1124
      %v1126 = vsel %vm471, %v1125, 0.0
      %1127 = vadd.xlane.f32.xlu0 %v1126
      %v1128 = vpop.xlane.xlu0 %1127
      %v1129 = vmul.f32 %v1128, %v1122
      %v1130 = vadd.f32 %v1129, 1e-05
      %v1131 = vrsqrt.pop %v1130
      %v1132 = vmul.f32 %v1124, %v1131
      %v1133 = vld [vmem:[%s9] sm:$0x1]
      %v1135 = vlaneseq
      %v1136 = vshrl.u32 %v1135, 7
      %v1137 = vsub.s32 0, %v1136
      %v1138 = vrot.slane %v1133, %v1137
      %v1140 = vmul.f32 %v1132, %v1138
      %v1141 = vld [vmem:[%s10] sm:$0x1]
      %v1143 = vlaneseq
      %v1144 = vshrl.u32 %v1143, 7
      %v1145 = vsub.s32 0, %v1144
      %v1146 = vrot.slane %v1141, %v1145
      %v1148 = vadd.f32 %v1140, %v1146
      %1149 = vst.msk [vmem:[%s443] sm:$0xff] %vm471, %v1148
      %p1150 = scmp.lt.s32.totalorder %s26, 1
      %s1151 = scalar_select %p1150, %s26, 1
      %p1152 = scmp.lt.s32.totalorder %s27, 0
      %s1153 = scalar_select %p1152, %s27, 0
      %s1154 = sadd.s32 %s1153, %s1151
      %s1155 = smul.addr %s1154, 8
      %s1156 = scalar_lea.vmem %s11, %s1155
      // Predicated region
      $region65: #{transformer_forward.19} parent=63 // pred_check
        %p1157 = pneg %p302
      $region66: #{transformer_forward.19} parent=63 // pred_check_branch
        %1159 = sbr.rel (%p1157) target = $region68
      $region67: #{transformer_forward.19} parent=63 // pred_region
        _
      $region68: #{transformer_forward.19} parent=63 // pred_fallthru
        _
    $region64: #{transformer_forward.19} parent=5 // pred_fallthru
      _
    %p1160 = scmp.le.s32.totalorder 2, %s17
    // Predicated region
    $region69: #{transformer_forward.19} parent=5 // pred_check
      %p1161 = pneg %p1160
    $region70: #{transformer_forward.19} parent=5 // pred_check_branch
      %1163 = sbr.rel (%p1161) target = $region72
    $region71: #{transformer_forward.19} parent=5 // pred_region
      %s1164 = ssub.s32 %s17, 2
      // Predicated region
      $region73: #{transformer_forward.19} parent=71 // pred_check
        %p1165 = pneg %p308
      $region74: #{transformer_forward.19} parent=71 // pred_check_branch
        %1167 = sbr.rel (%p1165) target = $region76
      $region75: #{transformer_forward.19} parent=71 // pred_region
        %p1168 = scmp.lt.s32.totalorder %s28, 1
        %s1169 = scalar_select %p1168, %s28, 1
        %p1170 = scmp.lt.s32.totalorder %s29, 0
        %s1171 = scalar_select %p1170, %s29, 0
        %s1172 = sadd.s32 %s1171, %s1169
        %s1173 = smul.addr %s1172, 8
        %s1174 = scalar_lea.vmem %s11, %s1173
      $region76: #{transformer_forward.19} parent=71 // pred_fallthru
        _
    $region72: #{transformer_forward.19} parent=5 // pred_fallthru
      _
  $region6: #{transformer_forward.19} parent=0 // loop_footer
    %s21 = sadd.s32 1, %s17
  $region7: #{transformer_forward.19} parent=0 // loop_footer_branch
    %16 = sbr.rel target = $region3
  $region8: #{transformer_forward.19} parent=0 // loop_exit
    _

// kernel: transformer_forward.25
$region0: #{transformer_forward.25}
  #allocation0 [shape = 'u32[]', space=smem, size = 0x4, offset = 0x4, fixed_abs, tag = 'smem constant byte address 0x4 - core index']
  #allocation1 [shape = 'u32[144,128]{1,0:T(1,128)}', space=vmem, size = 0x12000, scoped, tag = 'internal scratch']
  %s0 = inlined_call_operand.vmem [shape: f32[16,32], index: 0, kind: input, shape index: {}]
  %s1 = inlined_call_operand.vmem [shape: bf16[32,128], index: 1, kind: input, shape index: {}]
  %s2 = inlined_call_operand.vmem [shape: f32[1,128], index: 2, kind: input, shape index: {}]
  %s3 = inlined_call_operand.vmem [shape: f32[16,128], index: 3, kind: output, shape index: {}]
  %s4 = sld [smem:[#allocation0]]
  $region22: #{transformer_forward.25} parent=0
    _
  %s6 = ssub.s32 1, %s4
  %s7 = scalar_select 0, %s6, %s4
  // Predicated region
  $region2: #{transformer_forward.25} parent=0 // pred_check
    _
  $region3: #{transformer_forward.25} parent=0 // pred_check_branch
    %9 = sbr.rel (0) target = $region5
  $region4: #{transformer_forward.25} parent=0 // pred_region
    _
  $region5: #{transformer_forward.25} parent=0 // pred_fallthru
    _
  // Predicated region
  $region6: #{transformer_forward.25} parent=0 // pred_check
    _
  $region7: #{transformer_forward.25} parent=0 // pred_check_branch
    %11 = sbr.rel (0) target = $region9
  $region8: #{transformer_forward.25} parent=0 // pred_region
    _
  $region9: #{transformer_forward.25} parent=0 // pred_fallthru
    _
  // Predicated region
  $region10: #{transformer_forward.25} parent=0 // pred_check
    _
  $region11: #{transformer_forward.25} parent=0 // pred_check_branch
    %13 = sbr.rel (0) target = $region13
  $region12: #{transformer_forward.25} parent=0 // pred_region
    _
  $region13: #{transformer_forward.25} parent=0 // pred_fallthru
    _
  %v15 = vld [vmem:[%s0] sm:$0xff]
  %v16 = vld [vmem:[%s0 + $0x8] sm:$0xff]
  %v17 = vpack.c.bf16 %v16, %v15
  %v18 = vld [vmem:[%s1] sm:$0xf]
  %v19 = vld [vmem:[%s1 + $0x4] sm:$0xf]
  %v20 = vld [vmem:[%s1 + $0x8] sm:$0xf]
  %v21 = vld [vmem:[%s1 + $0xc] sm:$0xf]
  %v22 = vld [vmem:[%s2] sm:$0x1]
  %v24 = vlaneseq
  %v25 = vshrl.u32 %v24, 7
  %v26 = vsub.s32 0, %v25
  %v27 = vrot.slane %v22, %v26
  %v33 = vunpack.c.l.b16 %v18
  %v34 = vunpack.c.l.b16 %v19
  %v35 = vunpack.c.l.b16 %v20
  %v36 = vunpack.c.l.b16 %v21
  %v37 = vpack.c.b16 %v34, %v33
  %v38 = vpack.c.b16 %v36, %v35
  %vm41 = vcmask 261120
  %v43 = vsel %vm41, %v17, 0
  %45 = vmatprep.subr.bf16.mxu0 0
  %46 = vmatpush1.bf16.msra.mxu0 %v37
  %47 = vmatprep.subr.bf16.mxu0 0
  %48 = vmatpush1.bf16.msra.mxu0 %v38
  %49 = vmatprep.subr.bf16.mxu0 0
  %50 = vmatpush1.bf16.msra.mxu0 0
  %51 = vmatprep.subr.bf16.mxu0 0
  %52 = vmatpush1.bf16.msra.mxu0 0
  %53 = vmatprep.subr.bf16.mxu0 0
  %54 = vmatpush1.bf16.msra.mxu0 0
  %55 = vmatprep.subr.bf16.mxu0 0
  %56 = vmatpush1.bf16.msra.mxu0 0
  %57 = vmatprep.subr.bf16.mxu0 0
  %58 = vmatpush1.bf16.msra.mxu0 0
  %59 = vmatprep.subr.bf16.mxu0 0
  %60 = vmatpush1.bf16.msra.mxu0 0
  %61 = vmatprep.subr.bf16.mxu0 0
  %62 = vmatpush1.bf16.msra.mxu0 0
  %63 = vmatprep.subr.bf16.mxu0 0
  %64 = vmatpush1.bf16.msra.mxu0 0
  %65 = vmatprep.subr.bf16.mxu0 0
  %66 = vmatpush1.bf16.msra.mxu0 0
  %67 = vmatprep.subr.bf16.mxu0 0
  %68 = vmatpush1.bf16.msra.mxu0 0
  %69 = vmatprep.subr.bf16.mxu0 0
  %70 = vmatpush1.bf16.msra.mxu0 0
  %71 = vmatprep.subr.bf16.mxu0 0
  %72 = vmatpush1.bf16.msra.mxu0 0
  %73 = vmatprep.subr.bf16.mxu0 0
  %74 = vmatpush1.bf16.msra.mxu0 0
  %75 = vmatprep.subr.bf16.mxu0 0
  %76 = vmatpush1.bf16.msra.mxu0 0
  %77 = vmatprep.mubr.bf16.mxu0 0
  %78 = vmatmul.mubr.bf16.gmra.mrb[0].mxu0 %v43
  %v79 = vpop.f32.mrb[0].mxu0
  %v80 = vadd.f32 %v27, %v79
  %v81 = vpop.f32.mrb[0].mxu0
  %v82 = vpop.f32.mrb[0].mxu0
  %v83 = vadd.f32 %v27, %v82
  %v84 = vpop.f32.mrb[0].mxu0
  %85 = vdwg.mxu0
  %86 = vst [vmem:[%s3] sm:$0xff] %v80
  %87 = vst [vmem:[%s3 + $0x8] sm:$0xff] %v83
  // Predicated region
  $region14: #{transformer_forward.25} parent=0 // pred_check
    _
  $region15: #{transformer_forward.25} parent=0 // pred_check_branch
    %89 = sbr.rel (0) target = $region17
  $region16: #{transformer_forward.25} parent=0 // pred_region
    _
  $region17: #{transformer_forward.25} parent=0 // pred_fallthru
    _
  // Predicated region
  $region18: #{transformer_forward.25} parent=0 // pred_check
    _
  $region19: #{transformer_forward.25} parent=0 // pred_check_branch
    %91 = sbr.rel (0) target = $region21
  $region20: #{transformer_forward.25} parent=0 // pred_region
    _
  $region21: #{transformer_forward.25} parent=0 // pred_fallthru
    _

</llo_original>
